<compile_context>
chip_gen: v7x
topology: tpu7x:2x2x1
jax: 0.10.0
libtpu: 0.0.40
codegen_flags: <defaults>
</compile_context>

<pallas_src>
import jax
import jax.numpy as jnp
from jax import lax
from jax.experimental import pallas as pl
from jax.experimental.pallas import tpu as pltpu


D_IN, D_H1, D_H2, D_OUT = 2048, 512, 128, 1
BN_EPS = 1e-5


def _round_up(n, m):
    return ((n + m - 1) // m) * m


def ddi_mlp_kernel(x_ref,
                   w1_ref, sh1_ref,
                   w2_ref, sh2_ref,
                   w3_ref, b3_ref,
                   o_ref):
    # x block arrives in its HBM dtype (f32 here); cast in-kernel so the wrapper
    # never adds an extra HBM read+write pass over x.
    x = x_ref[...].astype(jnp.bfloat16)                            # [TB, 2048]

    # fc1 (+ folded bias/BN) + ReLU  -- bf16 MXU matmul, f32 accumulate.
    h1 = jnp.dot(x, w1_ref[...], preferred_element_type=jnp.float32)
    h1 = jnp.maximum(h1 + sh1_ref[...], 0.0)                       # [TB, 512]

    # fc2 (+ folded bias/BN) + ReLU
    h2 = jnp.dot(h1.astype(w2_ref.dtype), w2_ref[...],
                 preferred_element_type=jnp.float32)
    h2 = jnp.maximum(h2 + sh2_ref[...], 0.0)                       # [TB, 128]

    # out layer (N=1): contract over features with BATCH on the lane axis so the
    # output block is lane-dense (unmasked vst, dense sigmoid vregs).  w3 is
    # zero-padded to 8 rows so this tiny matmul is sublane-tile aligned; only
    # row 0 carries the real weights.
    z8 = lax.dot_general(w3_ref[...], h2,
                         dimension_numbers=(((1,), (1,)), ((), ())),
                         preferred_element_type=jnp.float32)       # [8, TB]
    o_ref[0] = jax.nn.sigmoid(z8[0:1, :] + b3_ref[...])            # [1, TB]


def fold_params(raw_params):
    """Fold linear bias + eval-mode BN into weights / a single shift; cast to bf16."""
    (w1, b1, s1, t1, w2, b2, s2, t2, w3, b3) = raw_params
    w1f = (w1 * s1).astype(jnp.bfloat16)                 # [2048, 512] bf16
    sh1 = (b1 * s1 + t1).astype(jnp.float32)             # [1, 512]
    w2f = (w2 * s2).astype(jnp.bfloat16)                 # [512, 128] bf16
    sh2 = (b2 * s2 + t2).astype(jnp.float32)             # [1, 128]
    # Output weights as an 8-row, zero-padded block (row 0 = real weights) so the
    # in-kernel lane-dense contraction is tile aligned.
    w3p = jnp.zeros((8, D_H2), jnp.float32).at[0].set(w3.reshape(D_H2))
    b3v = b3.reshape(1, 1).astype(jnp.float32)            # [1, 1]
    return (w1f, sh1, w2f, sh2, w3p, b3v)


def ddi_mlp_forward(x, folded_params, *, tb=512):
    """x: [B, 2048] float32 -> [B] float32 sigmoid probabilities (eval mode)."""
    B = x.shape[0]
    assert x.shape[1] == D_IN
    (w1f, sh1, w2f, sh2, w3p, b3v) = folded_params

    # Batch tile: multiple of 8 (sublanes), and no larger than ~ceil(B/2) so the
    # grid has >= 2 steps -> both v7x TensorCores get work on the parallel axis.
    b_pad8 = _round_up(B, 8)
    half = max(8, _round_up((b_pad8 + 1) // 2, 8))
    tb_eff = min(_round_up(tb, 8), half)
    B_pad = _round_up(b_pad8, tb_eff)
    if B_pad != B:
        x = jnp.pad(x, ((0, B_pad - B), (0, 0)))
    grid_b = B_pad // tb_eff

    def rep(shape):  # grid-invariant blocks (weights / shifts): always block (0, 0)
        return pl.BlockSpec(shape, lambda i: (0, 0))

    itemsize = jnp.dtype(x.dtype).itemsize
    cost = pl.CostEstimate(
        flops=2 * B_pad * (D_IN * D_H1 + D_H1 * D_H2 + D_H2),
        transcendentals=B_pad,  # one sigmoid per row
        bytes_accessed=(B_pad * D_IN * itemsize
                        + D_IN * D_H1 * 2 + D_H1 * D_H2 * 2
                        + (D_H1 + D_H2) * 4 + 8 * D_H2 * 4 + 4
                        + B_pad * 4),
    )

    out = pl.pallas_call(
        ddi_mlp_kernel,
        # Lane-dense output: one [1, tb] row per grid step; reshaped to [B_pad]
        # (and sliced to [B]) in the wrapper.
        out_shape=jax.ShapeDtypeStruct((grid_b, 1, tb_eff), jnp.float32),
        grid_spec=pltpu.PrefetchScalarGridSpec(
            num_scalar_prefetch=0,
            grid=(grid_b,),
            in_specs=[
                pl.BlockSpec((tb_eff, D_IN), lambda i: (i, 0)),  # x tile (native dtype)
                rep((D_IN, D_H1)), rep((1, D_H1)),               # w1', shift1
                rep((D_H1, D_H2)), rep((1, D_H2)),               # w2', shift2
                rep((8, D_H2)), rep((1, 1)),                     # w3 (8-row padded), b3
            ],
            out_specs=pl.BlockSpec((1, 1, tb_eff), lambda i: (i, 0, 0)),
        ),
        compiler_params=pltpu.CompilerParams(
            dimension_semantics=("parallel",),   # lets v7x shard the batch over 2 TCs
        ),
        cost_estimate=cost,
    )(x, w1f, sh1, w2f, sh2, w3p, b3v)

    return out.reshape(B_pad)[:B]   # torch: .squeeze(1), drop batch padding


def init_params(key):
    """Deterministic synthetic parameters matching DDI_MLP.__init__ shapes."""
    ks = jax.random.split(key, 6)

    def linear(kw, kb, fan_in, fan_out):
        bound = 1.0 / jnp.sqrt(fan_in)
        w = jax.random.uniform(kw, (fan_in, fan_out), jnp.float32, -bound, bound)
        b = jax.random.uniform(kb, (1, fan_out), jnp.float32, -bound, bound)
        return w, b

    w1, b1 = linear(ks[0], ks[1], D_IN, D_H1)
    w2, b2 = linear(ks[2], ks[3], D_H1, D_H2)
    w3, b3 = linear(ks[4], ks[5], D_H2, D_OUT)

    # BatchNorm1d at init (eval mode): gamma=1, beta=0, running_mean=0, running_var=1
    def bn_fold(dim):
        gamma = jnp.ones((1, dim), jnp.float32)
        beta = jnp.zeros((1, dim), jnp.float32)
        r_mean = jnp.zeros((1, dim), jnp.float32)
        r_var = jnp.ones((1, dim), jnp.float32)
        scale = gamma / jnp.sqrt(r_var + BN_EPS)
        shift = beta - r_mean * scale
        return scale, shift

    s1, t1 = bn_fold(D_H1)
    s2, t2 = bn_fold(D_H2)

    return (w1, b1, s1, t1, w2, b2, s2, t2, w3, b3)


def reference_forward(x, raw_params):
    """Pure-JAX f32 reference of the eval-mode PyTorch forward (un-folded params)."""
    (w1, b1, s1, t1, w2, b2, s2, t2, w3, b3) = raw_params
    h = jnp.maximum((x @ w1 + b1) * s1 + t1, 0.0)
    h = jnp.maximum((h @ w2 + b2) * s2 + t2, 0.0)
    z = h @ w3 + b3
    return jax.nn.sigmoid(z)[:, 0]


if __name__ == "__main__":
    key = jax.random.PRNGKey(0)
    k_param, k_x = jax.random.split(key)

    raw_params = init_params(k_param)
    folded = fold_params(raw_params)

    # Small batch, not a multiple of 8, and large enough (after padding) to
    # exercise a 2-step grid + the >=2-tile heuristic and the padded-row slice.
    B = 12
    x = jax.random.normal(k_x, (B, D_IN), dtype=jnp.float32)

    y = ddi_mlp_forward(x, folded)          # default tb=512 (shrinks to ~B/2 here)
    y = jax.block_until_ready(y)

    y_ref = reference_forward(x, raw_params)
    assert y.shape == (B,)
    # bf16 activations/weights with f32 accumulation: loosened tolerance.
    assert jnp.allclose(y, y_ref, atol=2e-2, rtol=0.0), "mismatch vs f32 reference"

    print("KERNEL_OK")
</pallas_src>

<mosaic_0001>
module attributes {stable_mosaic.version = 11 : i64} {
  func.func @ddi_mlp_kernel(%arg0: i32, %arg1: memref<8x2048xf32, #tpu.memory_space<vmem>>, %arg2: memref<2048x512xbf16, #tpu.memory_space<vmem>>, %arg3: memref<1x512xf32, #tpu.memory_space<vmem>>, %arg4: memref<512x128xbf16, #tpu.memory_space<vmem>>, %arg5: memref<1x128xf32, #tpu.memory_space<vmem>>, %arg6: memref<8x128xf32, #tpu.memory_space<vmem>>, %arg7: memref<1x1xf32, #tpu.memory_space<vmem>>, %arg8: memref<1x1x8xf32, #tpu.memory_space<vmem>>) attributes {dimension_semantics = [#tpu.dimension_semantics<parallel>], iteration_bounds = array<i64: 2>, scalar_prefetch = 0 : i64, scratch_operands = 0 : i64, tpu.core_type = #tpu.core_type<tc>, window_params = [{transform_indices = @transform_0, window_bounds = array<i64: 8, 2048>}, {pipeline_mode = #tpu.pipeline_mode<synchronous>, transform_indices = @transform_1, window_bounds = array<i64: 2048, 512>}, {pipeline_mode = #tpu.pipeline_mode<synchronous>, transform_indices = @transform_2, window_bounds = array<i64: 1, 512>}, {pipeline_mode = #tpu.pipeline_mode<synchronous>, transform_indices = @transform_3, window_bounds = array<i64: 512, 128>}, {pipeline_mode = #tpu.pipeline_mode<synchronous>, transform_indices = @transform_4, window_bounds = array<i64: 1, 128>}, {pipeline_mode = #tpu.pipeline_mode<synchronous>, transform_indices = @transform_5, window_bounds = array<i64: 8, 128>}, {pipeline_mode = #tpu.pipeline_mode<synchronous>, transform_indices = @transform_6, window_bounds = array<i64: 1, 1>}, {transform_indices = @transform_7, window_bounds = array<i64: 1, 1, 8>}]} {
    %c0 = arith.constant 0 : index
    %c0_0 = arith.constant 0 : index
    %0 = vector.load %arg1[%c0, %c0_0] : memref<8x2048xf32, #tpu.memory_space<vmem>>, vector<8x2048xf32>
    %1 = arith.truncf %0 : vector<8x2048xf32> to vector<8x2048xbf16>
    %c0_1 = arith.constant 0 : index
    %c0_2 = arith.constant 0 : index
    %2 = vector.load %arg2[%c0_1, %c0_2] : memref<2048x512xbf16, #tpu.memory_space<vmem>>, vector<2048x512xbf16>
    %cst = arith.constant dense<0.000000e+00> : vector<8x512xf32>
    %3 = tpu.matmul %1, %2, %cst {dimension_numbers = #tpu.dot_dimension_numbers<[1], [0], [0], [1], [0, 0, 1, 1], [], []>} : vector<8x2048xbf16>, vector<2048x512xbf16>, vector<8x512xf32> -> vector<8x512xf32>
    %c0_3 = arith.constant 0 : index
    %c0_4 = arith.constant 0 : index
    %4 = vector.load %arg3[%c0_3, %c0_4] : memref<1x512xf32, #tpu.memory_space<vmem>>, vector<1x512xf32>
    %5 = vector.broadcast %4 : vector<1x512xf32> to vector<8x512xf32>
    %6 = arith.addf %3, %5 : vector<8x512xf32>
    %cst_5 = arith.constant 0.000000e+00 : f32
    %7 = vector.broadcast %cst_5 : f32 to vector<8x512xf32>
    %8 = arith.maximumf %6, %7 : vector<8x512xf32>
    %9 = arith.truncf %8 : vector<8x512xf32> to vector<8x512xbf16>
    %c0_6 = arith.constant 0 : index
    %c0_7 = arith.constant 0 : index
    %10 = vector.load %arg4[%c0_6, %c0_7] : memref<512x128xbf16, #tpu.memory_space<vmem>>, vector<512x128xbf16>
    %cst_8 = arith.constant dense<0.000000e+00> : vector<8x128xf32>
    %11 = tpu.matmul %9, %10, %cst_8 {dimension_numbers = #tpu.dot_dimension_numbers<[1], [0], [0], [1], [0, 0, 1, 1], [], []>} : vector<8x512xbf16>, vector<512x128xbf16>, vector<8x128xf32> -> vector<8x128xf32>
    %c0_9 = arith.constant 0 : index
    %c0_10 = arith.constant 0 : index
    %12 = vector.load %arg5[%c0_9, %c0_10] : memref<1x128xf32, #tpu.memory_space<vmem>>, vector<1x128xf32>
    %13 = vector.broadcast %12 : vector<1x128xf32> to vector<8x128xf32>
    %14 = arith.addf %11, %13 : vector<8x128xf32>
    %cst_11 = arith.constant 0.000000e+00 : f32
    %15 = vector.broadcast %cst_11 : f32 to vector<8x128xf32>
    %16 = arith.maximumf %14, %15 : vector<8x128xf32>
    %c0_12 = arith.constant 0 : index
    %c0_13 = arith.constant 0 : index
    %17 = vector.load %arg6[%c0_12, %c0_13] : memref<8x128xf32, #tpu.memory_space<vmem>>, vector<8x128xf32>
    %cst_14 = arith.constant dense<0.000000e+00> : vector<8x8xf32>
    %18 = tpu.matmul %17, %16, %cst_14 {dimension_numbers = #tpu.dot_dimension_numbers<[1], [1], [0], [0], [0, 0, 1, 0], [], []>} : vector<8x128xf32>, vector<8x128xf32>, vector<8x8xf32> -> vector<8x8xf32>
    %19 = vector.extract_strided_slice %18 {offsets = [0, 0], sizes = [1, 8], strides = [1, 1]} : vector<8x8xf32> to vector<1x8xf32>
    %c0_15 = arith.constant 0 : index
    %c0_16 = arith.constant 0 : index
    %20 = vector.load %arg7[%c0_15, %c0_16] : memref<1x1xf32, #tpu.memory_space<vmem>>, vector<1x1xf32>
    %21 = vector.broadcast %20 : vector<1x1xf32> to vector<1x8xf32>
    %22 = arith.addf %19, %21 : vector<1x8xf32>
    %23 = arith.negf %22 : vector<1x8xf32>
    %24 = math.exp %23 : vector<1x8xf32>
    %cst_17 = arith.constant 1.000000e+00 : f32
    %25 = vector.broadcast %cst_17 : f32 to vector<1x8xf32>
    %26 = arith.addf %25, %24 : vector<1x8xf32>
    %27 = arith.divf %25, %26 : vector<1x8xf32>
    %c0_18 = arith.constant 0 : index
    %c0_19 = arith.constant 0 : index
    %c0_20 = arith.constant 0 : index
    %28 = vector.load %arg8[%c0_18, %c0_19, %c0_20] : memref<1x1x8xf32, #tpu.memory_space<vmem>>, vector<1x1x8xf32>
    %29 = vector.shape_cast %28 : vector<1x1x8xf32> to vector<1x8xf32>
    %30 = vector.shape_cast %27 : vector<1x8xf32> to vector<1x1x8xf32>
    tpu.vector_store %arg8[%c0_18, %c0_19, %c0_20], %30 {strides = array<i32>} : memref<1x1x8xf32, #tpu.memory_space<vmem>>, vector<1x1x8xf32>,
    return
  }
  func.func @transform_0(%arg0: i32) -> (i32, i32) {
    %c0_i32 = arith.constant 0 : i32
    %c0_i32_0 = arith.constant 0 : i32
    return %arg0, %c0_i32 : i32, i32
  }
  func.func @transform_1(%arg0: i32) -> (i32, i32) {
    %c0_i32 = arith.constant 0 : i32
    %c0_i32_0 = arith.constant 0 : i32
    %c0_i32_1 = arith.constant 0 : i32
    return %c0_i32, %c0_i32_0 : i32, i32
  }
  func.func @transform_2(%arg0: i32) -> (i32, i32) {
    %c0_i32 = arith.constant 0 : i32
    %c0_i32_0 = arith.constant 0 : i32
    %c0_i32_1 = arith.constant 0 : i32
    return %c0_i32, %c0_i32_0 : i32, i32
  }
  func.func @transform_3(%arg0: i32) -> (i32, i32) {
    %c0_i32 = arith.constant 0 : i32
    %c0_i32_0 = arith.constant 0 : i32
    %c0_i32_1 = arith.constant 0 : i32
    return %c0_i32, %c0_i32_0 : i32, i32
  }
  func.func @transform_4(%arg0: i32) -> (i32, i32) {
    %c0_i32 = arith.constant 0 : i32
    %c0_i32_0 = arith.constant 0 : i32
    %c0_i32_1 = arith.constant 0 : i32
    return %c0_i32, %c0_i32_0 : i32, i32
  }
  func.func @transform_5(%arg0: i32) -> (i32, i32) {
    %c0_i32 = arith.constant 0 : i32
    %c0_i32_0 = arith.constant 0 : i32
    %c0_i32_1 = arith.constant 0 : i32
    return %c0_i32, %c0_i32_0 : i32, i32
  }
  func.func @transform_6(%arg0: i32) -> (i32, i32) {
    %c0_i32 = arith.constant 0 : i32
    %c0_i32_0 = arith.constant 0 : i32
    %c0_i32_1 = arith.constant 0 : i32
    return %c0_i32, %c0_i32_0 : i32, i32
  }
  func.func @transform_7(%arg0: i32) -> (i32, i32, i32) {
    %c0_i32 = arith.constant 0 : i32
    %c0_i32_0 = arith.constant 0 : i32
    %c0_i32_1 = arith.constant 0 : i32
    return %arg0, %c0_i32, %c0_i32_0 : i32, i32, i32
  }
}

</mosaic_0001>

<llo_original>
// kernel: tpu_custom_call.1
$region0: #{tpu_custom_call.1}
  #allocation0 [shape = 'u32[]', space=smem, size = 0x4, offset = 0x4, fixed_abs, tag = 'smem constant byte address 0x4 - core index']
  #allocation1 [shape = 'u32[144,128]{1,0:T(1,128)}', space=vmem, size = 0x12000, scoped, tag = 'internal scratch']
  #allocation2 [shape = 'f32[1,1]{1,0:T(1,128)S(1)}', space=vmem, size = 0x200, scoped, tag = 'scoped memory for tpu_custom_call.1']
  %s0 = inlined_call_operand.hbm [shape: f32[16,2048], index: 0, kind: input, shape index: {}]
  %s1 = inlined_call_operand.hbm [shape: bf16[2048,512], index: 1, kind: input, shape index: {}]
  %s2 = inlined_call_operand.hbm [shape: f32[1,512], index: 2, kind: input, shape index: {}]
  %s3 = inlined_call_operand.hbm [shape: bf16[512,128], index: 3, kind: input, shape index: {}]
  %s4 = inlined_call_operand.hbm [shape: f32[1,128], index: 4, kind: input, shape index: {}]
  %s5 = inlined_call_operand.hbm [shape: f32[8,128], index: 5, kind: input, shape index: {}]
  %s6 = inlined_call_operand.<no memory space> [shape: f32[1,1], index: 6, kind: input, shape index: {}]
  %s7 = inlined_call_operand.hbm [shape: f32[2,1,8], index: 7, kind: output, shape index: {}]
  %s8 = sld [smem:[#allocation0]]
  $region85: #{tpu_custom_call.1} parent=0
    _
  %s10 = ssub.s32 1, %s8
  %s11 = scalar_select 0, %s10, %s8
  %v12 = vstv %s6
  %13 = vst [vmem:[#allocation2] sm:$0x1] %v12
  $region1: #{tpu_custom_call.1} parent=0
    #allocation3 [shape = 'u8[131072]{0}', space=vmem, size = 0x20000, scoped, tag = 'input window, operand 0']
    #allocation4 [shape = 's32[2]{0}', space=sflag, size = 0x8, scoped, tag = 'scoped memory for tpu_custom_call.1']
    #allocation5 [shape = 's32[2]{0}', space=sflag, size = 0x8, scoped, tag = 'scoped memory for tpu_custom_call.1']
    #allocation6 [shape = 'u8[2097152]{0}', space=vmem, size = 0x200000, scoped, tag = 'input window, operand 1, single buffered']
    #allocation7 [shape = 's32[1]{0}', space=sflag, size = 0x4, scoped, tag = 'scoped memory for tpu_custom_call.1']
    #allocation8 [shape = 'u8[2048]{0}', space=vmem, size = 0x800, scoped, tag = 'input window, operand 2, single buffered']
    #allocation9 [shape = 'u8[131072]{0}', space=vmem, size = 0x20000, scoped, tag = 'input window, operand 3, single buffered']
    #allocation10 [shape = 's32[1]{0}', space=sflag, size = 0x4, scoped, tag = 'scoped memory for tpu_custom_call.1']
    #allocation11 [shape = 'u8[512]{0}', space=vmem, size = 0x400, scoped, tag = 'input window, operand 4, single buffered']
    #allocation12 [shape = 'u8[4096]{0}', space=vmem, size = 0x1000, scoped, tag = 'input window, operand 5, single buffered']
    #allocation13 [shape = 's32[1]{0}', space=sflag, size = 0x4, scoped, tag = 'scoped memory for tpu_custom_call.1']
    #allocation14 [shape = 'u8[1024]{0}', space=vmem, size = 0x400, scoped, tag = 'output window, operand 0']
    %14 = vsyncpa [#allocation4], 0
    %s15 = scalar_lea.sflag [#allocation4], 1
    %16 = vsyncpa %s15, 0
    %17 = vsyncpa [#allocation7], 0
    %18 = vsyncpa [#allocation10], 0
    %19 = vsyncpa [#allocation13], 0
    %20 = vsyncpa [#allocation5], 0
    %s21 = scalar_lea.sflag [#allocation5], 1
    %22 = vsyncpa %s21, 0
    loop: start=0, step=1, limit=4
    $region2: #{tpu_custom_call.1} parent=1 // loop_pre_header
      _
    $region3: #{tpu_custom_call.1} parent=1 // loop_header
      %s24 = sphi 0, %s28
      %p25 = scmp.ge.s32.totalorder %s24, 4
      %s34 = sphi 0, %s36
      %s37 = sphi 0, %s34
      %s38 = sphi 0, %s37
      %s54 = sphi 0, %s38
      %s58 = sphi 0, %s58
      %s60 = sphi 0, %s58
      %s61 = sphi 0, %s60
      %s75 = sphi 0, %s61
      %s79 = sphi 0, %s79
      %s81 = sphi 0, %s79
      %s82 = sphi 0, %s81
      %s96 = sphi 0, %s82
      %s100 = sphi 0, %s100
      %s102 = sphi 0, %s100
      %s103 = sphi 0, %s102
      %s117 = sphi 0, %s103
      %s121 = sphi 0, %s121
      %s123 = sphi 0, %s121
      %s124 = sphi 0, %s123
      %s138 = sphi 0, %s124
      %s142 = sphi 0, %s142
      %s144 = sphi 0, %s142
      %s145 = sphi 0, %s144
      %s159 = sphi 0, %s145
      %s163 = sphi 0, %s163
      %s165 = sphi 0, %s163
      %s166 = sphi 0, %s165
      %s180 = sphi 0, %s166
      %s186 = sphi 0, %s188
      %s189 = sphi 0, %s186
      %s190 = sphi 0, %s189
      %s206 = sphi 0, %s190
    $region4: #{tpu_custom_call.1} parent=1 // loop_header_branch
      %27 = sbr.rel (%p25) target = $region8
    $region5: #{tpu_custom_call.1} parent=1 // loop_body
      %s29 = ssub.s32 %s24, 1
      %s30 = ssub.s32 %s24, 2
      %s31 = sadd.s32 %s24, 1
      %s32 = ssub.s32 %s24, %s31
      %p33 = scmp.eq.s32.totalorder %s32, 0
      %s35 = sadd.s32 %s34, 1
      %s36 = scalar_select %p33, %s34, %s35
      %p39 = pneg %p33
      %p40 = scmp.eq.s32.totalorder %s24, 1
      %p41 = por %p39, %p40
      %p42 = scmp.ne.s32.totalorder %s34, %s37
      %p43 = scmp.eq.s32.totalorder %s24, 0
      %p44 = por %p42, %p43
      %p45 = scmp.ne.s32.totalorder %s34, %s37
      %p46 = scmp.eq.s32.totalorder %s29, 1
      %p47 = por %p45, %p46
      %p48 = scmp.ne.s32.totalorder %s37, %s38
      %p49 = scmp.eq.s32.totalorder %s29, 0
      %p50 = por %p48, %p49
      %p51 = scmp.ne.s32.totalorder %s37, %s38
      %p52 = scmp.eq.s32.totalorder %s30, 1
      %p53 = por %p51, %p52
      %p55 = scmp.ne.s32.totalorder %s38, %s54
      %p56 = scmp.eq.s32.totalorder %s30, 0
      %p57 = por %p55, %p56
      %s59 = sadd.s32 %s58, 1
      %p62 = scmp.eq.s32.totalorder %s24, 1
      %p63 = scmp.ne.s32.totalorder %s58, %s60
      %p64 = scmp.eq.s32.totalorder %s24, 0
      %p65 = por %p63, %p64
      %p66 = scmp.ne.s32.totalorder %s58, %s60
      %p67 = scmp.eq.s32.totalorder %s29, 1
      %p68 = por %p66, %p67
      %p69 = scmp.ne.s32.totalorder %s60, %s61
      %p70 = scmp.eq.s32.totalorder %s29, 0
      %p71 = por %p69, %p70
      %p72 = scmp.ne.s32.totalorder %s60, %s61
      %p73 = scmp.eq.s32.totalorder %s30, 1
      %p74 = por %p72, %p73
      %p76 = scmp.ne.s32.totalorder %s61, %s75
      %p77 = scmp.eq.s32.totalorder %s30, 0
      %p78 = por %p76, %p77
      %s80 = sadd.s32 %s79, 1
      %p83 = scmp.eq.s32.totalorder %s24, 1
      %p84 = scmp.ne.s32.totalorder %s79, %s81
      %p85 = scmp.eq.s32.totalorder %s24, 0
      %p86 = por %p84, %p85
      %p87 = scmp.ne.s32.totalorder %s79, %s81
      %p88 = scmp.eq.s32.totalorder %s29, 1
      %p89 = por %p87, %p88
      %p90 = scmp.ne.s32.totalorder %s81, %s82
      %p91 = scmp.eq.s32.totalorder %s29, 0
      %p92 = por %p90, %p91
      %p93 = scmp.ne.s32.totalorder %s81, %s82
      %p94 = scmp.eq.s32.totalorder %s30, 1
      %p95 = por %p93, %p94
      %p97 = scmp.ne.s32.totalorder %s82, %s96
      %p98 = scmp.eq.s32.totalorder %s30, 0
      %p99 = por %p97, %p98
      %s101 = sadd.s32 %s100, 1
      %p104 = scmp.eq.s32.totalorder %s24, 1
      %p105 = scmp.ne.s32.totalorder %s100, %s102
      %p106 = scmp.eq.s32.totalorder %s24, 0
      %p107 = por %p105, %p106
      %p108 = scmp.ne.s32.totalorder %s100, %s102
      %p109 = scmp.eq.s32.totalorder %s29, 1
      %p110 = por %p108, %p109
      %p111 = scmp.ne.s32.totalorder %s102, %s103
      %p112 = scmp.eq.s32.totalorder %s29, 0
      %p113 = por %p111, %p112
      %p114 = scmp.ne.s32.totalorder %s102, %s103
      %p115 = scmp.eq.s32.totalorder %s30, 1
      %p116 = por %p114, %p115
      %p118 = scmp.ne.s32.totalorder %s103, %s117
      %p119 = scmp.eq.s32.totalorder %s30, 0
      %p120 = por %p118, %p119
      %s122 = sadd.s32 %s121, 1
      %p125 = scmp.eq.s32.totalorder %s24, 1
      %p126 = scmp.ne.s32.totalorder %s121, %s123
      %p127 = scmp.eq.s32.totalorder %s24, 0
      %p128 = por %p126, %p127
      %p129 = scmp.ne.s32.totalorder %s121, %s123
      %p130 = scmp.eq.s32.totalorder %s29, 1
      %p131 = por %p129, %p130
      %p132 = scmp.ne.s32.totalorder %s123, %s124
      %p133 = scmp.eq.s32.totalorder %s29, 0
      %p134 = por %p132, %p133
      %p135 = scmp.ne.s32.totalorder %s123, %s124
      %p136 = scmp.eq.s32.totalorder %s30, 1
      %p137 = por %p135, %p136
      %p139 = scmp.ne.s32.totalorder %s124, %s138
      %p140 = scmp.eq.s32.totalorder %s30, 0
      %p141 = por %p139, %p140
      %s143 = sadd.s32 %s142, 1
      %p146 = scmp.eq.s32.totalorder %s24, 1
      %p147 = scmp.ne.s32.totalorder %s142, %s144
      %p148 = scmp.eq.s32.totalorder %s24, 0
      %p149 = por %p147, %p148
      %p150 = scmp.ne.s32.totalorder %s142, %s144
      %p151 = scmp.eq.s32.totalorder %s29, 1
      %p152 = por %p150, %p151
      %p153 = scmp.ne.s32.totalorder %s144, %s145
      %p154 = scmp.eq.s32.totalorder %s29, 0
      %p155 = por %p153, %p154
      %p156 = scmp.ne.s32.totalorder %s144, %s145
      %p157 = scmp.eq.s32.totalorder %s30, 1
      %p158 = por %p156, %p157
      %p160 = scmp.ne.s32.totalorder %s145, %s159
      %p161 = scmp.eq.s32.totalorder %s30, 0
      %p162 = por %p160, %p161
      %s164 = sadd.s32 %s163, 1
      %p167 = scmp.eq.s32.totalorder %s24, 1
      %p168 = scmp.ne.s32.totalorder %s163, %s165
      %p169 = scmp.eq.s32.totalorder %s24, 0
      %p170 = por %p168, %p169
      %p171 = scmp.ne.s32.totalorder %s163, %s165
      %p172 = scmp.eq.s32.totalorder %s29, 1
      %p173 = por %p171, %p172
      %p174 = scmp.ne.s32.totalorder %s165, %s166
      %p175 = scmp.eq.s32.totalorder %s29, 0
      %p176 = por %p174, %p175
      %p177 = scmp.ne.s32.totalorder %s165, %s166
      %p178 = scmp.eq.s32.totalorder %s30, 1
      %p179 = por %p177, %p178
      %p181 = scmp.ne.s32.totalorder %s166, %s180
      %p182 = scmp.eq.s32.totalorder %s30, 0
      %p183 = por %p181, %p182
      %s184 = ssub.s32 %s24, %s31
      %p185 = scmp.eq.s32.totalorder %s184, 0
      %s187 = sadd.s32 %s186, 1
      %s188 = scalar_select %p185, %s186, %s187
      %p191 = pneg %p185
      %p192 = scmp.eq.s32.totalorder %s24, 1
      %p193 = por %p191, %p192
      %p194 = scmp.ne.s32.totalorder %s186, %s189
      %p195 = scmp.eq.s32.totalorder %s24, 0
      %p196 = por %p194, %p195
      %p197 = scmp.ne.s32.totalorder %s186, %s189
      %p198 = scmp.eq.s32.totalorder %s29, 1
      %p199 = por %p197, %p198
      %p200 = scmp.ne.s32.totalorder %s189, %s190
      %p201 = scmp.eq.s32.totalorder %s29, 0
      %p202 = por %p200, %p201
      %p203 = scmp.ne.s32.totalorder %s189, %s190
      %p204 = scmp.eq.s32.totalorder %s30, 1
      %p205 = por %p203, %p204
      %p207 = scmp.ne.s32.totalorder %s190, %s206
      %p208 = scmp.eq.s32.totalorder %s30, 0
      %p209 = por %p207, %p208
      %p210 = scmp.le.s32.totalorder 1, %s24
      %p211 = scmp.lt.s32.totalorder %s24, 3
      %p212 = pnand %p210, %p211
      %p213 = pneg %p212
      // Predicated region
      $region9: #{tpu_custom_call.1} parent=5 // pred_check
        _
      $region10: #{tpu_custom_call.1} parent=5 // pred_check_branch
        %215 = sbr.rel (%p212) target = $region12
      $region11: #{tpu_custom_call.1} parent=5 // pred_region
        %s216 = ssub.s32 %s24, 1
        // Predicated region
        $region13: #{tpu_custom_call.1} parent=11 // pred_check
          %p217 = pneg %p71
        $region14: #{tpu_custom_call.1} parent=11 // pred_check_branch
          %219 = sbr.rel (%p217) target = $region16
        $region15: #{tpu_custom_call.1} parent=11 // pred_region
          %s221 = ssub.s32 65536, 65536
          %222 = vsyncadd [#allocation7], %s221
          %s223 = sshll.u32 [#allocation6], 4
          %s224 = int_to_ptr.vmem [resolvable:$true] %s223
          %229 = dma.hbm_to_vmem [thread:$0]  %s1, 65536, %s224, [#allocation7], 256, 256, 16
        $region16: #{tpu_custom_call.1} parent=11 // pred_fallthru
          _
        // Predicated region
        $region17: #{tpu_custom_call.1} parent=11 // pred_check
          %p230 = pneg %p92
        $region18: #{tpu_custom_call.1} parent=11 // pred_check_branch
          %232 = sbr.rel (%p230) target = $region20
        $region19: #{tpu_custom_call.1} parent=11 // pred_region
          %s234 = ssub.s32 64, 64
          %235 = vsyncadd [#allocation7], %s234
          %s237 = sshll.u32 [#allocation8], 4
          %s238 = int_to_ptr.vmem [resolvable:$true] %s237
          %240 = dma.hbm_to_vmem [thread:$0]  %s2, 64, %s238, [#allocation7]
        $region20: #{tpu_custom_call.1} parent=11 // pred_fallthru
          _
        // Predicated region
        $region21: #{tpu_custom_call.1} parent=11 // pred_check
          %p241 = pneg %p113
        $region22: #{tpu_custom_call.1} parent=11 // pred_check_branch
          %243 = sbr.rel (%p241) target = $region24
        $region23: #{tpu_custom_call.1} parent=11 // pred_region
          %s245 = ssub.s32 4096, 4096
          %246 = vsyncadd [#allocation10], %s245
          %s247 = sshll.u32 [#allocation9], 4
          %s248 = int_to_ptr.vmem [resolvable:$true] %s247
          %253 = dma.hbm_to_vmem [thread:$0]  %s3, 4096, %s248, [#allocation10], 64, 64, 4
        $region24: #{tpu_custom_call.1} parent=11 // pred_fallthru
          _
        // Predicated region
        $region25: #{tpu_custom_call.1} parent=11 // pred_check
          %p254 = pneg %p134
        $region26: #{tpu_custom_call.1} parent=11 // pred_check_branch
          %256 = sbr.rel (%p254) target = $region28
        $region27: #{tpu_custom_call.1} parent=11 // pred_region
          %s258 = ssub.s32 16, 16
          %259 = vsyncadd [#allocation10], %s258
          %s261 = sshll.u32 [#allocation11], 4
          %s262 = int_to_ptr.vmem [resolvable:$true] %s261
          %264 = dma.hbm_to_vmem [thread:$0]  %s4, 16, %s262, [#allocation10]
        $region28: #{tpu_custom_call.1} parent=11 // pred_fallthru
          _
        // Predicated region
        $region29: #{tpu_custom_call.1} parent=11 // pred_check
          %p265 = pneg %p155
        $region30: #{tpu_custom_call.1} parent=11 // pred_check_branch
          %267 = sbr.rel (%p265) target = $region32
        $region31: #{tpu_custom_call.1} parent=11 // pred_region
          %s269 = ssub.s32 128, 128
          %270 = vsyncadd [#allocation13], %s269
          %s272 = sshll.u32 [#allocation12], 4
          %s273 = int_to_ptr.vmem [resolvable:$true] %s272
          %275 = dma.hbm_to_vmem [thread:$0]  %s5, 128, %s273, [#allocation13]
        $region32: #{tpu_custom_call.1} parent=11 // pred_fallthru
          _
        // Predicated region
        $region33: #{tpu_custom_call.1} parent=11 // pred_check
          %p276 = pneg %p176
        $region34: #{tpu_custom_call.1} parent=11 // pred_check_branch
          %278 = sbr.rel (%p276) target = $region36
        $region35: #{tpu_custom_call.1} parent=11 // pred_region
          _
        $region36: #{tpu_custom_call.1} parent=11 // pred_fallthru
          _
      $region12: #{tpu_custom_call.1} parent=5 // pred_fallthru
        _
      %p279 = scmp.lt.s32.totalorder %s24, 2
      // Predicated region
      $region37: #{tpu_custom_call.1} parent=5 // pred_check
        %p280 = pneg %p279
      $region38: #{tpu_custom_call.1} parent=5 // pred_check_branch
        %282 = sbr.rel (%p280) target = $region40
      $region39: #{tpu_custom_call.1} parent=5 // pred_region
        // Predicated region
        $region41: #{tpu_custom_call.1} parent=39 // pred_check
          %p283 = pneg %p44
        $region42: #{tpu_custom_call.1} parent=39 // pred_check_branch
          %285 = sbr.rel (%p283) target = $region44
        $region43: #{tpu_custom_call.1} parent=39 // pred_region
          %s286 = sand.u32 %s34, 1
          %s287 = scalar_lea.sflag [#allocation4], %s286
          %s288 = sand.u32 %s34, 1
          %s289 = smul.addr %s288, 128
          %s290 = scalar_lea.vmem [#allocation3], %s289
          %s292 = ssub.s32 2048, 2048
          %293 = vsyncadd %s287, %s292
          %s294 = smul.addr %s24, 16
          %s295 = smul.addr %s294, 128
          %s296 = scalar_lea.hbm %s0, %s295
          %s298 = sshll.u32 %s290, 4
          %s299 = int_to_ptr.vmem [resolvable:$true] %s298
          %301 = dma.hbm_to_vmem [thread:$0]  %s296, 2048, %s299, %s287
        $region44: #{tpu_custom_call.1} parent=39 // pred_fallthru
          _
      $region40: #{tpu_custom_call.1} parent=5 // pred_fallthru
        _
      %p302 = scmp.le.s32.totalorder 1, %s24
      %p303 = scmp.lt.s32.totalorder %s24, 3
      %p304 = pnand %p302, %p303
      %p305 = pneg %p304
      // Predicated region
      $region45: #{tpu_custom_call.1} parent=5 // pred_check
        _
      $region46: #{tpu_custom_call.1} parent=5 // pred_check_branch
        %307 = sbr.rel (%p304) target = $region48
      $region47: #{tpu_custom_call.1} parent=5 // pred_region
        %s308 = ssub.s32 %s24, 1
        %s309 = sand.u32 %s37, 1
        %s310 = scalar_lea.sflag [#allocation4], %s309
        %s311 = sand.u32 %s37, 1
        %s312 = smul.addr %s311, 128
        %s313 = scalar_lea.vmem [#allocation3], %s312
        // Predicated region
        $region49: #{tpu_custom_call.1} parent=47 // pred_check
          %p314 = pneg %p50
        $region50: #{tpu_custom_call.1} parent=47 // pred_check_branch
          %316 = sbr.rel (%p314) target = $region52
        $region51: #{tpu_custom_call.1} parent=47 // pred_region
          %317 = dma.done %s310, 2048
        $region52: #{tpu_custom_call.1} parent=47 // pred_fallthru
          _
        // Predicated region
        $region53: #{tpu_custom_call.1} parent=47 // pred_check
          %p318 = pneg %p71
        $region54: #{tpu_custom_call.1} parent=47 // pred_check_branch
          %320 = sbr.rel (%p318) target = $region56
        $region55: #{tpu_custom_call.1} parent=47 // pred_region
          %321 = dma.done [#allocation7], 65536
        $region56: #{tpu_custom_call.1} parent=47 // pred_fallthru
          _
        // Predicated region
        $region57: #{tpu_custom_call.1} parent=47 // pred_check
          %p322 = pneg %p92
        $region58: #{tpu_custom_call.1} parent=47 // pred_check_branch
          %324 = sbr.rel (%p322) target = $region60
        $region59: #{tpu_custom_call.1} parent=47 // pred_region
          %325 = dma.done [#allocation7], 64
        $region60: #{tpu_custom_call.1} parent=47 // pred_fallthru
          _
        // Predicated region
        $region61: #{tpu_custom_call.1} parent=47 // pred_check
          %p326 = pneg %p113
        $region62: #{tpu_custom_call.1} parent=47 // pred_check_branch
          %328 = sbr.rel (%p326) target = $region64
        $region63: #{tpu_custom_call.1} parent=47 // pred_region
          %329 = dma.done [#allocation10], 4096
        $region64: #{tpu_custom_call.1} parent=47 // pred_fallthru
          _
        // Predicated region
        $region65: #{tpu_custom_call.1} parent=47 // pred_check
          %p330 = pneg %p134
        $region66: #{tpu_custom_call.1} parent=47 // pred_check_branch
          %332 = sbr.rel (%p330) target = $region68
        $region67: #{tpu_custom_call.1} parent=47 // pred_region
          %333 = dma.done [#allocation10], 16
        $region68: #{tpu_custom_call.1} parent=47 // pred_fallthru
          _
        // Predicated region
        $region69: #{tpu_custom_call.1} parent=47 // pred_check
          %p334 = pneg %p155
        $region70: #{tpu_custom_call.1} parent=47 // pred_check_branch
          %336 = sbr.rel (%p334) target = $region72
        $region71: #{tpu_custom_call.1} parent=47 // pred_region
          %337 = dma.done [#allocation13], 128
        $region72: #{tpu_custom_call.1} parent=47 // pred_fallthru
          _
        %s338 = sand.u32 %s37, 1
        %s339 = scalar_lea.sflag [#allocation4], %s338
        %s340 = sand.u32 %s37, 1
        %s341 = smul.addr %s340, 128
        %s342 = scalar_lea.vmem [#allocation3], %s341
        %p343 = pneg %p50
        %p344 = pneg %p47
        %p345 = pneg %p71
        %p346 = pneg %p68
        %p347 = pneg %p92
        %p348 = pneg %p89
        %p349 = pneg %p113
        %p350 = pneg %p110
        %p351 = pneg %p134
        %p352 = pneg %p131
        %p353 = pneg %p155
        %p354 = pneg %p152
        %p355 = pneg %p176
        %p356 = pneg %p173
        %p357 = pneg %p202
        %p358 = pneg %p199
        %s359 = sand.u32 %s189, 1
        %s360 = scalar_lea.sflag [#allocation5], %s359
        %s361 = sand.u32 %s189, 1
        %s362 = scalar_lea.vmem [#allocation14], %s361
        %v364 = vld [vmem:[%s313] sm:$0xff]
        %v365 = vld [vmem:[%s313 + $0x8] sm:$0xff]
        %v366 = vld [vmem:[%s313 + $0x10] sm:$0xff]
        %v367 = vld [vmem:[%s313 + $0x18] sm:$0xff]
        %v368 = vld [vmem:[%s313 + $0x20] sm:$0xff]
        %v369 = vld [vmem:[%s313 + $0x28] sm:$0xff]
        %v370 = vld [vmem:[%s313 + $0x30] sm:$0xff]
        %v371 = vld [vmem:[%s313 + $0x38] sm:$0xff]
        %v372 = vld [vmem:[%s313 + $0x40] sm:$0xff]
        %v373 = vld [vmem:[%s313 + $0x48] sm:$0xff]
        %v374 = vld [vmem:[%s313 + $0x50] sm:$0xff]
        %v375 = vld [vmem:[%s313 + $0x58] sm:$0xff]
        %v376 = vld [vmem:[%s313 + $0x60] sm:$0xff]
        %v377 = vld [vmem:[%s313 + $0x68] sm:$0xff]
        %v378 = vld [vmem:[%s313 + $0x70] sm:$0xff]
        %v379 = vld [vmem:[%s313 + $0x78] sm:$0xff]
        %v380 = vpack.c.bf16 %v364, %v364
        %v381 = vpack.c.bf16 %v365, %v365
        %v382 = vpack.c.bf16 %v366, %v366
        %v383 = vpack.c.bf16 %v367, %v367
        %v384 = vpack.c.bf16 %v368, %v368
        %v385 = vpack.c.bf16 %v369, %v369
        %v386 = vpack.c.bf16 %v370, %v370
        %v387 = vpack.c.bf16 %v371, %v371
        %v388 = vpack.c.bf16 %v372, %v372
        %v389 = vpack.c.bf16 %v373, %v373
        %v390 = vpack.c.bf16 %v374, %v374
        %v391 = vpack.c.bf16 %v375, %v375
        %v392 = vpack.c.bf16 %v376, %v376
        %v393 = vpack.c.bf16 %v377, %v377
        %v394 = vpack.c.bf16 %v378, %v378
        %v395 = vpack.c.bf16 %v379, %v379
        %v396 = vld [vmem:[#allocation6] sm:$0xff]
        %v397 = vld [vmem:[#allocation6 + $0x8] sm:$0xff]
        %v398 = vld [vmem:[#allocation6 + $0x10] sm:$0xff]
        %v399 = vld [vmem:[#allocation6 + $0x18] sm:$0xff]
        %v400 = vld [vmem:[#allocation6 + $0x20] sm:$0xff]
        %v401 = vld [vmem:[#allocation6 + $0x28] sm:$0xff]
        %v402 = vld [vmem:[#allocation6 + $0x30] sm:$0xff]
        %v403 = vld [vmem:[#allocation6 + $0x38] sm:$0xff]
        %v404 = vld [vmem:[#allocation6 + $0x40] sm:$0xff]
        %v405 = vld [vmem:[#allocation6 + $0x48] sm:$0xff]
        %v406 = vld [vmem:[#allocation6 + $0x50] sm:$0xff]
        %v407 = vld [vmem:[#allocation6 + $0x58] sm:$0xff]
        %v408 = vld [vmem:[#allocation6 + $0x60] sm:$0xff]
        %v409 = vld [vmem:[#allocation6 + $0x68] sm:$0xff]
        %v410 = vld [vmem:[#allocation6 + $0x70] sm:$0xff]
        %v411 = vld [vmem:[#allocation6 + $0x78] sm:$0xff]
        %v412 = vld [vmem:[#allocation6 + $0x80] sm:$0xff]
        %v413 = vld [vmem:[#allocation6 + $0x88] sm:$0xff]
        %v414 = vld [vmem:[#allocation6 + $0x90] sm:$0xff]
        %v415 = vld [vmem:[#allocation6 + $0x98] sm:$0xff]
        %v416 = vld [vmem:[#allocation6 + $0xa0] sm:$0xff]
        %v417 = vld [vmem:[#allocation6 + $0xa8] sm:$0xff]
        %v418 = vld [vmem:[#allocation6 + $0xb0] sm:$0xff]
        %v419 = vld [vmem:[#allocation6 + $0xb8] sm:$0xff]
        %v420 = vld [vmem:[#allocation6 + $0xc0] sm:$0xff]
        %v421 = vld [vmem:[#allocation6 + $0xc8] sm:$0xff]
        %v422 = vld [vmem:[#allocation6 + $0xd0] sm:$0xff]
        %v423 = vld [vmem:[#allocation6 + $0xd8] sm:$0xff]
        %v424 = vld [vmem:[#allocation6 + $0xe0] sm:$0xff]
        %v425 = vld [vmem:[#allocation6 + $0xe8] sm:$0xff]
        %v426 = vld [vmem:[#allocation6 + $0xf0] sm:$0xff]
        %v427 = vld [vmem:[#allocation6 + $0xf8] sm:$0xff]
        %v428 = vld [vmem:[#allocation6 + $0x100] sm:$0xff]
        %v429 = vld [vmem:[#allocation6 + $0x108] sm:$0xff]
        %v430 = vld [vmem:[#allocation6 + $0x110] sm:$0xff]
        %v431 = vld [vmem:[#allocation6 + $0x118] sm:$0xff]
        %v432 = vld [vmem:[#allocation6 + $0x120] sm:$0xff]
        %v433 = vld [vmem:[#allocation6 + $0x128] sm:$0xff]
        %v434 = vld [vmem:[#allocation6 + $0x130] sm:$0xff]
        %v435 = vld [vmem:[#allocation6 + $0x138] sm:$0xff]
        %v436 = vld [vmem:[#allocation6 + $0x140] sm:$0xff]
        %v437 = vld [vmem:[#allocation6 + $0x148] sm:$0xff]
        %v438 = vld [vmem:[#allocation6 + $0x150] sm:$0xff]
        %v439 = vld [vmem:[#allocation6 + $0x158] sm:$0xff]
        %v440 = vld [vmem:[#allocation6 + $0x160] sm:$0xff]
        %v441 = vld [vmem:[#allocation6 + $0x168] sm:$0xff]
        %v442 = vld [vmem:[#allocation6 + $0x170] sm:$0xff]
        %v443 = vld [vmem:[#allocation6 + $0x178] sm:$0xff]
        %v444 = vld [vmem:[#allocation6 + $0x180] sm:$0xff]
        %v445 = vld [vmem:[#allocation6 + $0x188] sm:$0xff]
        %v446 = vld [vmem:[#allocation6 + $0x190] sm:$0xff]
        %v447 = vld [vmem:[#allocation6 + $0x198] sm:$0xff]
        %v448 = vld [vmem:[#allocation6 + $0x1a0] sm:$0xff]
        %v449 = vld [vmem:[#allocation6 + $0x1a8] sm:$0xff]
        %v450 = vld [vmem:[#allocation6 + $0x1b0] sm:$0xff]
        %v451 = vld [vmem:[#allocation6 + $0x1b8] sm:$0xff]
        %v452 = vld [vmem:[#allocation6 + $0x1c0] sm:$0xff]
        %v453 = vld [vmem:[#allocation6 + $0x1c8] sm:$0xff]
        %v454 = vld [vmem:[#allocation6 + $0x1d0] sm:$0xff]
        %v455 = vld [vmem:[#allocation6 + $0x1d8] sm:$0xff]
        %v456 = vld [vmem:[#allocation6 + $0x1e0] sm:$0xff]
        %v457 = vld [vmem:[#allocation6 + $0x1e8] sm:$0xff]
        %v458 = vld [vmem:[#allocation6 + $0x1f0] sm:$0xff]
        %v459 = vld [vmem:[#allocation6 + $0x1f8] sm:$0xff]
        %v460 = vld [vmem:[#allocation6 + $0x200] sm:$0xff]
        %v461 = vld [vmem:[#allocation6 + $0x208] sm:$0xff]
        %v462 = vld [vmem:[#allocation6 + $0x210] sm:$0xff]
        %v463 = vld [vmem:[#allocation6 + $0x218] sm:$0xff]
        %v464 = vld [vmem:[#allocation6 + $0x220] sm:$0xff]
        %v465 = vld [vmem:[#allocation6 + $0x228] sm:$0xff]
        %v466 = vld [vmem:[#allocation6 + $0x230] sm:$0xff]
        %v467 = vld [vmem:[#allocation6 + $0x238] sm:$0xff]
        %v468 = vld [vmem:[#allocation6 + $0x240] sm:$0xff]
        %v469 = vld [vmem:[#allocation6 + $0x248] sm:$0xff]
        %v470 = vld [vmem:[#allocation6 + $0x250] sm:$0xff]
        %v471 = vld [vmem:[#allocation6 + $0x258] sm:$0xff]
        %v472 = vld [vmem:[#allocation6 + $0x260] sm:$0xff]
        %v473 = vld [vmem:[#allocation6 + $0x268] sm:$0xff]
        %v474 = vld [vmem:[#allocation6 + $0x270] sm:$0xff]
        %v475 = vld [vmem:[#allocation6 + $0x278] sm:$0xff]
        %v476 = vld [vmem:[#allocation6 + $0x280] sm:$0xff]
        %v477 = vld [vmem:[#allocation6 + $0x288] sm:$0xff]
        %v478 = vld [vmem:[#allocation6 + $0x290] sm:$0xff]
        %v479 = vld [vmem:[#allocation6 + $0x298] sm:$0xff]
        %v480 = vld [vmem:[#allocation6 + $0x2a0] sm:$0xff]
        %v481 = vld [vmem:[#allocation6 + $0x2a8] sm:$0xff]
        %v482 = vld [vmem:[#allocation6 + $0x2b0] sm:$0xff]
        %v483 = vld [vmem:[#allocation6 + $0x2b8] sm:$0xff]
        %v484 = vld [vmem:[#allocation6 + $0x2c0] sm:$0xff]
        %v485 = vld [vmem:[#allocation6 + $0x2c8] sm:$0xff]
        %v486 = vld [vmem:[#allocation6 + $0x2d0] sm:$0xff]
        %v487 = vld [vmem:[#allocation6 + $0x2d8] sm:$0xff]
        %v488 = vld [vmem:[#allocation6 + $0x2e0] sm:$0xff]
        %v489 = vld [vmem:[#allocation6 + $0x2e8] sm:$0xff]
        %v490 = vld [vmem:[#allocation6 + $0x2f0] sm:$0xff]
        %v491 = vld [vmem:[#allocation6 + $0x2f8] sm:$0xff]
        %v492 = vld [vmem:[#allocation6 + $0x300] sm:$0xff]
        %v493 = vld [vmem:[#allocation6 + $0x308] sm:$0xff]
        %v494 = vld [vmem:[#allocation6 + $0x310] sm:$0xff]
        %v495 = vld [vmem:[#allocation6 + $0x318] sm:$0xff]
        %v496 = vld [vmem:[#allocation6 + $0x320] sm:$0xff]
        %v497 = vld [vmem:[#allocation6 + $0x328] sm:$0xff]
        %v498 = vld [vmem:[#allocation6 + $0x330] sm:$0xff]
        %v499 = vld [vmem:[#allocation6 + $0x338] sm:$0xff]
        %v500 = vld [vmem:[#allocation6 + $0x340] sm:$0xff]
        %v501 = vld [vmem:[#allocation6 + $0x348] sm:$0xff]
        %v502 = vld [vmem:[#allocation6 + $0x350] sm:$0xff]
        %v503 = vld [vmem:[#allocation6 + $0x358] sm:$0xff]
        %v504 = vld [vmem:[#allocation6 + $0x360] sm:$0xff]
        %v505 = vld [vmem:[#allocation6 + $0x368] sm:$0xff]
        %v506 = vld [vmem:[#allocation6 + $0x370] sm:$0xff]
        %v507 = vld [vmem:[#allocation6 + $0x378] sm:$0xff]
        %v508 = vld [vmem:[#allocation6 + $0x380] sm:$0xff]
        %v509 = vld [vmem:[#allocation6 + $0x388] sm:$0xff]
        %v510 = vld [vmem:[#allocation6 + $0x390] sm:$0xff]
        %v511 = vld [vmem:[#allocation6 + $0x398] sm:$0xff]
        %v512 = vld [vmem:[#allocation6 + $0x3a0] sm:$0xff]
        %v513 = vld [vmem:[#allocation6 + $0x3a8] sm:$0xff]
        %v514 = vld [vmem:[#allocation6 + $0x3b0] sm:$0xff]
        %v515 = vld [vmem:[#allocation6 + $0x3b8] sm:$0xff]
        %v516 = vld [vmem:[#allocation6 + $0x3c0] sm:$0xff]
        %v517 = vld [vmem:[#allocation6 + $0x3c8] sm:$0xff]
        %v518 = vld [vmem:[#allocation6 + $0x3d0] sm:$0xff]
        %v519 = vld [vmem:[#allocation6 + $0x3d8] sm:$0xff]
        %v520 = vld [vmem:[#allocation6 + $0x3e0] sm:$0xff]
        %v521 = vld [vmem:[#allocation6 + $0x3e8] sm:$0xff]
        %v522 = vld [vmem:[#allocation6 + $0x3f0] sm:$0xff]
        %v523 = vld [vmem:[#allocation6 + $0x3f8] sm:$0xff]
        %v524 = vld [vmem:[#allocation6 + $0x400] sm:$0xff]
        %v525 = vld [vmem:[#allocation6 + $0x408] sm:$0xff]
        %v526 = vld [vmem:[#allocation6 + $0x410] sm:$0xff]
        %v527 = vld [vmem:[#allocation6 + $0x418] sm:$0xff]
        %v528 = vld [vmem:[#allocation6 + $0x420] sm:$0xff]
        %v529 = vld [vmem:[#allocation6 + $0x428] sm:$0xff]
        %v530 = vld [vmem:[#allocation6 + $0x430] sm:$0xff]
        %v531 = vld [vmem:[#allocation6 + $0x438] sm:$0xff]
        %v532 = vld [vmem:[#allocation6 + $0x440] sm:$0xff]
        %v533 = vld [vmem:[#allocation6 + $0x448] sm:$0xff]
        %v534 = vld [vmem:[#allocation6 + $0x450] sm:$0xff]
        %v535 = vld [vmem:[#allocation6 + $0x458] sm:$0xff]
        %v536 = vld [vmem:[#allocation6 + $0x460] sm:$0xff]
        %v537 = vld [vmem:[#allocation6 + $0x468] sm:$0xff]
        %v538 = vld [vmem:[#allocation6 + $0x470] sm:$0xff]
        %v539 = vld [vmem:[#allocation6 + $0x478] sm:$0xff]
        %v540 = vld [vmem:[#allocation6 + $0x480] sm:$0xff]
        %v541 = vld [vmem:[#allocation6 + $0x488] sm:$0xff]
        %v542 = vld [vmem:[#allocation6 + $0x490] sm:$0xff]
        %v543 = vld [vmem:[#allocation6 + $0x498] sm:$0xff]
        %v544 = vld [vmem:[#allocation6 + $0x4a0] sm:$0xff]
        %v545 = vld [vmem:[#allocation6 + $0x4a8] sm:$0xff]
        %v546 = vld [vmem:[#allocation6 + $0x4b0] sm:$0xff]
        %v547 = vld [vmem:[#allocation6 + $0x4b8] sm:$0xff]
        %v548 = vld [vmem:[#allocation6 + $0x4c0] sm:$0xff]
        %v549 = vld [vmem:[#allocation6 + $0x4c8] sm:$0xff]
        %v550 = vld [vmem:[#allocation6 + $0x4d0] sm:$0xff]
        %v551 = vld [vmem:[#allocation6 + $0x4d8] sm:$0xff]
        %v552 = vld [vmem:[#allocation6 + $0x4e0] sm:$0xff]
        %v553 = vld [vmem:[#allocation6 + $0x4e8] sm:$0xff]
        %v554 = vld [vmem:[#allocation6 + $0x4f0] sm:$0xff]
        %v555 = vld [vmem:[#allocation6 + $0x4f8] sm:$0xff]
        %v556 = vld [vmem:[#allocation6 + $0x500] sm:$0xff]
        %v557 = vld [vmem:[#allocation6 + $0x508] sm:$0xff]
        %v558 = vld [vmem:[#allocation6 + $0x510] sm:$0xff]
        %v559 = vld [vmem:[#allocation6 + $0x518] sm:$0xff]
        %v560 = vld [vmem:[#allocation6 + $0x520] sm:$0xff]
        %v561 = vld [vmem:[#allocation6 + $0x528] sm:$0xff]
        %v562 = vld [vmem:[#allocation6 + $0x530] sm:$0xff]
        %v563 = vld [vmem:[#allocation6 + $0x538] sm:$0xff]
        %v564 = vld [vmem:[#allocation6 + $0x540] sm:$0xff]
        %v565 = vld [vmem:[#allocation6 + $0x548] sm:$0xff]
        %v566 = vld [vmem:[#allocation6 + $0x550] sm:$0xff]
        %v567 = vld [vmem:[#allocation6 + $0x558] sm:$0xff]
        %v568 = vld [vmem:[#allocation6 + $0x560] sm:$0xff]
        %v569 = vld [vmem:[#allocation6 + $0x568] sm:$0xff]
        %v570 = vld [vmem:[#allocation6 + $0x570] sm:$0xff]
        %v571 = vld [vmem:[#allocation6 + $0x578] sm:$0xff]
        %v572 = vld [vmem:[#allocation6 + $0x580] sm:$0xff]
        %v573 = vld [vmem:[#allocation6 + $0x588] sm:$0xff]
        %v574 = vld [vmem:[#allocation6 + $0x590] sm:$0xff]
        %v575 = vld [vmem:[#allocation6 + $0x598] sm:$0xff]
        %v576 = vld [vmem:[#allocation6 + $0x5a0] sm:$0xff]
        %v577 = vld [vmem:[#allocation6 + $0x5a8] sm:$0xff]
        %v578 = vld [vmem:[#allocation6 + $0x5b0] sm:$0xff]
        %v579 = vld [vmem:[#allocation6 + $0x5b8] sm:$0xff]
        %v580 = vld [vmem:[#allocation6 + $0x5c0] sm:$0xff]
        %v581 = vld [vmem:[#allocation6 + $0x5c8] sm:$0xff]
        %v582 = vld [vmem:[#allocation6 + $0x5d0] sm:$0xff]
        %v583 = vld [vmem:[#allocation6 + $0x5d8] sm:$0xff]
        %v584 = vld [vmem:[#allocation6 + $0x5e0] sm:$0xff]
        %v585 = vld [vmem:[#allocation6 + $0x5e8] sm:$0xff]
        %v586 = vld [vmem:[#allocation6 + $0x5f0] sm:$0xff]
        %v587 = vld [vmem:[#allocation6 + $0x5f8] sm:$0xff]
        %v588 = vld [vmem:[#allocation6 + $0x600] sm:$0xff]
        %v589 = vld [vmem:[#allocation6 + $0x608] sm:$0xff]
        %v590 = vld [vmem:[#allocation6 + $0x610] sm:$0xff]
        %v591 = vld [vmem:[#allocation6 + $0x618] sm:$0xff]
        %v592 = vld [vmem:[#allocation6 + $0x620] sm:$0xff]
        %v593 = vld [vmem:[#allocation6 + $0x628] sm:$0xff]
        %v594 = vld [vmem:[#allocation6 + $0x630] sm:$0xff]
        %v595 = vld [vmem:[#allocation6 + $0x638] sm:$0xff]
        %v596 = vld [vmem:[#allocation6 + $0x640] sm:$0xff]
        %v597 = vld [vmem:[#allocation6 + $0x648] sm:$0xff]
        %v598 = vld [vmem:[#allocation6 + $0x650] sm:$0xff]
        %v599 = vld [vmem:[#allocation6 + $0x658] sm:$0xff]
        %v600 = vld [vmem:[#allocation6 + $0x660] sm:$0xff]
        %v601 = vld [vmem:[#allocation6 + $0x668] sm:$0xff]
        %v602 = vld [vmem:[#allocation6 + $0x670] sm:$0xff]
        %v603 = vld [vmem:[#allocation6 + $0x678] sm:$0xff]
        %v604 = vld [vmem:[#allocation6 + $0x680] sm:$0xff]
        %v605 = vld [vmem:[#allocation6 + $0x688] sm:$0xff]
        %v606 = vld [vmem:[#allocation6 + $0x690] sm:$0xff]
        %v607 = vld [vmem:[#allocation6 + $0x698] sm:$0xff]
        %v608 = vld [vmem:[#allocation6 + $0x6a0] sm:$0xff]
        %v609 = vld [vmem:[#allocation6 + $0x6a8] sm:$0xff]
        %v610 = vld [vmem:[#allocation6 + $0x6b0] sm:$0xff]
        %v611 = vld [vmem:[#allocation6 + $0x6b8] sm:$0xff]
        %v612 = vld [vmem:[#allocation6 + $0x6c0] sm:$0xff]
        %v613 = vld [vmem:[#allocation6 + $0x6c8] sm:$0xff]
        %v614 = vld [vmem:[#allocation6 + $0x6d0] sm:$0xff]
        %v615 = vld [vmem:[#allocation6 + $0x6d8] sm:$0xff]
        %v616 = vld [vmem:[#allocation6 + $0x6e0] sm:$0xff]
        %v617 = vld [vmem:[#allocation6 + $0x6e8] sm:$0xff]
        %v618 = vld [vmem:[#allocation6 + $0x6f0] sm:$0xff]
        %v619 = vld [vmem:[#allocation6 + $0x6f8] sm:$0xff]
        %v620 = vld [vmem:[#allocation6 + $0x700] sm:$0xff]
        %v621 = vld [vmem:[#allocation6 + $0x708] sm:$0xff]
        %v622 = vld [vmem:[#allocation6 + $0x710] sm:$0xff]
        %v623 = vld [vmem:[#allocation6 + $0x718] sm:$0xff]
        %v624 = vld [vmem:[#allocation6 + $0x720] sm:$0xff]
        %v625 = vld [vmem:[#allocation6 + $0x728] sm:$0xff]
        %v626 = vld [vmem:[#allocation6 + $0x730] sm:$0xff]
        %v627 = vld [vmem:[#allocation6 + $0x738] sm:$0xff]
        %v628 = vld [vmem:[#allocation6 + $0x740] sm:$0xff]
        %v629 = vld [vmem:[#allocation6 + $0x748] sm:$0xff]
        %v630 = vld [vmem:[#allocation6 + $0x750] sm:$0xff]
        %v631 = vld [vmem:[#allocation6 + $0x758] sm:$0xff]
        %v632 = vld [vmem:[#allocation6 + $0x760] sm:$0xff]
        %v633 = vld [vmem:[#allocation6 + $0x768] sm:$0xff]
        %v634 = vld [vmem:[#allocation6 + $0x770] sm:$0xff]
        %v635 = vld [vmem:[#allocation6 + $0x778] sm:$0xff]
        %v636 = vld [vmem:[#allocation6 + $0x780] sm:$0xff]
        %v637 = vld [vmem:[#allocation6 + $0x788] sm:$0xff]
        %v638 = vld [vmem:[#allocation6 + $0x790] sm:$0xff]
        %v639 = vld [vmem:[#allocation6 + $0x798] sm:$0xff]
        %v640 = vld [vmem:[#allocation6 + $0x7a0] sm:$0xff]
        %v641 = vld [vmem:[#allocation6 + $0x7a8] sm:$0xff]
        %v642 = vld [vmem:[#allocation6 + $0x7b0] sm:$0xff]
        %v643 = vld [vmem:[#allocation6 + $0x7b8] sm:$0xff]
        %v644 = vld [vmem:[#allocation6 + $0x7c0] sm:$0xff]
        %v645 = vld [vmem:[#allocation6 + $0x7c8] sm:$0xff]
        %v646 = vld [vmem:[#allocation6 + $0x7d0] sm:$0xff]
        %v647 = vld [vmem:[#allocation6 + $0x7d8] sm:$0xff]
        %v648 = vld [vmem:[#allocation6 + $0x7e0] sm:$0xff]
        %v649 = vld [vmem:[#allocation6 + $0x7e8] sm:$0xff]
        %v650 = vld [vmem:[#allocation6 + $0x7f0] sm:$0xff]
        %v651 = vld [vmem:[#allocation6 + $0x7f8] sm:$0xff]
        %v652 = vld [vmem:[#allocation6 + $0x800] sm:$0xff]
        %v653 = vld [vmem:[#allocation6 + $0x808] sm:$0xff]
        %v654 = vld [vmem:[#allocation6 + $0x810] sm:$0xff]
        %v655 = vld [vmem:[#allocation6 + $0x818] sm:$0xff]
        %v656 = vld [vmem:[#allocation6 + $0x820] sm:$0xff]
        %v657 = vld [vmem:[#allocation6 + $0x828] sm:$0xff]
        %v658 = vld [vmem:[#allocation6 + $0x830] sm:$0xff]
        %v659 = vld [vmem:[#allocation6 + $0x838] sm:$0xff]
        %v660 = vld [vmem:[#allocation6 + $0x840] sm:$0xff]
        %v661 = vld [vmem:[#allocation6 + $0x848] sm:$0xff]
        %v662 = vld [vmem:[#allocation6 + $0x850] sm:$0xff]
        %v663 = vld [vmem:[#allocation6 + $0x858] sm:$0xff]
        %v664 = vld [vmem:[#allocation6 + $0x860] sm:$0xff]
        %v665 = vld [vmem:[#allocation6 + $0x868] sm:$0xff]
        %v666 = vld [vmem:[#allocation6 + $0x870] sm:$0xff]
        %v667 = vld [vmem:[#allocation6 + $0x878] sm:$0xff]
        %v668 = vld [vmem:[#allocation6 + $0x880] sm:$0xff]
        %v669 = vld [vmem:[#allocation6 + $0x888] sm:$0xff]
        %v670 = vld [vmem:[#allocation6 + $0x890] sm:$0xff]
        %v671 = vld [vmem:[#allocation6 + $0x898] sm:$0xff]
        %v672 = vld [vmem:[#allocation6 + $0x8a0] sm:$0xff]
        %v673 = vld [vmem:[#allocation6 + $0x8a8] sm:$0xff]
        %v674 = vld [vmem:[#allocation6 + $0x8b0] sm:$0xff]
        %v675 = vld [vmem:[#allocation6 + $0x8b8] sm:$0xff]
        %v676 = vld [vmem:[#allocation6 + $0x8c0] sm:$0xff]
        %v677 = vld [vmem:[#allocation6 + $0x8c8] sm:$0xff]
        %v678 = vld [vmem:[#allocation6 + $0x8d0] sm:$0xff]
        %v679 = vld [vmem:[#allocation6 + $0x8d8] sm:$0xff]
        %v680 = vld [vmem:[#allocation6 + $0x8e0] sm:$0xff]
        %v681 = vld [vmem:[#allocation6 + $0x8e8] sm:$0xff]
        %v682 = vld [vmem:[#allocation6 + $0x8f0] sm:$0xff]
        %v683 = vld [vmem:[#allocation6 + $0x8f8] sm:$0xff]
        %v684 = vld [vmem:[#allocation6 + $0x900] sm:$0xff]
        %v685 = vld [vmem:[#allocation6 + $0x908] sm:$0xff]
        %v686 = vld [vmem:[#allocation6 + $0x910] sm:$0xff]
        %v687 = vld [vmem:[#allocation6 + $0x918] sm:$0xff]
        %v688 = vld [vmem:[#allocation6 + $0x920] sm:$0xff]
        %v689 = vld [vmem:[#allocation6 + $0x928] sm:$0xff]
        %v690 = vld [vmem:[#allocation6 + $0x930] sm:$0xff]
        %v691 = vld [vmem:[#allocation6 + $0x938] sm:$0xff]
        %v692 = vld [vmem:[#allocation6 + $0x940] sm:$0xff]
        %v693 = vld [vmem:[#allocation6 + $0x948] sm:$0xff]
        %v694 = vld [vmem:[#allocation6 + $0x950] sm:$0xff]
        %v695 = vld [vmem:[#allocation6 + $0x958] sm:$0xff]
        %v696 = vld [vmem:[#allocation6 + $0x960] sm:$0xff]
        %v697 = vld [vmem:[#allocation6 + $0x968] sm:$0xff]
        %v698 = vld [vmem:[#allocation6 + $0x970] sm:$0xff]
        %v699 = vld [vmem:[#allocation6 + $0x978] sm:$0xff]
        %v700 = vld [vmem:[#allocation6 + $0x980] sm:$0xff]
        %v701 = vld [vmem:[#allocation6 + $0x988] sm:$0xff]
        %v702 = vld [vmem:[#allocation6 + $0x990] sm:$0xff]
        %v703 = vld [vmem:[#allocation6 + $0x998] sm:$0xff]
        %v704 = vld [vmem:[#allocation6 + $0x9a0] sm:$0xff]
        %v705 = vld [vmem:[#allocation6 + $0x9a8] sm:$0xff]
        %v706 = vld [vmem:[#allocation6 + $0x9b0] sm:$0xff]
        %v707 = vld [vmem:[#allocation6 + $0x9b8] sm:$0xff]
        %v708 = vld [vmem:[#allocation6 + $0x9c0] sm:$0xff]
        %v709 = vld [vmem:[#allocation6 + $0x9c8] sm:$0xff]
        %v710 = vld [vmem:[#allocation6 + $0x9d0] sm:$0xff]
        %v711 = vld [vmem:[#allocation6 + $0x9d8] sm:$0xff]
        %v712 = vld [vmem:[#allocation6 + $0x9e0] sm:$0xff]
        %v713 = vld [vmem:[#allocation6 + $0x9e8] sm:$0xff]
        %v714 = vld [vmem:[#allocation6 + $0x9f0] sm:$0xff]
        %v715 = vld [vmem:[#allocation6 + $0x9f8] sm:$0xff]
        %v716 = vld [vmem:[#allocation6 + $0xa00] sm:$0xff]
        %v717 = vld [vmem:[#allocation6 + $0xa08] sm:$0xff]
        %v718 = vld [vmem:[#allocation6 + $0xa10] sm:$0xff]
        %v719 = vld [vmem:[#allocation6 + $0xa18] sm:$0xff]
        %v720 = vld [vmem:[#allocation6 + $0xa20] sm:$0xff]
        %v721 = vld [vmem:[#allocation6 + $0xa28] sm:$0xff]
        %v722 = vld [vmem:[#allocation6 + $0xa30] sm:$0xff]
        %v723 = vld [vmem:[#allocation6 + $0xa38] sm:$0xff]
        %v724 = vld [vmem:[#allocation6 + $0xa40] sm:$0xff]
        %v725 = vld [vmem:[#allocation6 + $0xa48] sm:$0xff]
        %v726 = vld [vmem:[#allocation6 + $0xa50] sm:$0xff]
        %v727 = vld [vmem:[#allocation6 + $0xa58] sm:$0xff]
        %v728 = vld [vmem:[#allocation6 + $0xa60] sm:$0xff]
        %v729 = vld [vmem:[#allocation6 + $0xa68] sm:$0xff]
        %v730 = vld [vmem:[#allocation6 + $0xa70] sm:$0xff]
        %v731 = vld [vmem:[#allocation6 + $0xa78] sm:$0xff]
        %v732 = vld [vmem:[#allocation6 + $0xa80] sm:$0xff]
        %v733 = vld [vmem:[#allocation6 + $0xa88] sm:$0xff]
        %v734 = vld [vmem:[#allocation6 + $0xa90] sm:$0xff]
        %v735 = vld [vmem:[#allocation6 + $0xa98] sm:$0xff]
        %v736 = vld [vmem:[#allocation6 + $0xaa0] sm:$0xff]
        %v737 = vld [vmem:[#allocation6 + $0xaa8] sm:$0xff]
        %v738 = vld [vmem:[#allocation6 + $0xab0] sm:$0xff]
        %v739 = vld [vmem:[#allocation6 + $0xab8] sm:$0xff]
        %v740 = vld [vmem:[#allocation6 + $0xac0] sm:$0xff]
        %v741 = vld [vmem:[#allocation6 + $0xac8] sm:$0xff]
        %v742 = vld [vmem:[#allocation6 + $0xad0] sm:$0xff]
        %v743 = vld [vmem:[#allocation6 + $0xad8] sm:$0xff]
        %v744 = vld [vmem:[#allocation6 + $0xae0] sm:$0xff]
        %v745 = vld [vmem:[#allocation6 + $0xae8] sm:$0xff]
        %v746 = vld [vmem:[#allocation6 + $0xaf0] sm:$0xff]
        %v747 = vld [vmem:[#allocation6 + $0xaf8] sm:$0xff]
        %v748 = vld [vmem:[#allocation6 + $0xb00] sm:$0xff]
        %v749 = vld [vmem:[#allocation6 + $0xb08] sm:$0xff]
        %v750 = vld [vmem:[#allocation6 + $0xb10] sm:$0xff]
        %v751 = vld [vmem:[#allocation6 + $0xb18] sm:$0xff]
        %v752 = vld [vmem:[#allocation6 + $0xb20] sm:$0xff]
        %v753 = vld [vmem:[#allocation6 + $0xb28] sm:$0xff]
        %v754 = vld [vmem:[#allocation6 + $0xb30] sm:$0xff]
        %v755 = vld [vmem:[#allocation6 + $0xb38] sm:$0xff]
        %v756 = vld [vmem:[#allocation6 + $0xb40] sm:$0xff]
        %v757 = vld [vmem:[#allocation6 + $0xb48] sm:$0xff]
        %v758 = vld [vmem:[#allocation6 + $0xb50] sm:$0xff]
        %v759 = vld [vmem:[#allocation6 + $0xb58] sm:$0xff]
        %v760 = vld [vmem:[#allocation6 + $0xb60] sm:$0xff]
        %v761 = vld [vmem:[#allocation6 + $0xb68] sm:$0xff]
        %v762 = vld [vmem:[#allocation6 + $0xb70] sm:$0xff]
        %v763 = vld [vmem:[#allocation6 + $0xb78] sm:$0xff]
        %v764 = vld [vmem:[#allocation6 + $0xb80] sm:$0xff]
        %v765 = vld [vmem:[#allocation6 + $0xb88] sm:$0xff]
        %v766 = vld [vmem:[#allocation6 + $0xb90] sm:$0xff]
        %v767 = vld [vmem:[#allocation6 + $0xb98] sm:$0xff]
        %v768 = vld [vmem:[#allocation6 + $0xba0] sm:$0xff]
        %v769 = vld [vmem:[#allocation6 + $0xba8] sm:$0xff]
        %v770 = vld [vmem:[#allocation6 + $0xbb0] sm:$0xff]
        %v771 = vld [vmem:[#allocation6 + $0xbb8] sm:$0xff]
        %v772 = vld [vmem:[#allocation6 + $0xbc0] sm:$0xff]
        %v773 = vld [vmem:[#allocation6 + $0xbc8] sm:$0xff]
        %v774 = vld [vmem:[#allocation6 + $0xbd0] sm:$0xff]
        %v775 = vld [vmem:[#allocation6 + $0xbd8] sm:$0xff]
        %v776 = vld [vmem:[#allocation6 + $0xbe0] sm:$0xff]
        %v777 = vld [vmem:[#allocation6 + $0xbe8] sm:$0xff]
        %v778 = vld [vmem:[#allocation6 + $0xbf0] sm:$0xff]
        %v779 = vld [vmem:[#allocation6 + $0xbf8] sm:$0xff]
        %v780 = vld [vmem:[#allocation6 + $0xc00] sm:$0xff]
        %v781 = vld [vmem:[#allocation6 + $0xc08] sm:$0xff]
        %v782 = vld [vmem:[#allocation6 + $0xc10] sm:$0xff]
        %v783 = vld [vmem:[#allocation6 + $0xc18] sm:$0xff]
        %v784 = vld [vmem:[#allocation6 + $0xc20] sm:$0xff]
        %v785 = vld [vmem:[#allocation6 + $0xc28] sm:$0xff]
        %v786 = vld [vmem:[#allocation6 + $0xc30] sm:$0xff]
        %v787 = vld [vmem:[#allocation6 + $0xc38] sm:$0xff]
        %v788 = vld [vmem:[#allocation6 + $0xc40] sm:$0xff]
        %v789 = vld [vmem:[#allocation6 + $0xc48] sm:$0xff]
        %v790 = vld [vmem:[#allocation6 + $0xc50] sm:$0xff]
        %v791 = vld [vmem:[#allocation6 + $0xc58] sm:$0xff]
        %v792 = vld [vmem:[#allocation6 + $0xc60] sm:$0xff]
        %v793 = vld [vmem:[#allocation6 + $0xc68] sm:$0xff]
        %v794 = vld [vmem:[#allocation6 + $0xc70] sm:$0xff]
        %v795 = vld [vmem:[#allocation6 + $0xc78] sm:$0xff]
        %v796 = vld [vmem:[#allocation6 + $0xc80] sm:$0xff]
        %v797 = vld [vmem:[#allocation6 + $0xc88] sm:$0xff]
        %v798 = vld [vmem:[#allocation6 + $0xc90] sm:$0xff]
        %v799 = vld [vmem:[#allocation6 + $0xc98] sm:$0xff]
        %v800 = vld [vmem:[#allocation6 + $0xca0] sm:$0xff]
        %v801 = vld [vmem:[#allocation6 + $0xca8] sm:$0xff]
        %v802 = vld [vmem:[#allocation6 + $0xcb0] sm:$0xff]
        %v803 = vld [vmem:[#allocation6 + $0xcb8] sm:$0xff]
        %v804 = vld [vmem:[#allocation6 + $0xcc0] sm:$0xff]
        %v805 = vld [vmem:[#allocation6 + $0xcc8] sm:$0xff]
        %v806 = vld [vmem:[#allocation6 + $0xcd0] sm:$0xff]
        %v807 = vld [vmem:[#allocation6 + $0xcd8] sm:$0xff]
        %v808 = vld [vmem:[#allocation6 + $0xce0] sm:$0xff]
        %v809 = vld [vmem:[#allocation6 + $0xce8] sm:$0xff]
        %v810 = vld [vmem:[#allocation6 + $0xcf0] sm:$0xff]
        %v811 = vld [vmem:[#allocation6 + $0xcf8] sm:$0xff]
        %v812 = vld [vmem:[#allocation6 + $0xd00] sm:$0xff]
        %v813 = vld [vmem:[#allocation6 + $0xd08] sm:$0xff]
        %v814 = vld [vmem:[#allocation6 + $0xd10] sm:$0xff]
        %v815 = vld [vmem:[#allocation6 + $0xd18] sm:$0xff]
        %v816 = vld [vmem:[#allocation6 + $0xd20] sm:$0xff]
        %v817 = vld [vmem:[#allocation6 + $0xd28] sm:$0xff]
        %v818 = vld [vmem:[#allocation6 + $0xd30] sm:$0xff]
        %v819 = vld [vmem:[#allocation6 + $0xd38] sm:$0xff]
        %v820 = vld [vmem:[#allocation6 + $0xd40] sm:$0xff]
        %v821 = vld [vmem:[#allocation6 + $0xd48] sm:$0xff]
        %v822 = vld [vmem:[#allocation6 + $0xd50] sm:$0xff]
        %v823 = vld [vmem:[#allocation6 + $0xd58] sm:$0xff]
        %v824 = vld [vmem:[#allocation6 + $0xd60] sm:$0xff]
        %v825 = vld [vmem:[#allocation6 + $0xd68] sm:$0xff]
        %v826 = vld [vmem:[#allocation6 + $0xd70] sm:$0xff]
        %v827 = vld [vmem:[#allocation6 + $0xd78] sm:$0xff]
        %v828 = vld [vmem:[#allocation6 + $0xd80] sm:$0xff]
        %v829 = vld [vmem:[#allocation6 + $0xd88] sm:$0xff]
        %v830 = vld [vmem:[#allocation6 + $0xd90] sm:$0xff]
        %v831 = vld [vmem:[#allocation6 + $0xd98] sm:$0xff]
        %v832 = vld [vmem:[#allocation6 + $0xda0] sm:$0xff]
        %v833 = vld [vmem:[#allocation6 + $0xda8] sm:$0xff]
        %v834 = vld [vmem:[#allocation6 + $0xdb0] sm:$0xff]
        %v835 = vld [vmem:[#allocation6 + $0xdb8] sm:$0xff]
        %v836 = vld [vmem:[#allocation6 + $0xdc0] sm:$0xff]
        %v837 = vld [vmem:[#allocation6 + $0xdc8] sm:$0xff]
        %v838 = vld [vmem:[#allocation6 + $0xdd0] sm:$0xff]
        %v839 = vld [vmem:[#allocation6 + $0xdd8] sm:$0xff]
        %v840 = vld [vmem:[#allocation6 + $0xde0] sm:$0xff]
        %v841 = vld [vmem:[#allocation6 + $0xde8] sm:$0xff]
        %v842 = vld [vmem:[#allocation6 + $0xdf0] sm:$0xff]
        %v843 = vld [vmem:[#allocation6 + $0xdf8] sm:$0xff]
        %v844 = vld [vmem:[#allocation6 + $0xe00] sm:$0xff]
        %v845 = vld [vmem:[#allocation6 + $0xe08] sm:$0xff]
        %v846 = vld [vmem:[#allocation6 + $0xe10] sm:$0xff]
        %v847 = vld [vmem:[#allocation6 + $0xe18] sm:$0xff]
        %v848 = vld [vmem:[#allocation6 + $0xe20] sm:$0xff]
        %v849 = vld [vmem:[#allocation6 + $0xe28] sm:$0xff]
        %v850 = vld [vmem:[#allocation6 + $0xe30] sm:$0xff]
        %v851 = vld [vmem:[#allocation6 + $0xe38] sm:$0xff]
        %v852 = vld [vmem:[#allocation6 + $0xe40] sm:$0xff]
        %v853 = vld [vmem:[#allocation6 + $0xe48] sm:$0xff]
        %v854 = vld [vmem:[#allocation6 + $0xe50] sm:$0xff]
        %v855 = vld [vmem:[#allocation6 + $0xe58] sm:$0xff]
        %v856 = vld [vmem:[#allocation6 + $0xe60] sm:$0xff]
        %v857 = vld [vmem:[#allocation6 + $0xe68] sm:$0xff]
        %v858 = vld [vmem:[#allocation6 + $0xe70] sm:$0xff]
        %v859 = vld [vmem:[#allocation6 + $0xe78] sm:$0xff]
        %v860 = vld [vmem:[#allocation6 + $0xe80] sm:$0xff]
        %v861 = vld [vmem:[#allocation6 + $0xe88] sm:$0xff]
        %v862 = vld [vmem:[#allocation6 + $0xe90] sm:$0xff]
        %v863 = vld [vmem:[#allocation6 + $0xe98] sm:$0xff]
        %v864 = vld [vmem:[#allocation6 + $0xea0] sm:$0xff]
        %v865 = vld [vmem:[#allocation6 + $0xea8] sm:$0xff]
        %v866 = vld [vmem:[#allocation6 + $0xeb0] sm:$0xff]
        %v867 = vld [vmem:[#allocation6 + $0xeb8] sm:$0xff]
        %v868 = vld [vmem:[#allocation6 + $0xec0] sm:$0xff]
        %v869 = vld [vmem:[#allocation6 + $0xec8] sm:$0xff]
        %v870 = vld [vmem:[#allocation6 + $0xed0] sm:$0xff]
        %v871 = vld [vmem:[#allocation6 + $0xed8] sm:$0xff]
        %v872 = vld [vmem:[#allocation6 + $0xee0] sm:$0xff]
        %v873 = vld [vmem:[#allocation6 + $0xee8] sm:$0xff]
        %v874 = vld [vmem:[#allocation6 + $0xef0] sm:$0xff]
        %v875 = vld [vmem:[#allocation6 + $0xef8] sm:$0xff]
        %v876 = vld [vmem:[#allocation6 + $0xf00] sm:$0xff]
        %v877 = vld [vmem:[#allocation6 + $0xf08] sm:$0xff]
        %v878 = vld [vmem:[#allocation6 + $0xf10] sm:$0xff]
        %v879 = vld [vmem:[#allocation6 + $0xf18] sm:$0xff]
        %v880 = vld [vmem:[#allocation6 + $0xf20] sm:$0xff]
        %v881 = vld [vmem:[#allocation6 + $0xf28] sm:$0xff]
        %v882 = vld [vmem:[#allocation6 + $0xf30] sm:$0xff]
        %v883 = vld [vmem:[#allocation6 + $0xf38] sm:$0xff]
        %v884 = vld [vmem:[#allocation6 + $0xf40] sm:$0xff]
        %v885 = vld [vmem:[#allocation6 + $0xf48] sm:$0xff]
        %v886 = vld [vmem:[#allocation6 + $0xf50] sm:$0xff]
        %v887 = vld [vmem:[#allocation6 + $0xf58] sm:$0xff]
        %v888 = vld [vmem:[#allocation6 + $0xf60] sm:$0xff]
        %v889 = vld [vmem:[#allocation6 + $0xf68] sm:$0xff]
        %v890 = vld [vmem:[#allocation6 + $0xf70] sm:$0xff]
        %v891 = vld [vmem:[#allocation6 + $0xf78] sm:$0xff]
        %v892 = vld [vmem:[#allocation6 + $0xf80] sm:$0xff]
        %v893 = vld [vmem:[#allocation6 + $0xf88] sm:$0xff]
        %v894 = vld [vmem:[#allocation6 + $0xf90] sm:$0xff]
        %v895 = vld [vmem:[#allocation6 + $0xf98] sm:$0xff]
        %v896 = vld [vmem:[#allocation6 + $0xfa0] sm:$0xff]
        %v897 = vld [vmem:[#allocation6 + $0xfa8] sm:$0xff]
        %v898 = vld [vmem:[#allocation6 + $0xfb0] sm:$0xff]
        %v899 = vld [vmem:[#allocation6 + $0xfb8] sm:$0xff]
        %v900 = vld [vmem:[#allocation6 + $0xfc0] sm:$0xff]
        %v901 = vld [vmem:[#allocation6 + $0xfc8] sm:$0xff]
        %v902 = vld [vmem:[#allocation6 + $0xfd0] sm:$0xff]
        %v903 = vld [vmem:[#allocation6 + $0xfd8] sm:$0xff]
        %v904 = vld [vmem:[#allocation6 + $0xfe0] sm:$0xff]
        %v905 = vld [vmem:[#allocation6 + $0xfe8] sm:$0xff]
        %v906 = vld [vmem:[#allocation6 + $0xff0] sm:$0xff]
        %v907 = vld [vmem:[#allocation6 + $0xff8] sm:$0xff]
        %v908 = vld [vmem:[#allocation8] sm:$0xf]
        %v910 = vlaneseq
        %v911 = vshrl.u32 %v910, 7
        %v912 = vsub.s32 0, %v911
        %v913 = vrot.slane %v908, %v912
        %v914 = vlaneseq
        %v915 = vshrl.u32 %v914, 7
        %v916 = vsub.s32 1, %v915
        %v917 = vrot.slane %v908, %v916
        %v918 = vlaneseq
        %v919 = vshrl.u32 %v918, 7
        %v920 = vsub.s32 2, %v919
        %v921 = vrot.slane %v908, %v920
        %v922 = vlaneseq
        %v923 = vshrl.u32 %v922, 7
        %v924 = vsub.s32 3, %v923
        %v925 = vrot.slane %v908, %v924
        %v1442 = vunpack.c.l.b16 %v396
        %v1443 = vunpack.c.h.b16 %v396
        %v1444 = vunpack.c.l.b16 %v397
        %v1445 = vunpack.c.h.b16 %v397
        %v1446 = vunpack.c.l.b16 %v398
        %v1447 = vunpack.c.h.b16 %v398
        %v1448 = vunpack.c.l.b16 %v399
        %v1449 = vunpack.c.h.b16 %v399
        %v1450 = vunpack.c.l.b16 %v400
        %v1451 = vunpack.c.h.b16 %v400
        %v1452 = vunpack.c.l.b16 %v401
        %v1453 = vunpack.c.h.b16 %v401
        %v1454 = vunpack.c.l.b16 %v402
        %v1455 = vunpack.c.h.b16 %v402
        %v1456 = vunpack.c.l.b16 %v403
        %v1457 = vunpack.c.h.b16 %v403
        %v1458 = vunpack.c.l.b16 %v404
        %v1459 = vunpack.c.h.b16 %v404
        %v1460 = vunpack.c.l.b16 %v405
        %v1461 = vunpack.c.h.b16 %v405
        %v1462 = vunpack.c.l.b16 %v406
        %v1463 = vunpack.c.h.b16 %v406
        %v1464 = vunpack.c.l.b16 %v407
        %v1465 = vunpack.c.h.b16 %v407
        %v1466 = vunpack.c.l.b16 %v408
        %v1467 = vunpack.c.h.b16 %v408
        %v1468 = vunpack.c.l.b16 %v409
        %v1469 = vunpack.c.h.b16 %v409
        %v1470 = vunpack.c.l.b16 %v410
        %v1471 = vunpack.c.h.b16 %v410
        %v1472 = vunpack.c.l.b16 %v411
        %v1473 = vunpack.c.h.b16 %v411
        %v1474 = vunpack.c.l.b16 %v412
        %v1475 = vunpack.c.h.b16 %v412
        %v1476 = vunpack.c.l.b16 %v413
        %v1477 = vunpack.c.h.b16 %v413
        %v1478 = vunpack.c.l.b16 %v414
        %v1479 = vunpack.c.h.b16 %v414
        %v1480 = vunpack.c.l.b16 %v415
        %v1481 = vunpack.c.h.b16 %v415
        %v1482 = vunpack.c.l.b16 %v416
        %v1483 = vunpack.c.h.b16 %v416
        %v1484 = vunpack.c.l.b16 %v417
        %v1485 = vunpack.c.h.b16 %v417
        %v1486 = vunpack.c.l.b16 %v418
        %v1487 = vunpack.c.h.b16 %v418
        %v1488 = vunpack.c.l.b16 %v419
        %v1489 = vunpack.c.h.b16 %v419
        %v1490 = vunpack.c.l.b16 %v420
        %v1491 = vunpack.c.h.b16 %v420
        %v1492 = vunpack.c.l.b16 %v421
        %v1493 = vunpack.c.h.b16 %v421
        %v1494 = vunpack.c.l.b16 %v422
        %v1495 = vunpack.c.h.b16 %v422
        %v1496 = vunpack.c.l.b16 %v423
        %v1497 = vunpack.c.h.b16 %v423
        %v1498 = vunpack.c.l.b16 %v424
        %v1499 = vunpack.c.h.b16 %v424
        %v1500 = vunpack.c.l.b16 %v425
        %v1501 = vunpack.c.h.b16 %v425
        %v1502 = vunpack.c.l.b16 %v426
        %v1503 = vunpack.c.h.b16 %v426
        %v1504 = vunpack.c.l.b16 %v427
        %v1505 = vunpack.c.h.b16 %v427
        %v1506 = vunpack.c.l.b16 %v428
        %v1507 = vunpack.c.h.b16 %v428
        %v1508 = vunpack.c.l.b16 %v429
        %v1509 = vunpack.c.h.b16 %v429
        %v1510 = vunpack.c.l.b16 %v430
        %v1511 = vunpack.c.h.b16 %v430
        %v1512 = vunpack.c.l.b16 %v431
        %v1513 = vunpack.c.h.b16 %v431
        %v1514 = vunpack.c.l.b16 %v432
        %v1515 = vunpack.c.h.b16 %v432
        %v1516 = vunpack.c.l.b16 %v433
        %v1517 = vunpack.c.h.b16 %v433
        %v1518 = vunpack.c.l.b16 %v434
        %v1519 = vunpack.c.h.b16 %v434
        %v1520 = vunpack.c.l.b16 %v435
        %v1521 = vunpack.c.h.b16 %v435
        %v1522 = vunpack.c.l.b16 %v436
        %v1523 = vunpack.c.h.b16 %v436
        %v1524 = vunpack.c.l.b16 %v437
        %v1525 = vunpack.c.h.b16 %v437
        %v1526 = vunpack.c.l.b16 %v438
        %v1527 = vunpack.c.h.b16 %v438
        %v1528 = vunpack.c.l.b16 %v439
        %v1529 = vunpack.c.h.b16 %v439
        %v1530 = vunpack.c.l.b16 %v440
        %v1531 = vunpack.c.h.b16 %v440
        %v1532 = vunpack.c.l.b16 %v441
        %v1533 = vunpack.c.h.b16 %v441
        %v1534 = vunpack.c.l.b16 %v442
        %v1535 = vunpack.c.h.b16 %v442
        %v1536 = vunpack.c.l.b16 %v443
        %v1537 = vunpack.c.h.b16 %v443
        %v1538 = vunpack.c.l.b16 %v444
        %v1539 = vunpack.c.h.b16 %v444
        %v1540 = vunpack.c.l.b16 %v445
        %v1541 = vunpack.c.h.b16 %v445
        %v1542 = vunpack.c.l.b16 %v446
        %v1543 = vunpack.c.h.b16 %v446
        %v1544 = vunpack.c.l.b16 %v447
        %v1545 = vunpack.c.h.b16 %v447
        %v1546 = vunpack.c.l.b16 %v448
        %v1547 = vunpack.c.h.b16 %v448
        %v1548 = vunpack.c.l.b16 %v449
        %v1549 = vunpack.c.h.b16 %v449
        %v1550 = vunpack.c.l.b16 %v450
        %v1551 = vunpack.c.h.b16 %v450
        %v1552 = vunpack.c.l.b16 %v451
        %v1553 = vunpack.c.h.b16 %v451
        %v1554 = vunpack.c.l.b16 %v452
        %v1555 = vunpack.c.h.b16 %v452
        %v1556 = vunpack.c.l.b16 %v453
        %v1557 = vunpack.c.h.b16 %v453
        %v1558 = vunpack.c.l.b16 %v454
        %v1559 = vunpack.c.h.b16 %v454
        %v1560 = vunpack.c.l.b16 %v455
        %v1561 = vunpack.c.h.b16 %v455
        %v1562 = vunpack.c.l.b16 %v456
        %v1563 = vunpack.c.h.b16 %v456
        %v1564 = vunpack.c.l.b16 %v457
        %v1565 = vunpack.c.h.b16 %v457
        %v1566 = vunpack.c.l.b16 %v458
        %v1567 = vunpack.c.h.b16 %v458
        %v1568 = vunpack.c.l.b16 %v459
        %v1569 = vunpack.c.h.b16 %v459
        %v1570 = vunpack.c.l.b16 %v460
        %v1571 = vunpack.c.h.b16 %v460
        %v1572 = vunpack.c.l.b16 %v461
        %v1573 = vunpack.c.h.b16 %v461
        %v1574 = vunpack.c.l.b16 %v462
        %v1575 = vunpack.c.h.b16 %v462
        %v1576 = vunpack.c.l.b16 %v463
        %v1577 = vunpack.c.h.b16 %v463
        %v1578 = vunpack.c.l.b16 %v464
        %v1579 = vunpack.c.h.b16 %v464
        %v1580 = vunpack.c.l.b16 %v465
        %v1581 = vunpack.c.h.b16 %v465
        %v1582 = vunpack.c.l.b16 %v466
        %v1583 = vunpack.c.h.b16 %v466
        %v1584 = vunpack.c.l.b16 %v467
        %v1585 = vunpack.c.h.b16 %v467
        %v1586 = vunpack.c.l.b16 %v468
        %v1587 = vunpack.c.h.b16 %v468
        %v1588 = vunpack.c.l.b16 %v469
        %v1589 = vunpack.c.h.b16 %v469
        %v1590 = vunpack.c.l.b16 %v470
        %v1591 = vunpack.c.h.b16 %v470
        %v1592 = vunpack.c.l.b16 %v471
        %v1593 = vunpack.c.h.b16 %v471
        %v1594 = vunpack.c.l.b16 %v472
        %v1595 = vunpack.c.h.b16 %v472
        %v1596 = vunpack.c.l.b16 %v473
        %v1597 = vunpack.c.h.b16 %v473
        %v1598 = vunpack.c.l.b16 %v474
        %v1599 = vunpack.c.h.b16 %v474
        %v1600 = vunpack.c.l.b16 %v475
        %v1601 = vunpack.c.h.b16 %v475
        %v1602 = vunpack.c.l.b16 %v476
        %v1603 = vunpack.c.h.b16 %v476
        %v1604 = vunpack.c.l.b16 %v477
        %v1605 = vunpack.c.h.b16 %v477
        %v1606 = vunpack.c.l.b16 %v478
        %v1607 = vunpack.c.h.b16 %v478
        %v1608 = vunpack.c.l.b16 %v479
        %v1609 = vunpack.c.h.b16 %v479
        %v1610 = vunpack.c.l.b16 %v480
        %v1611 = vunpack.c.h.b16 %v480
        %v1612 = vunpack.c.l.b16 %v481
        %v1613 = vunpack.c.h.b16 %v481
        %v1614 = vunpack.c.l.b16 %v482
        %v1615 = vunpack.c.h.b16 %v482
        %v1616 = vunpack.c.l.b16 %v483
        %v1617 = vunpack.c.h.b16 %v483
        %v1618 = vunpack.c.l.b16 %v484
        %v1619 = vunpack.c.h.b16 %v484
        %v1620 = vunpack.c.l.b16 %v485
        %v1621 = vunpack.c.h.b16 %v485
        %v1622 = vunpack.c.l.b16 %v486
        %v1623 = vunpack.c.h.b16 %v486
        %v1624 = vunpack.c.l.b16 %v487
        %v1625 = vunpack.c.h.b16 %v487
        %v1626 = vunpack.c.l.b16 %v488
        %v1627 = vunpack.c.h.b16 %v488
        %v1628 = vunpack.c.l.b16 %v489
        %v1629 = vunpack.c.h.b16 %v489
        %v1630 = vunpack.c.l.b16 %v490
        %v1631 = vunpack.c.h.b16 %v490
        %v1632 = vunpack.c.l.b16 %v491
        %v1633 = vunpack.c.h.b16 %v491
        %v1634 = vunpack.c.l.b16 %v492
        %v1635 = vunpack.c.h.b16 %v492
        %v1636 = vunpack.c.l.b16 %v493
        %v1637 = vunpack.c.h.b16 %v493
        %v1638 = vunpack.c.l.b16 %v494
        %v1639 = vunpack.c.h.b16 %v494
        %v1640 = vunpack.c.l.b16 %v495
        %v1641 = vunpack.c.h.b16 %v495
        %v1642 = vunpack.c.l.b16 %v496
        %v1643 = vunpack.c.h.b16 %v496
        %v1644 = vunpack.c.l.b16 %v497
        %v1645 = vunpack.c.h.b16 %v497
        %v1646 = vunpack.c.l.b16 %v498
        %v1647 = vunpack.c.h.b16 %v498
        %v1648 = vunpack.c.l.b16 %v499
        %v1649 = vunpack.c.h.b16 %v499
        %v1650 = vunpack.c.l.b16 %v500
        %v1651 = vunpack.c.h.b16 %v500
        %v1652 = vunpack.c.l.b16 %v501
        %v1653 = vunpack.c.h.b16 %v501
        %v1654 = vunpack.c.l.b16 %v502
        %v1655 = vunpack.c.h.b16 %v502
        %v1656 = vunpack.c.l.b16 %v503
        %v1657 = vunpack.c.h.b16 %v503
        %v1658 = vunpack.c.l.b16 %v504
        %v1659 = vunpack.c.h.b16 %v504
        %v1660 = vunpack.c.l.b16 %v505
        %v1661 = vunpack.c.h.b16 %v505
        %v1662 = vunpack.c.l.b16 %v506
        %v1663 = vunpack.c.h.b16 %v506
        %v1664 = vunpack.c.l.b16 %v507
        %v1665 = vunpack.c.h.b16 %v507
        %v1666 = vunpack.c.l.b16 %v508
        %v1667 = vunpack.c.h.b16 %v508
        %v1668 = vunpack.c.l.b16 %v509
        %v1669 = vunpack.c.h.b16 %v509
        %v1670 = vunpack.c.l.b16 %v510
        %v1671 = vunpack.c.h.b16 %v510
        %v1672 = vunpack.c.l.b16 %v511
        %v1673 = vunpack.c.h.b16 %v511
        %v1674 = vunpack.c.l.b16 %v512
        %v1675 = vunpack.c.h.b16 %v512
        %v1676 = vunpack.c.l.b16 %v513
        %v1677 = vunpack.c.h.b16 %v513
        %v1678 = vunpack.c.l.b16 %v514
        %v1679 = vunpack.c.h.b16 %v514
        %v1680 = vunpack.c.l.b16 %v515
        %v1681 = vunpack.c.h.b16 %v515
        %v1682 = vunpack.c.l.b16 %v516
        %v1683 = vunpack.c.h.b16 %v516
        %v1684 = vunpack.c.l.b16 %v517
        %v1685 = vunpack.c.h.b16 %v517
        %v1686 = vunpack.c.l.b16 %v518
        %v1687 = vunpack.c.h.b16 %v518
        %v1688 = vunpack.c.l.b16 %v519
        %v1689 = vunpack.c.h.b16 %v519
        %v1690 = vunpack.c.l.b16 %v520
        %v1691 = vunpack.c.h.b16 %v520
        %v1692 = vunpack.c.l.b16 %v521
        %v1693 = vunpack.c.h.b16 %v521
        %v1694 = vunpack.c.l.b16 %v522
        %v1695 = vunpack.c.h.b16 %v522
        %v1696 = vunpack.c.l.b16 %v523
        %v1697 = vunpack.c.h.b16 %v523
        %v1698 = vunpack.c.l.b16 %v524
        %v1699 = vunpack.c.h.b16 %v524
        %v1700 = vunpack.c.l.b16 %v525
        %v1701 = vunpack.c.h.b16 %v525
        %v1702 = vunpack.c.l.b16 %v526
        %v1703 = vunpack.c.h.b16 %v526
        %v1704 = vunpack.c.l.b16 %v527
        %v1705 = vunpack.c.h.b16 %v527
        %v1706 = vunpack.c.l.b16 %v528
        %v1707 = vunpack.c.h.b16 %v528
        %v1708 = vunpack.c.l.b16 %v529
        %v1709 = vunpack.c.h.b16 %v529
        %v1710 = vunpack.c.l.b16 %v530
        %v1711 = vunpack.c.h.b16 %v530
        %v1712 = vunpack.c.l.b16 %v531
        %v1713 = vunpack.c.h.b16 %v531
        %v1714 = vunpack.c.l.b16 %v532
        %v1715 = vunpack.c.h.b16 %v532
        %v1716 = vunpack.c.l.b16 %v533
        %v1717 = vunpack.c.h.b16 %v533
        %v1718 = vunpack.c.l.b16 %v534
        %v1719 = vunpack.c.h.b16 %v534
        %v1720 = vunpack.c.l.b16 %v535
        %v1721 = vunpack.c.h.b16 %v535
        %v1722 = vunpack.c.l.b16 %v536
        %v1723 = vunpack.c.h.b16 %v536
        %v1724 = vunpack.c.l.b16 %v537
        %v1725 = vunpack.c.h.b16 %v537
        %v1726 = vunpack.c.l.b16 %v538
        %v1727 = vunpack.c.h.b16 %v538
        %v1728 = vunpack.c.l.b16 %v539
        %v1729 = vunpack.c.h.b16 %v539
        %v1730 = vunpack.c.l.b16 %v540
        %v1731 = vunpack.c.h.b16 %v540
        %v1732 = vunpack.c.l.b16 %v541
        %v1733 = vunpack.c.h.b16 %v541
        %v1734 = vunpack.c.l.b16 %v542
        %v1735 = vunpack.c.h.b16 %v542
        %v1736 = vunpack.c.l.b16 %v543
        %v1737 = vunpack.c.h.b16 %v543
        %v1738 = vunpack.c.l.b16 %v544
        %v1739 = vunpack.c.h.b16 %v544
        %v1740 = vunpack.c.l.b16 %v545
        %v1741 = vunpack.c.h.b16 %v545
        %v1742 = vunpack.c.l.b16 %v546
        %v1743 = vunpack.c.h.b16 %v546
        %v1744 = vunpack.c.l.b16 %v547
        %v1745 = vunpack.c.h.b16 %v547
        %v1746 = vunpack.c.l.b16 %v548
        %v1747 = vunpack.c.h.b16 %v548
        %v1748 = vunpack.c.l.b16 %v549
        %v1749 = vunpack.c.h.b16 %v549
        %v1750 = vunpack.c.l.b16 %v550
        %v1751 = vunpack.c.h.b16 %v550
        %v1752 = vunpack.c.l.b16 %v551
        %v1753 = vunpack.c.h.b16 %v551
        %v1754 = vunpack.c.l.b16 %v552
        %v1755 = vunpack.c.h.b16 %v552
        %v1756 = vunpack.c.l.b16 %v553
        %v1757 = vunpack.c.h.b16 %v553
        %v1758 = vunpack.c.l.b16 %v554
        %v1759 = vunpack.c.h.b16 %v554
        %v1760 = vunpack.c.l.b16 %v555
        %v1761 = vunpack.c.h.b16 %v555
        %v1762 = vunpack.c.l.b16 %v556
        %v1763 = vunpack.c.h.b16 %v556
        %v1764 = vunpack.c.l.b16 %v557
        %v1765 = vunpack.c.h.b16 %v557
        %v1766 = vunpack.c.l.b16 %v558
        %v1767 = vunpack.c.h.b16 %v558
        %v1768 = vunpack.c.l.b16 %v559
        %v1769 = vunpack.c.h.b16 %v559
        %v1770 = vunpack.c.l.b16 %v560
        %v1771 = vunpack.c.h.b16 %v560
        %v1772 = vunpack.c.l.b16 %v561
        %v1773 = vunpack.c.h.b16 %v561
        %v1774 = vunpack.c.l.b16 %v562
        %v1775 = vunpack.c.h.b16 %v562
        %v1776 = vunpack.c.l.b16 %v563
        %v1777 = vunpack.c.h.b16 %v563
        %v1778 = vunpack.c.l.b16 %v564
        %v1779 = vunpack.c.h.b16 %v564
        %v1780 = vunpack.c.l.b16 %v565
        %v1781 = vunpack.c.h.b16 %v565
        %v1782 = vunpack.c.l.b16 %v566
        %v1783 = vunpack.c.h.b16 %v566
        %v1784 = vunpack.c.l.b16 %v567
        %v1785 = vunpack.c.h.b16 %v567
        %v1786 = vunpack.c.l.b16 %v568
        %v1787 = vunpack.c.h.b16 %v568
        %v1788 = vunpack.c.l.b16 %v569
        %v1789 = vunpack.c.h.b16 %v569
        %v1790 = vunpack.c.l.b16 %v570
        %v1791 = vunpack.c.h.b16 %v570
        %v1792 = vunpack.c.l.b16 %v571
        %v1793 = vunpack.c.h.b16 %v571
        %v1794 = vunpack.c.l.b16 %v572
        %v1795 = vunpack.c.h.b16 %v572
        %v1796 = vunpack.c.l.b16 %v573
        %v1797 = vunpack.c.h.b16 %v573
        %v1798 = vunpack.c.l.b16 %v574
        %v1799 = vunpack.c.h.b16 %v574
        %v1800 = vunpack.c.l.b16 %v575
        %v1801 = vunpack.c.h.b16 %v575
        %v1802 = vunpack.c.l.b16 %v576
        %v1803 = vunpack.c.h.b16 %v576
        %v1804 = vunpack.c.l.b16 %v577
        %v1805 = vunpack.c.h.b16 %v577
        %v1806 = vunpack.c.l.b16 %v578
        %v1807 = vunpack.c.h.b16 %v578
        %v1808 = vunpack.c.l.b16 %v579
        %v1809 = vunpack.c.h.b16 %v579
        %v1810 = vunpack.c.l.b16 %v580
        %v1811 = vunpack.c.h.b16 %v580
        %v1812 = vunpack.c.l.b16 %v581
        %v1813 = vunpack.c.h.b16 %v581
        %v1814 = vunpack.c.l.b16 %v582
        %v1815 = vunpack.c.h.b16 %v582
        %v1816 = vunpack.c.l.b16 %v583
        %v1817 = vunpack.c.h.b16 %v583
        %v1818 = vunpack.c.l.b16 %v584
        %v1819 = vunpack.c.h.b16 %v584
        %v1820 = vunpack.c.l.b16 %v585
        %v1821 = vunpack.c.h.b16 %v585
        %v1822 = vunpack.c.l.b16 %v586
        %v1823 = vunpack.c.h.b16 %v586
        %v1824 = vunpack.c.l.b16 %v587
        %v1825 = vunpack.c.h.b16 %v587
        %v1826 = vunpack.c.l.b16 %v588
        %v1827 = vunpack.c.h.b16 %v588
        %v1828 = vunpack.c.l.b16 %v589
        %v1829 = vunpack.c.h.b16 %v589
        %v1830 = vunpack.c.l.b16 %v590
        %v1831 = vunpack.c.h.b16 %v590
        %v1832 = vunpack.c.l.b16 %v591
        %v1833 = vunpack.c.h.b16 %v591
        %v1834 = vunpack.c.l.b16 %v592
        %v1835 = vunpack.c.h.b16 %v592
        %v1836 = vunpack.c.l.b16 %v593
        %v1837 = vunpack.c.h.b16 %v593
        %v1838 = vunpack.c.l.b16 %v594
        %v1839 = vunpack.c.h.b16 %v594
        %v1840 = vunpack.c.l.b16 %v595
        %v1841 = vunpack.c.h.b16 %v595
        %v1842 = vunpack.c.l.b16 %v596
        %v1843 = vunpack.c.h.b16 %v596
        %v1844 = vunpack.c.l.b16 %v597
        %v1845 = vunpack.c.h.b16 %v597
        %v1846 = vunpack.c.l.b16 %v598
        %v1847 = vunpack.c.h.b16 %v598
        %v1848 = vunpack.c.l.b16 %v599
        %v1849 = vunpack.c.h.b16 %v599
        %v1850 = vunpack.c.l.b16 %v600
        %v1851 = vunpack.c.h.b16 %v600
        %v1852 = vunpack.c.l.b16 %v601
        %v1853 = vunpack.c.h.b16 %v601
        %v1854 = vunpack.c.l.b16 %v602
        %v1855 = vunpack.c.h.b16 %v602
        %v1856 = vunpack.c.l.b16 %v603
        %v1857 = vunpack.c.h.b16 %v603
        %v1858 = vunpack.c.l.b16 %v604
        %v1859 = vunpack.c.h.b16 %v604
        %v1860 = vunpack.c.l.b16 %v605
        %v1861 = vunpack.c.h.b16 %v605
        %v1862 = vunpack.c.l.b16 %v606
        %v1863 = vunpack.c.h.b16 %v606
        %v1864 = vunpack.c.l.b16 %v607
        %v1865 = vunpack.c.h.b16 %v607
        %v1866 = vunpack.c.l.b16 %v608
        %v1867 = vunpack.c.h.b16 %v608
        %v1868 = vunpack.c.l.b16 %v609
        %v1869 = vunpack.c.h.b16 %v609
        %v1870 = vunpack.c.l.b16 %v610
        %v1871 = vunpack.c.h.b16 %v610
        %v1872 = vunpack.c.l.b16 %v611
        %v1873 = vunpack.c.h.b16 %v611
        %v1874 = vunpack.c.l.b16 %v612
        %v1875 = vunpack.c.h.b16 %v612
        %v1876 = vunpack.c.l.b16 %v613
        %v1877 = vunpack.c.h.b16 %v613
        %v1878 = vunpack.c.l.b16 %v614
        %v1879 = vunpack.c.h.b16 %v614
        %v1880 = vunpack.c.l.b16 %v615
        %v1881 = vunpack.c.h.b16 %v615
        %v1882 = vunpack.c.l.b16 %v616
        %v1883 = vunpack.c.h.b16 %v616
        %v1884 = vunpack.c.l.b16 %v617
        %v1885 = vunpack.c.h.b16 %v617
        %v1886 = vunpack.c.l.b16 %v618
        %v1887 = vunpack.c.h.b16 %v618
        %v1888 = vunpack.c.l.b16 %v619
        %v1889 = vunpack.c.h.b16 %v619
        %v1890 = vunpack.c.l.b16 %v620
        %v1891 = vunpack.c.h.b16 %v620
        %v1892 = vunpack.c.l.b16 %v621
        %v1893 = vunpack.c.h.b16 %v621
        %v1894 = vunpack.c.l.b16 %v622
        %v1895 = vunpack.c.h.b16 %v622
        %v1896 = vunpack.c.l.b16 %v623
        %v1897 = vunpack.c.h.b16 %v623
        %v1898 = vunpack.c.l.b16 %v624
        %v1899 = vunpack.c.h.b16 %v624
        %v1900 = vunpack.c.l.b16 %v625
        %v1901 = vunpack.c.h.b16 %v625
        %v1902 = vunpack.c.l.b16 %v626
        %v1903 = vunpack.c.h.b16 %v626
        %v1904 = vunpack.c.l.b16 %v627
        %v1905 = vunpack.c.h.b16 %v627
        %v1906 = vunpack.c.l.b16 %v628
        %v1907 = vunpack.c.h.b16 %v628
        %v1908 = vunpack.c.l.b16 %v629
        %v1909 = vunpack.c.h.b16 %v629
        %v1910 = vunpack.c.l.b16 %v630
        %v1911 = vunpack.c.h.b16 %v630
        %v1912 = vunpack.c.l.b16 %v631
        %v1913 = vunpack.c.h.b16 %v631
        %v1914 = vunpack.c.l.b16 %v632
        %v1915 = vunpack.c.h.b16 %v632
        %v1916 = vunpack.c.l.b16 %v633
        %v1917 = vunpack.c.h.b16 %v633
        %v1918 = vunpack.c.l.b16 %v634
        %v1919 = vunpack.c.h.b16 %v634
        %v1920 = vunpack.c.l.b16 %v635
        %v1921 = vunpack.c.h.b16 %v635
        %v1922 = vunpack.c.l.b16 %v636
        %v1923 = vunpack.c.h.b16 %v636
        %v1924 = vunpack.c.l.b16 %v637
        %v1925 = vunpack.c.h.b16 %v637
        %v1926 = vunpack.c.l.b16 %v638
        %v1927 = vunpack.c.h.b16 %v638
        %v1928 = vunpack.c.l.b16 %v639
        %v1929 = vunpack.c.h.b16 %v639
        %v1930 = vunpack.c.l.b16 %v640
        %v1931 = vunpack.c.h.b16 %v640
        %v1932 = vunpack.c.l.b16 %v641
        %v1933 = vunpack.c.h.b16 %v641
        %v1934 = vunpack.c.l.b16 %v642
        %v1935 = vunpack.c.h.b16 %v642
        %v1936 = vunpack.c.l.b16 %v643
        %v1937 = vunpack.c.h.b16 %v643
        %v1938 = vunpack.c.l.b16 %v644
        %v1939 = vunpack.c.h.b16 %v644
        %v1940 = vunpack.c.l.b16 %v645
        %v1941 = vunpack.c.h.b16 %v645
        %v1942 = vunpack.c.l.b16 %v646
        %v1943 = vunpack.c.h.b16 %v646
        %v1944 = vunpack.c.l.b16 %v647
        %v1945 = vunpack.c.h.b16 %v647
        %v1946 = vunpack.c.l.b16 %v648
        %v1947 = vunpack.c.h.b16 %v648
        %v1948 = vunpack.c.l.b16 %v649
        %v1949 = vunpack.c.h.b16 %v649
        %v1950 = vunpack.c.l.b16 %v650
        %v1951 = vunpack.c.h.b16 %v650
        %v1952 = vunpack.c.l.b16 %v651
        %v1953 = vunpack.c.h.b16 %v651
        %v1954 = vunpack.c.l.b16 %v652
        %v1955 = vunpack.c.h.b16 %v652
        %v1956 = vunpack.c.l.b16 %v653
        %v1957 = vunpack.c.h.b16 %v653
        %v1958 = vunpack.c.l.b16 %v654
        %v1959 = vunpack.c.h.b16 %v654
        %v1960 = vunpack.c.l.b16 %v655
        %v1961 = vunpack.c.h.b16 %v655
        %v1962 = vunpack.c.l.b16 %v656
        %v1963 = vunpack.c.h.b16 %v656
        %v1964 = vunpack.c.l.b16 %v657
        %v1965 = vunpack.c.h.b16 %v657
        %v1966 = vunpack.c.l.b16 %v658
        %v1967 = vunpack.c.h.b16 %v658
        %v1968 = vunpack.c.l.b16 %v659
        %v1969 = vunpack.c.h.b16 %v659
        %v1970 = vunpack.c.l.b16 %v660
        %v1971 = vunpack.c.h.b16 %v660
        %v1972 = vunpack.c.l.b16 %v661
        %v1973 = vunpack.c.h.b16 %v661
        %v1974 = vunpack.c.l.b16 %v662
        %v1975 = vunpack.c.h.b16 %v662
        %v1976 = vunpack.c.l.b16 %v663
        %v1977 = vunpack.c.h.b16 %v663
        %v1978 = vunpack.c.l.b16 %v664
        %v1979 = vunpack.c.h.b16 %v664
        %v1980 = vunpack.c.l.b16 %v665
        %v1981 = vunpack.c.h.b16 %v665
        %v1982 = vunpack.c.l.b16 %v666
        %v1983 = vunpack.c.h.b16 %v666
        %v1984 = vunpack.c.l.b16 %v667
        %v1985 = vunpack.c.h.b16 %v667
        %v1986 = vunpack.c.l.b16 %v668
        %v1987 = vunpack.c.h.b16 %v668
        %v1988 = vunpack.c.l.b16 %v669
        %v1989 = vunpack.c.h.b16 %v669
        %v1990 = vunpack.c.l.b16 %v670
        %v1991 = vunpack.c.h.b16 %v670
        %v1992 = vunpack.c.l.b16 %v671
        %v1993 = vunpack.c.h.b16 %v671
        %v1994 = vunpack.c.l.b16 %v672
        %v1995 = vunpack.c.h.b16 %v672
        %v1996 = vunpack.c.l.b16 %v673
        %v1997 = vunpack.c.h.b16 %v673
        %v1998 = vunpack.c.l.b16 %v674
        %v1999 = vunpack.c.h.b16 %v674
        %v2000 = vunpack.c.l.b16 %v675
        %v2001 = vunpack.c.h.b16 %v675
        %v2002 = vunpack.c.l.b16 %v676
        %v2003 = vunpack.c.h.b16 %v676
        %v2004 = vunpack.c.l.b16 %v677
        %v2005 = vunpack.c.h.b16 %v677
        %v2006 = vunpack.c.l.b16 %v678
        %v2007 = vunpack.c.h.b16 %v678
        %v2008 = vunpack.c.l.b16 %v679
        %v2009 = vunpack.c.h.b16 %v679
        %v2010 = vunpack.c.l.b16 %v680
        %v2011 = vunpack.c.h.b16 %v680
        %v2012 = vunpack.c.l.b16 %v681
        %v2013 = vunpack.c.h.b16 %v681
        %v2014 = vunpack.c.l.b16 %v682
        %v2015 = vunpack.c.h.b16 %v682
        %v2016 = vunpack.c.l.b16 %v683
        %v2017 = vunpack.c.h.b16 %v683
        %v2018 = vunpack.c.l.b16 %v684
        %v2019 = vunpack.c.h.b16 %v684
        %v2020 = vunpack.c.l.b16 %v685
        %v2021 = vunpack.c.h.b16 %v685
        %v2022 = vunpack.c.l.b16 %v686
        %v2023 = vunpack.c.h.b16 %v686
        %v2024 = vunpack.c.l.b16 %v687
        %v2025 = vunpack.c.h.b16 %v687
        %v2026 = vunpack.c.l.b16 %v688
        %v2027 = vunpack.c.h.b16 %v688
        %v2028 = vunpack.c.l.b16 %v689
        %v2029 = vunpack.c.h.b16 %v689
        %v2030 = vunpack.c.l.b16 %v690
        %v2031 = vunpack.c.h.b16 %v690
        %v2032 = vunpack.c.l.b16 %v691
        %v2033 = vunpack.c.h.b16 %v691
        %v2034 = vunpack.c.l.b16 %v692
        %v2035 = vunpack.c.h.b16 %v692
        %v2036 = vunpack.c.l.b16 %v693
        %v2037 = vunpack.c.h.b16 %v693
        %v2038 = vunpack.c.l.b16 %v694
        %v2039 = vunpack.c.h.b16 %v694
        %v2040 = vunpack.c.l.b16 %v695
        %v2041 = vunpack.c.h.b16 %v695
        %v2042 = vunpack.c.l.b16 %v696
        %v2043 = vunpack.c.h.b16 %v696
        %v2044 = vunpack.c.l.b16 %v697
        %v2045 = vunpack.c.h.b16 %v697
        %v2046 = vunpack.c.l.b16 %v698
        %v2047 = vunpack.c.h.b16 %v698
        %v2048 = vunpack.c.l.b16 %v699
        %v2049 = vunpack.c.h.b16 %v699
        %v2050 = vunpack.c.l.b16 %v700
        %v2051 = vunpack.c.h.b16 %v700
        %v2052 = vunpack.c.l.b16 %v701
        %v2053 = vunpack.c.h.b16 %v701
        %v2054 = vunpack.c.l.b16 %v702
        %v2055 = vunpack.c.h.b16 %v702
        %v2056 = vunpack.c.l.b16 %v703
        %v2057 = vunpack.c.h.b16 %v703
        %v2058 = vunpack.c.l.b16 %v704
        %v2059 = vunpack.c.h.b16 %v704
        %v2060 = vunpack.c.l.b16 %v705
        %v2061 = vunpack.c.h.b16 %v705
        %v2062 = vunpack.c.l.b16 %v706
        %v2063 = vunpack.c.h.b16 %v706
        %v2064 = vunpack.c.l.b16 %v707
        %v2065 = vunpack.c.h.b16 %v707
        %v2066 = vunpack.c.l.b16 %v708
        %v2067 = vunpack.c.h.b16 %v708
        %v2068 = vunpack.c.l.b16 %v709
        %v2069 = vunpack.c.h.b16 %v709
        %v2070 = vunpack.c.l.b16 %v710
        %v2071 = vunpack.c.h.b16 %v710
        %v2072 = vunpack.c.l.b16 %v711
        %v2073 = vunpack.c.h.b16 %v711
        %v2074 = vunpack.c.l.b16 %v712
        %v2075 = vunpack.c.h.b16 %v712
        %v2076 = vunpack.c.l.b16 %v713
        %v2077 = vunpack.c.h.b16 %v713
        %v2078 = vunpack.c.l.b16 %v714
        %v2079 = vunpack.c.h.b16 %v714
        %v2080 = vunpack.c.l.b16 %v715
        %v2081 = vunpack.c.h.b16 %v715
        %v2082 = vunpack.c.l.b16 %v716
        %v2083 = vunpack.c.h.b16 %v716
        %v2084 = vunpack.c.l.b16 %v717
        %v2085 = vunpack.c.h.b16 %v717
        %v2086 = vunpack.c.l.b16 %v718
        %v2087 = vunpack.c.h.b16 %v718
        %v2088 = vunpack.c.l.b16 %v719
        %v2089 = vunpack.c.h.b16 %v719
        %v2090 = vunpack.c.l.b16 %v720
        %v2091 = vunpack.c.h.b16 %v720
        %v2092 = vunpack.c.l.b16 %v721
        %v2093 = vunpack.c.h.b16 %v721
        %v2094 = vunpack.c.l.b16 %v722
        %v2095 = vunpack.c.h.b16 %v722
        %v2096 = vunpack.c.l.b16 %v723
        %v2097 = vunpack.c.h.b16 %v723
        %v2098 = vunpack.c.l.b16 %v724
        %v2099 = vunpack.c.h.b16 %v724
        %v2100 = vunpack.c.l.b16 %v725
        %v2101 = vunpack.c.h.b16 %v725
        %v2102 = vunpack.c.l.b16 %v726
        %v2103 = vunpack.c.h.b16 %v726
        %v2104 = vunpack.c.l.b16 %v727
        %v2105 = vunpack.c.h.b16 %v727
        %v2106 = vunpack.c.l.b16 %v728
        %v2107 = vunpack.c.h.b16 %v728
        %v2108 = vunpack.c.l.b16 %v729
        %v2109 = vunpack.c.h.b16 %v729
        %v2110 = vunpack.c.l.b16 %v730
        %v2111 = vunpack.c.h.b16 %v730
        %v2112 = vunpack.c.l.b16 %v731
        %v2113 = vunpack.c.h.b16 %v731
        %v2114 = vunpack.c.l.b16 %v732
        %v2115 = vunpack.c.h.b16 %v732
        %v2116 = vunpack.c.l.b16 %v733
        %v2117 = vunpack.c.h.b16 %v733
        %v2118 = vunpack.c.l.b16 %v734
        %v2119 = vunpack.c.h.b16 %v734
        %v2120 = vunpack.c.l.b16 %v735
        %v2121 = vunpack.c.h.b16 %v735
        %v2122 = vunpack.c.l.b16 %v736
        %v2123 = vunpack.c.h.b16 %v736
        %v2124 = vunpack.c.l.b16 %v737
        %v2125 = vunpack.c.h.b16 %v737
        %v2126 = vunpack.c.l.b16 %v738
        %v2127 = vunpack.c.h.b16 %v738
        %v2128 = vunpack.c.l.b16 %v739
        %v2129 = vunpack.c.h.b16 %v739
        %v2130 = vunpack.c.l.b16 %v740
        %v2131 = vunpack.c.h.b16 %v740
        %v2132 = vunpack.c.l.b16 %v741
        %v2133 = vunpack.c.h.b16 %v741
        %v2134 = vunpack.c.l.b16 %v742
        %v2135 = vunpack.c.h.b16 %v742
        %v2136 = vunpack.c.l.b16 %v743
        %v2137 = vunpack.c.h.b16 %v743
        %v2138 = vunpack.c.l.b16 %v744
        %v2139 = vunpack.c.h.b16 %v744
        %v2140 = vunpack.c.l.b16 %v745
        %v2141 = vunpack.c.h.b16 %v745
        %v2142 = vunpack.c.l.b16 %v746
        %v2143 = vunpack.c.h.b16 %v746
        %v2144 = vunpack.c.l.b16 %v747
        %v2145 = vunpack.c.h.b16 %v747
        %v2146 = vunpack.c.l.b16 %v748
        %v2147 = vunpack.c.h.b16 %v748
        %v2148 = vunpack.c.l.b16 %v749
        %v2149 = vunpack.c.h.b16 %v749
        %v2150 = vunpack.c.l.b16 %v750
        %v2151 = vunpack.c.h.b16 %v750
        %v2152 = vunpack.c.l.b16 %v751
        %v2153 = vunpack.c.h.b16 %v751
        %v2154 = vunpack.c.l.b16 %v752
        %v2155 = vunpack.c.h.b16 %v752
        %v2156 = vunpack.c.l.b16 %v753
        %v2157 = vunpack.c.h.b16 %v753
        %v2158 = vunpack.c.l.b16 %v754
        %v2159 = vunpack.c.h.b16 %v754
        %v2160 = vunpack.c.l.b16 %v755
        %v2161 = vunpack.c.h.b16 %v755
        %v2162 = vunpack.c.l.b16 %v756
        %v2163 = vunpack.c.h.b16 %v756
        %v2164 = vunpack.c.l.b16 %v757
        %v2165 = vunpack.c.h.b16 %v757
        %v2166 = vunpack.c.l.b16 %v758
        %v2167 = vunpack.c.h.b16 %v758
        %v2168 = vunpack.c.l.b16 %v759
        %v2169 = vunpack.c.h.b16 %v759
        %v2170 = vunpack.c.l.b16 %v760
        %v2171 = vunpack.c.h.b16 %v760
        %v2172 = vunpack.c.l.b16 %v761
        %v2173 = vunpack.c.h.b16 %v761
        %v2174 = vunpack.c.l.b16 %v762
        %v2175 = vunpack.c.h.b16 %v762
        %v2176 = vunpack.c.l.b16 %v763
        %v2177 = vunpack.c.h.b16 %v763
        %v2178 = vunpack.c.l.b16 %v764
        %v2179 = vunpack.c.h.b16 %v764
        %v2180 = vunpack.c.l.b16 %v765
        %v2181 = vunpack.c.h.b16 %v765
        %v2182 = vunpack.c.l.b16 %v766
        %v2183 = vunpack.c.h.b16 %v766
        %v2184 = vunpack.c.l.b16 %v767
        %v2185 = vunpack.c.h.b16 %v767
        %v2186 = vunpack.c.l.b16 %v768
        %v2187 = vunpack.c.h.b16 %v768
        %v2188 = vunpack.c.l.b16 %v769
        %v2189 = vunpack.c.h.b16 %v769
        %v2190 = vunpack.c.l.b16 %v770
        %v2191 = vunpack.c.h.b16 %v770
        %v2192 = vunpack.c.l.b16 %v771
        %v2193 = vunpack.c.h.b16 %v771
        %v2194 = vunpack.c.l.b16 %v772
        %v2195 = vunpack.c.h.b16 %v772
        %v2196 = vunpack.c.l.b16 %v773
        %v2197 = vunpack.c.h.b16 %v773
        %v2198 = vunpack.c.l.b16 %v774
        %v2199 = vunpack.c.h.b16 %v774
        %v2200 = vunpack.c.l.b16 %v775
        %v2201 = vunpack.c.h.b16 %v775
        %v2202 = vunpack.c.l.b16 %v776
        %v2203 = vunpack.c.h.b16 %v776
        %v2204 = vunpack.c.l.b16 %v777
        %v2205 = vunpack.c.h.b16 %v777
        %v2206 = vunpack.c.l.b16 %v778
        %v2207 = vunpack.c.h.b16 %v778
        %v2208 = vunpack.c.l.b16 %v779
        %v2209 = vunpack.c.h.b16 %v779
        %v2210 = vunpack.c.l.b16 %v780
        %v2211 = vunpack.c.h.b16 %v780
        %v2212 = vunpack.c.l.b16 %v781
        %v2213 = vunpack.c.h.b16 %v781
        %v2214 = vunpack.c.l.b16 %v782
        %v2215 = vunpack.c.h.b16 %v782
        %v2216 = vunpack.c.l.b16 %v783
        %v2217 = vunpack.c.h.b16 %v783
        %v2218 = vunpack.c.l.b16 %v784
        %v2219 = vunpack.c.h.b16 %v784
        %v2220 = vunpack.c.l.b16 %v785
        %v2221 = vunpack.c.h.b16 %v785
        %v2222 = vunpack.c.l.b16 %v786
        %v2223 = vunpack.c.h.b16 %v786
        %v2224 = vunpack.c.l.b16 %v787
        %v2225 = vunpack.c.h.b16 %v787
        %v2226 = vunpack.c.l.b16 %v788
        %v2227 = vunpack.c.h.b16 %v788
        %v2228 = vunpack.c.l.b16 %v789
        %v2229 = vunpack.c.h.b16 %v789
        %v2230 = vunpack.c.l.b16 %v790
        %v2231 = vunpack.c.h.b16 %v790
        %v2232 = vunpack.c.l.b16 %v791
        %v2233 = vunpack.c.h.b16 %v791
        %v2234 = vunpack.c.l.b16 %v792
        %v2235 = vunpack.c.h.b16 %v792
        %v2236 = vunpack.c.l.b16 %v793
        %v2237 = vunpack.c.h.b16 %v793
        %v2238 = vunpack.c.l.b16 %v794
        %v2239 = vunpack.c.h.b16 %v794
        %v2240 = vunpack.c.l.b16 %v795
        %v2241 = vunpack.c.h.b16 %v795
        %v2242 = vunpack.c.l.b16 %v796
        %v2243 = vunpack.c.h.b16 %v796
        %v2244 = vunpack.c.l.b16 %v797
        %v2245 = vunpack.c.h.b16 %v797
        %v2246 = vunpack.c.l.b16 %v798
        %v2247 = vunpack.c.h.b16 %v798
        %v2248 = vunpack.c.l.b16 %v799
        %v2249 = vunpack.c.h.b16 %v799
        %v2250 = vunpack.c.l.b16 %v800
        %v2251 = vunpack.c.h.b16 %v800
        %v2252 = vunpack.c.l.b16 %v801
        %v2253 = vunpack.c.h.b16 %v801
        %v2254 = vunpack.c.l.b16 %v802
        %v2255 = vunpack.c.h.b16 %v802
        %v2256 = vunpack.c.l.b16 %v803
        %v2257 = vunpack.c.h.b16 %v803
        %v2258 = vunpack.c.l.b16 %v804
        %v2259 = vunpack.c.h.b16 %v804
        %v2260 = vunpack.c.l.b16 %v805
        %v2261 = vunpack.c.h.b16 %v805
        %v2262 = vunpack.c.l.b16 %v806
        %v2263 = vunpack.c.h.b16 %v806
        %v2264 = vunpack.c.l.b16 %v807
        %v2265 = vunpack.c.h.b16 %v807
        %v2266 = vunpack.c.l.b16 %v808
        %v2267 = vunpack.c.h.b16 %v808
        %v2268 = vunpack.c.l.b16 %v809
        %v2269 = vunpack.c.h.b16 %v809
        %v2270 = vunpack.c.l.b16 %v810
        %v2271 = vunpack.c.h.b16 %v810
        %v2272 = vunpack.c.l.b16 %v811
        %v2273 = vunpack.c.h.b16 %v811
        %v2274 = vunpack.c.l.b16 %v812
        %v2275 = vunpack.c.h.b16 %v812
        %v2276 = vunpack.c.l.b16 %v813
        %v2277 = vunpack.c.h.b16 %v813
        %v2278 = vunpack.c.l.b16 %v814
        %v2279 = vunpack.c.h.b16 %v814
        %v2280 = vunpack.c.l.b16 %v815
        %v2281 = vunpack.c.h.b16 %v815
        %v2282 = vunpack.c.l.b16 %v816
        %v2283 = vunpack.c.h.b16 %v816
        %v2284 = vunpack.c.l.b16 %v817
        %v2285 = vunpack.c.h.b16 %v817
        %v2286 = vunpack.c.l.b16 %v818
        %v2287 = vunpack.c.h.b16 %v818
        %v2288 = vunpack.c.l.b16 %v819
        %v2289 = vunpack.c.h.b16 %v819
        %v2290 = vunpack.c.l.b16 %v820
        %v2291 = vunpack.c.h.b16 %v820
        %v2292 = vunpack.c.l.b16 %v821
        %v2293 = vunpack.c.h.b16 %v821
        %v2294 = vunpack.c.l.b16 %v822
        %v2295 = vunpack.c.h.b16 %v822
        %v2296 = vunpack.c.l.b16 %v823
        %v2297 = vunpack.c.h.b16 %v823
        %v2298 = vunpack.c.l.b16 %v824
        %v2299 = vunpack.c.h.b16 %v824
        %v2300 = vunpack.c.l.b16 %v825
        %v2301 = vunpack.c.h.b16 %v825
        %v2302 = vunpack.c.l.b16 %v826
        %v2303 = vunpack.c.h.b16 %v826
        %v2304 = vunpack.c.l.b16 %v827
        %v2305 = vunpack.c.h.b16 %v827
        %v2306 = vunpack.c.l.b16 %v828
        %v2307 = vunpack.c.h.b16 %v828
        %v2308 = vunpack.c.l.b16 %v829
        %v2309 = vunpack.c.h.b16 %v829
        %v2310 = vunpack.c.l.b16 %v830
        %v2311 = vunpack.c.h.b16 %v830
        %v2312 = vunpack.c.l.b16 %v831
        %v2313 = vunpack.c.h.b16 %v831
        %v2314 = vunpack.c.l.b16 %v832
        %v2315 = vunpack.c.h.b16 %v832
        %v2316 = vunpack.c.l.b16 %v833
        %v2317 = vunpack.c.h.b16 %v833
        %v2318 = vunpack.c.l.b16 %v834
        %v2319 = vunpack.c.h.b16 %v834
        %v2320 = vunpack.c.l.b16 %v835
        %v2321 = vunpack.c.h.b16 %v835
        %v2322 = vunpack.c.l.b16 %v836
        %v2323 = vunpack.c.h.b16 %v836
        %v2324 = vunpack.c.l.b16 %v837
        %v2325 = vunpack.c.h.b16 %v837
        %v2326 = vunpack.c.l.b16 %v838
        %v2327 = vunpack.c.h.b16 %v838
        %v2328 = vunpack.c.l.b16 %v839
        %v2329 = vunpack.c.h.b16 %v839
        %v2330 = vunpack.c.l.b16 %v840
        %v2331 = vunpack.c.h.b16 %v840
        %v2332 = vunpack.c.l.b16 %v841
        %v2333 = vunpack.c.h.b16 %v841
        %v2334 = vunpack.c.l.b16 %v842
        %v2335 = vunpack.c.h.b16 %v842
        %v2336 = vunpack.c.l.b16 %v843
        %v2337 = vunpack.c.h.b16 %v843
        %v2338 = vunpack.c.l.b16 %v844
        %v2339 = vunpack.c.h.b16 %v844
        %v2340 = vunpack.c.l.b16 %v845
        %v2341 = vunpack.c.h.b16 %v845
        %v2342 = vunpack.c.l.b16 %v846
        %v2343 = vunpack.c.h.b16 %v846
        %v2344 = vunpack.c.l.b16 %v847
        %v2345 = vunpack.c.h.b16 %v847
        %v2346 = vunpack.c.l.b16 %v848
        %v2347 = vunpack.c.h.b16 %v848
        %v2348 = vunpack.c.l.b16 %v849
        %v2349 = vunpack.c.h.b16 %v849
        %v2350 = vunpack.c.l.b16 %v850
        %v2351 = vunpack.c.h.b16 %v850
        %v2352 = vunpack.c.l.b16 %v851
        %v2353 = vunpack.c.h.b16 %v851
        %v2354 = vunpack.c.l.b16 %v852
        %v2355 = vunpack.c.h.b16 %v852
        %v2356 = vunpack.c.l.b16 %v853
        %v2357 = vunpack.c.h.b16 %v853
        %v2358 = vunpack.c.l.b16 %v854
        %v2359 = vunpack.c.h.b16 %v854
        %v2360 = vunpack.c.l.b16 %v855
        %v2361 = vunpack.c.h.b16 %v855
        %v2362 = vunpack.c.l.b16 %v856
        %v2363 = vunpack.c.h.b16 %v856
        %v2364 = vunpack.c.l.b16 %v857
        %v2365 = vunpack.c.h.b16 %v857
        %v2366 = vunpack.c.l.b16 %v858
        %v2367 = vunpack.c.h.b16 %v858
        %v2368 = vunpack.c.l.b16 %v859
        %v2369 = vunpack.c.h.b16 %v859
        %v2370 = vunpack.c.l.b16 %v860
        %v2371 = vunpack.c.h.b16 %v860
        %v2372 = vunpack.c.l.b16 %v861
        %v2373 = vunpack.c.h.b16 %v861
        %v2374 = vunpack.c.l.b16 %v862
        %v2375 = vunpack.c.h.b16 %v862
        %v2376 = vunpack.c.l.b16 %v863
        %v2377 = vunpack.c.h.b16 %v863
        %v2378 = vunpack.c.l.b16 %v864
        %v2379 = vunpack.c.h.b16 %v864
        %v2380 = vunpack.c.l.b16 %v865
        %v2381 = vunpack.c.h.b16 %v865
        %v2382 = vunpack.c.l.b16 %v866
        %v2383 = vunpack.c.h.b16 %v866
        %v2384 = vunpack.c.l.b16 %v867
        %v2385 = vunpack.c.h.b16 %v867
        %v2386 = vunpack.c.l.b16 %v868
        %v2387 = vunpack.c.h.b16 %v868
        %v2388 = vunpack.c.l.b16 %v869
        %v2389 = vunpack.c.h.b16 %v869
        %v2390 = vunpack.c.l.b16 %v870
        %v2391 = vunpack.c.h.b16 %v870
        %v2392 = vunpack.c.l.b16 %v871
        %v2393 = vunpack.c.h.b16 %v871
        %v2394 = vunpack.c.l.b16 %v872
        %v2395 = vunpack.c.h.b16 %v872
        %v2396 = vunpack.c.l.b16 %v873
        %v2397 = vunpack.c.h.b16 %v873
        %v2398 = vunpack.c.l.b16 %v874
        %v2399 = vunpack.c.h.b16 %v874
        %v2400 = vunpack.c.l.b16 %v875
        %v2401 = vunpack.c.h.b16 %v875
        %v2402 = vunpack.c.l.b16 %v876
        %v2403 = vunpack.c.h.b16 %v876
        %v2404 = vunpack.c.l.b16 %v877
        %v2405 = vunpack.c.h.b16 %v877
        %v2406 = vunpack.c.l.b16 %v878
        %v2407 = vunpack.c.h.b16 %v878
        %v2408 = vunpack.c.l.b16 %v879
        %v2409 = vunpack.c.h.b16 %v879
        %v2410 = vunpack.c.l.b16 %v880
        %v2411 = vunpack.c.h.b16 %v880
        %v2412 = vunpack.c.l.b16 %v881
        %v2413 = vunpack.c.h.b16 %v881
        %v2414 = vunpack.c.l.b16 %v882
        %v2415 = vunpack.c.h.b16 %v882
        %v2416 = vunpack.c.l.b16 %v883
        %v2417 = vunpack.c.h.b16 %v883
        %v2418 = vunpack.c.l.b16 %v884
        %v2419 = vunpack.c.h.b16 %v884
        %v2420 = vunpack.c.l.b16 %v885
        %v2421 = vunpack.c.h.b16 %v885
        %v2422 = vunpack.c.l.b16 %v886
        %v2423 = vunpack.c.h.b16 %v886
        %v2424 = vunpack.c.l.b16 %v887
        %v2425 = vunpack.c.h.b16 %v887
        %v2426 = vunpack.c.l.b16 %v888
        %v2427 = vunpack.c.h.b16 %v888
        %v2428 = vunpack.c.l.b16 %v889
        %v2429 = vunpack.c.h.b16 %v889
        %v2430 = vunpack.c.l.b16 %v890
        %v2431 = vunpack.c.h.b16 %v890
        %v2432 = vunpack.c.l.b16 %v891
        %v2433 = vunpack.c.h.b16 %v891
        %v2434 = vunpack.c.l.b16 %v892
        %v2435 = vunpack.c.h.b16 %v892
        %v2436 = vunpack.c.l.b16 %v893
        %v2437 = vunpack.c.h.b16 %v893
        %v2438 = vunpack.c.l.b16 %v894
        %v2439 = vunpack.c.h.b16 %v894
        %v2440 = vunpack.c.l.b16 %v895
        %v2441 = vunpack.c.h.b16 %v895
        %v2442 = vunpack.c.l.b16 %v896
        %v2443 = vunpack.c.h.b16 %v896
        %v2444 = vunpack.c.l.b16 %v897
        %v2445 = vunpack.c.h.b16 %v897
        %v2446 = vunpack.c.l.b16 %v898
        %v2447 = vunpack.c.h.b16 %v898
        %v2448 = vunpack.c.l.b16 %v899
        %v2449 = vunpack.c.h.b16 %v899
        %v2450 = vunpack.c.l.b16 %v900
        %v2451 = vunpack.c.h.b16 %v900
        %v2452 = vunpack.c.l.b16 %v901
        %v2453 = vunpack.c.h.b16 %v901
        %v2454 = vunpack.c.l.b16 %v902
        %v2455 = vunpack.c.h.b16 %v902
        %v2456 = vunpack.c.l.b16 %v903
        %v2457 = vunpack.c.h.b16 %v903
        %v2458 = vunpack.c.l.b16 %v904
        %v2459 = vunpack.c.h.b16 %v904
        %v2460 = vunpack.c.l.b16 %v905
        %v2461 = vunpack.c.h.b16 %v905
        %v2462 = vunpack.c.l.b16 %v906
        %v2463 = vunpack.c.h.b16 %v906
        %v2464 = vunpack.c.l.b16 %v907
        %v2465 = vunpack.c.h.b16 %v907
        %v2466 = vpack.c.b16 %v1446, %v1442
        %v2467 = vpack.c.b16 %v1447, %v1443
        %v2468 = vpack.c.b16 %v1448, %v1444
        %v2469 = vpack.c.b16 %v1449, %v1445
        %v2470 = vpack.c.b16 %v1454, %v1450
        %v2471 = vpack.c.b16 %v1455, %v1451
        %v2472 = vpack.c.b16 %v1456, %v1452
        %v2473 = vpack.c.b16 %v1457, %v1453
        %v2474 = vpack.c.b16 %v1462, %v1458
        %v2475 = vpack.c.b16 %v1463, %v1459
        %v2476 = vpack.c.b16 %v1464, %v1460
        %v2477 = vpack.c.b16 %v1465, %v1461
        %v2478 = vpack.c.b16 %v1470, %v1466
        %v2479 = vpack.c.b16 %v1471, %v1467
        %v2480 = vpack.c.b16 %v1472, %v1468
        %v2481 = vpack.c.b16 %v1473, %v1469
        %v2482 = vpack.c.b16 %v1478, %v1474
        %v2483 = vpack.c.b16 %v1479, %v1475
        %v2484 = vpack.c.b16 %v1480, %v1476
        %v2485 = vpack.c.b16 %v1481, %v1477
        %v2486 = vpack.c.b16 %v1486, %v1482
        %v2487 = vpack.c.b16 %v1487, %v1483
        %v2488 = vpack.c.b16 %v1488, %v1484
        %v2489 = vpack.c.b16 %v1489, %v1485
        %v2490 = vpack.c.b16 %v1494, %v1490
        %v2491 = vpack.c.b16 %v1495, %v1491
        %v2492 = vpack.c.b16 %v1496, %v1492
        %v2493 = vpack.c.b16 %v1497, %v1493
        %v2494 = vpack.c.b16 %v1502, %v1498
        %v2495 = vpack.c.b16 %v1503, %v1499
        %v2496 = vpack.c.b16 %v1504, %v1500
        %v2497 = vpack.c.b16 %v1505, %v1501
        %v2498 = vpack.c.b16 %v1510, %v1506
        %v2499 = vpack.c.b16 %v1511, %v1507
        %v2500 = vpack.c.b16 %v1512, %v1508
        %v2501 = vpack.c.b16 %v1513, %v1509
        %v2502 = vpack.c.b16 %v1518, %v1514
        %v2503 = vpack.c.b16 %v1519, %v1515
        %v2504 = vpack.c.b16 %v1520, %v1516
        %v2505 = vpack.c.b16 %v1521, %v1517
        %v2506 = vpack.c.b16 %v1526, %v1522
        %v2507 = vpack.c.b16 %v1527, %v1523
        %v2508 = vpack.c.b16 %v1528, %v1524
        %v2509 = vpack.c.b16 %v1529, %v1525
        %v2510 = vpack.c.b16 %v1534, %v1530
        %v2511 = vpack.c.b16 %v1535, %v1531
        %v2512 = vpack.c.b16 %v1536, %v1532
        %v2513 = vpack.c.b16 %v1537, %v1533
        %v2514 = vpack.c.b16 %v1542, %v1538
        %v2515 = vpack.c.b16 %v1543, %v1539
        %v2516 = vpack.c.b16 %v1544, %v1540
        %v2517 = vpack.c.b16 %v1545, %v1541
        %v2518 = vpack.c.b16 %v1550, %v1546
        %v2519 = vpack.c.b16 %v1551, %v1547
        %v2520 = vpack.c.b16 %v1552, %v1548
        %v2521 = vpack.c.b16 %v1553, %v1549
        %v2522 = vpack.c.b16 %v1558, %v1554
        %v2523 = vpack.c.b16 %v1559, %v1555
        %v2524 = vpack.c.b16 %v1560, %v1556
        %v2525 = vpack.c.b16 %v1561, %v1557
        %v2526 = vpack.c.b16 %v1566, %v1562
        %v2527 = vpack.c.b16 %v1567, %v1563
        %v2528 = vpack.c.b16 %v1568, %v1564
        %v2529 = vpack.c.b16 %v1569, %v1565
        %v2530 = vpack.c.b16 %v1574, %v1570
        %v2531 = vpack.c.b16 %v1575, %v1571
        %v2532 = vpack.c.b16 %v1576, %v1572
        %v2533 = vpack.c.b16 %v1577, %v1573
        %v2534 = vpack.c.b16 %v1582, %v1578
        %v2535 = vpack.c.b16 %v1583, %v1579
        %v2536 = vpack.c.b16 %v1584, %v1580
        %v2537 = vpack.c.b16 %v1585, %v1581
        %v2538 = vpack.c.b16 %v1590, %v1586
        %v2539 = vpack.c.b16 %v1591, %v1587
        %v2540 = vpack.c.b16 %v1592, %v1588
        %v2541 = vpack.c.b16 %v1593, %v1589
        %v2542 = vpack.c.b16 %v1598, %v1594
        %v2543 = vpack.c.b16 %v1599, %v1595
        %v2544 = vpack.c.b16 %v1600, %v1596
        %v2545 = vpack.c.b16 %v1601, %v1597
        %v2546 = vpack.c.b16 %v1606, %v1602
        %v2547 = vpack.c.b16 %v1607, %v1603
        %v2548 = vpack.c.b16 %v1608, %v1604
        %v2549 = vpack.c.b16 %v1609, %v1605
        %v2550 = vpack.c.b16 %v1614, %v1610
        %v2551 = vpack.c.b16 %v1615, %v1611
        %v2552 = vpack.c.b16 %v1616, %v1612
        %v2553 = vpack.c.b16 %v1617, %v1613
        %v2554 = vpack.c.b16 %v1622, %v1618
        %v2555 = vpack.c.b16 %v1623, %v1619
        %v2556 = vpack.c.b16 %v1624, %v1620
        %v2557 = vpack.c.b16 %v1625, %v1621
        %v2558 = vpack.c.b16 %v1630, %v1626
        %v2559 = vpack.c.b16 %v1631, %v1627
        %v2560 = vpack.c.b16 %v1632, %v1628
        %v2561 = vpack.c.b16 %v1633, %v1629
        %v2562 = vpack.c.b16 %v1638, %v1634
        %v2563 = vpack.c.b16 %v1639, %v1635
        %v2564 = vpack.c.b16 %v1640, %v1636
        %v2565 = vpack.c.b16 %v1641, %v1637
        %v2566 = vpack.c.b16 %v1646, %v1642
        %v2567 = vpack.c.b16 %v1647, %v1643
        %v2568 = vpack.c.b16 %v1648, %v1644
        %v2569 = vpack.c.b16 %v1649, %v1645
        %v2570 = vpack.c.b16 %v1654, %v1650
        %v2571 = vpack.c.b16 %v1655, %v1651
        %v2572 = vpack.c.b16 %v1656, %v1652
        %v2573 = vpack.c.b16 %v1657, %v1653
        %v2574 = vpack.c.b16 %v1662, %v1658
        %v2575 = vpack.c.b16 %v1663, %v1659
        %v2576 = vpack.c.b16 %v1664, %v1660
        %v2577 = vpack.c.b16 %v1665, %v1661
        %v2578 = vpack.c.b16 %v1670, %v1666
        %v2579 = vpack.c.b16 %v1671, %v1667
        %v2580 = vpack.c.b16 %v1672, %v1668
        %v2581 = vpack.c.b16 %v1673, %v1669
        %v2582 = vpack.c.b16 %v1678, %v1674
        %v2583 = vpack.c.b16 %v1679, %v1675
        %v2584 = vpack.c.b16 %v1680, %v1676
        %v2585 = vpack.c.b16 %v1681, %v1677
        %v2586 = vpack.c.b16 %v1686, %v1682
        %v2587 = vpack.c.b16 %v1687, %v1683
        %v2588 = vpack.c.b16 %v1688, %v1684
        %v2589 = vpack.c.b16 %v1689, %v1685
        %v2590 = vpack.c.b16 %v1694, %v1690
        %v2591 = vpack.c.b16 %v1695, %v1691
        %v2592 = vpack.c.b16 %v1696, %v1692
        %v2593 = vpack.c.b16 %v1697, %v1693
        %v2594 = vpack.c.b16 %v1702, %v1698
        %v2595 = vpack.c.b16 %v1703, %v1699
        %v2596 = vpack.c.b16 %v1704, %v1700
        %v2597 = vpack.c.b16 %v1705, %v1701
        %v2598 = vpack.c.b16 %v1710, %v1706
        %v2599 = vpack.c.b16 %v1711, %v1707
        %v2600 = vpack.c.b16 %v1712, %v1708
        %v2601 = vpack.c.b16 %v1713, %v1709
        %v2602 = vpack.c.b16 %v1718, %v1714
        %v2603 = vpack.c.b16 %v1719, %v1715
        %v2604 = vpack.c.b16 %v1720, %v1716
        %v2605 = vpack.c.b16 %v1721, %v1717
        %v2606 = vpack.c.b16 %v1726, %v1722
        %v2607 = vpack.c.b16 %v1727, %v1723
        %v2608 = vpack.c.b16 %v1728, %v1724
        %v2609 = vpack.c.b16 %v1729, %v1725
        %v2610 = vpack.c.b16 %v1734, %v1730
        %v2611 = vpack.c.b16 %v1735, %v1731
        %v2612 = vpack.c.b16 %v1736, %v1732
        %v2613 = vpack.c.b16 %v1737, %v1733
        %v2614 = vpack.c.b16 %v1742, %v1738
        %v2615 = vpack.c.b16 %v1743, %v1739
        %v2616 = vpack.c.b16 %v1744, %v1740
        %v2617 = vpack.c.b16 %v1745, %v1741
        %v2618 = vpack.c.b16 %v1750, %v1746
        %v2619 = vpack.c.b16 %v1751, %v1747
        %v2620 = vpack.c.b16 %v1752, %v1748
        %v2621 = vpack.c.b16 %v1753, %v1749
        %v2622 = vpack.c.b16 %v1758, %v1754
        %v2623 = vpack.c.b16 %v1759, %v1755
        %v2624 = vpack.c.b16 %v1760, %v1756
        %v2625 = vpack.c.b16 %v1761, %v1757
        %v2626 = vpack.c.b16 %v1766, %v1762
        %v2627 = vpack.c.b16 %v1767, %v1763
        %v2628 = vpack.c.b16 %v1768, %v1764
        %v2629 = vpack.c.b16 %v1769, %v1765
        %v2630 = vpack.c.b16 %v1774, %v1770
        %v2631 = vpack.c.b16 %v1775, %v1771
        %v2632 = vpack.c.b16 %v1776, %v1772
        %v2633 = vpack.c.b16 %v1777, %v1773
        %v2634 = vpack.c.b16 %v1782, %v1778
        %v2635 = vpack.c.b16 %v1783, %v1779
        %v2636 = vpack.c.b16 %v1784, %v1780
        %v2637 = vpack.c.b16 %v1785, %v1781
        %v2638 = vpack.c.b16 %v1790, %v1786
        %v2639 = vpack.c.b16 %v1791, %v1787
        %v2640 = vpack.c.b16 %v1792, %v1788
        %v2641 = vpack.c.b16 %v1793, %v1789
        %v2642 = vpack.c.b16 %v1798, %v1794
        %v2643 = vpack.c.b16 %v1799, %v1795
        %v2644 = vpack.c.b16 %v1800, %v1796
        %v2645 = vpack.c.b16 %v1801, %v1797
        %v2646 = vpack.c.b16 %v1806, %v1802
        %v2647 = vpack.c.b16 %v1807, %v1803
        %v2648 = vpack.c.b16 %v1808, %v1804
        %v2649 = vpack.c.b16 %v1809, %v1805
        %v2650 = vpack.c.b16 %v1814, %v1810
        %v2651 = vpack.c.b16 %v1815, %v1811
        %v2652 = vpack.c.b16 %v1816, %v1812
        %v2653 = vpack.c.b16 %v1817, %v1813
        %v2654 = vpack.c.b16 %v1822, %v1818
        %v2655 = vpack.c.b16 %v1823, %v1819
        %v2656 = vpack.c.b16 %v1824, %v1820
        %v2657 = vpack.c.b16 %v1825, %v1821
        %v2658 = vpack.c.b16 %v1830, %v1826
        %v2659 = vpack.c.b16 %v1831, %v1827
        %v2660 = vpack.c.b16 %v1832, %v1828
        %v2661 = vpack.c.b16 %v1833, %v1829
        %v2662 = vpack.c.b16 %v1838, %v1834
        %v2663 = vpack.c.b16 %v1839, %v1835
        %v2664 = vpack.c.b16 %v1840, %v1836
        %v2665 = vpack.c.b16 %v1841, %v1837
        %v2666 = vpack.c.b16 %v1846, %v1842
        %v2667 = vpack.c.b16 %v1847, %v1843
        %v2668 = vpack.c.b16 %v1848, %v1844
        %v2669 = vpack.c.b16 %v1849, %v1845
        %v2670 = vpack.c.b16 %v1854, %v1850
        %v2671 = vpack.c.b16 %v1855, %v1851
        %v2672 = vpack.c.b16 %v1856, %v1852
        %v2673 = vpack.c.b16 %v1857, %v1853
        %v2674 = vpack.c.b16 %v1862, %v1858
        %v2675 = vpack.c.b16 %v1863, %v1859
        %v2676 = vpack.c.b16 %v1864, %v1860
        %v2677 = vpack.c.b16 %v1865, %v1861
        %v2678 = vpack.c.b16 %v1870, %v1866
        %v2679 = vpack.c.b16 %v1871, %v1867
        %v2680 = vpack.c.b16 %v1872, %v1868
        %v2681 = vpack.c.b16 %v1873, %v1869
        %v2682 = vpack.c.b16 %v1878, %v1874
        %v2683 = vpack.c.b16 %v1879, %v1875
        %v2684 = vpack.c.b16 %v1880, %v1876
        %v2685 = vpack.c.b16 %v1881, %v1877
        %v2686 = vpack.c.b16 %v1886, %v1882
        %v2687 = vpack.c.b16 %v1887, %v1883
        %v2688 = vpack.c.b16 %v1888, %v1884
        %v2689 = vpack.c.b16 %v1889, %v1885
        %v2690 = vpack.c.b16 %v1894, %v1890
        %v2691 = vpack.c.b16 %v1895, %v1891
        %v2692 = vpack.c.b16 %v1896, %v1892
        %v2693 = vpack.c.b16 %v1897, %v1893
        %v2694 = vpack.c.b16 %v1902, %v1898
        %v2695 = vpack.c.b16 %v1903, %v1899
        %v2696 = vpack.c.b16 %v1904, %v1900
        %v2697 = vpack.c.b16 %v1905, %v1901
        %v2698 = vpack.c.b16 %v1910, %v1906
        %v2699 = vpack.c.b16 %v1911, %v1907
        %v2700 = vpack.c.b16 %v1912, %v1908
        %v2701 = vpack.c.b16 %v1913, %v1909
        %v2702 = vpack.c.b16 %v1918, %v1914
        %v2703 = vpack.c.b16 %v1919, %v1915
        %v2704 = vpack.c.b16 %v1920, %v1916
        %v2705 = vpack.c.b16 %v1921, %v1917
        %v2706 = vpack.c.b16 %v1926, %v1922
        %v2707 = vpack.c.b16 %v1927, %v1923
        %v2708 = vpack.c.b16 %v1928, %v1924
        %v2709 = vpack.c.b16 %v1929, %v1925
        %v2710 = vpack.c.b16 %v1934, %v1930
        %v2711 = vpack.c.b16 %v1935, %v1931
        %v2712 = vpack.c.b16 %v1936, %v1932
        %v2713 = vpack.c.b16 %v1937, %v1933
        %v2714 = vpack.c.b16 %v1942, %v1938
        %v2715 = vpack.c.b16 %v1943, %v1939
        %v2716 = vpack.c.b16 %v1944, %v1940
        %v2717 = vpack.c.b16 %v1945, %v1941
        %v2718 = vpack.c.b16 %v1950, %v1946
        %v2719 = vpack.c.b16 %v1951, %v1947
        %v2720 = vpack.c.b16 %v1952, %v1948
        %v2721 = vpack.c.b16 %v1953, %v1949
        %v2722 = vpack.c.b16 %v1958, %v1954
        %v2723 = vpack.c.b16 %v1959, %v1955
        %v2724 = vpack.c.b16 %v1960, %v1956
        %v2725 = vpack.c.b16 %v1961, %v1957
        %v2726 = vpack.c.b16 %v1966, %v1962
        %v2727 = vpack.c.b16 %v1967, %v1963
        %v2728 = vpack.c.b16 %v1968, %v1964
        %v2729 = vpack.c.b16 %v1969, %v1965
        %v2730 = vpack.c.b16 %v1974, %v1970
        %v2731 = vpack.c.b16 %v1975, %v1971
        %v2732 = vpack.c.b16 %v1976, %v1972
        %v2733 = vpack.c.b16 %v1977, %v1973
        %v2734 = vpack.c.b16 %v1982, %v1978
        %v2735 = vpack.c.b16 %v1983, %v1979
        %v2736 = vpack.c.b16 %v1984, %v1980
        %v2737 = vpack.c.b16 %v1985, %v1981
        %v2738 = vpack.c.b16 %v1990, %v1986
        %v2739 = vpack.c.b16 %v1991, %v1987
        %v2740 = vpack.c.b16 %v1992, %v1988
        %v2741 = vpack.c.b16 %v1993, %v1989
        %v2742 = vpack.c.b16 %v1998, %v1994
        %v2743 = vpack.c.b16 %v1999, %v1995
        %v2744 = vpack.c.b16 %v2000, %v1996
        %v2745 = vpack.c.b16 %v2001, %v1997
        %v2746 = vpack.c.b16 %v2006, %v2002
        %v2747 = vpack.c.b16 %v2007, %v2003
        %v2748 = vpack.c.b16 %v2008, %v2004
        %v2749 = vpack.c.b16 %v2009, %v2005
        %v2750 = vpack.c.b16 %v2014, %v2010
        %v2751 = vpack.c.b16 %v2015, %v2011
        %v2752 = vpack.c.b16 %v2016, %v2012
        %v2753 = vpack.c.b16 %v2017, %v2013
        %v2754 = vpack.c.b16 %v2022, %v2018
        %v2755 = vpack.c.b16 %v2023, %v2019
        %v2756 = vpack.c.b16 %v2024, %v2020
        %v2757 = vpack.c.b16 %v2025, %v2021
        %v2758 = vpack.c.b16 %v2030, %v2026
        %v2759 = vpack.c.b16 %v2031, %v2027
        %v2760 = vpack.c.b16 %v2032, %v2028
        %v2761 = vpack.c.b16 %v2033, %v2029
        %v2762 = vpack.c.b16 %v2038, %v2034
        %v2763 = vpack.c.b16 %v2039, %v2035
        %v2764 = vpack.c.b16 %v2040, %v2036
        %v2765 = vpack.c.b16 %v2041, %v2037
        %v2766 = vpack.c.b16 %v2046, %v2042
        %v2767 = vpack.c.b16 %v2047, %v2043
        %v2768 = vpack.c.b16 %v2048, %v2044
        %v2769 = vpack.c.b16 %v2049, %v2045
        %v2770 = vpack.c.b16 %v2054, %v2050
        %v2771 = vpack.c.b16 %v2055, %v2051
        %v2772 = vpack.c.b16 %v2056, %v2052
        %v2773 = vpack.c.b16 %v2057, %v2053
        %v2774 = vpack.c.b16 %v2062, %v2058
        %v2775 = vpack.c.b16 %v2063, %v2059
        %v2776 = vpack.c.b16 %v2064, %v2060
        %v2777 = vpack.c.b16 %v2065, %v2061
        %v2778 = vpack.c.b16 %v2070, %v2066
        %v2779 = vpack.c.b16 %v2071, %v2067
        %v2780 = vpack.c.b16 %v2072, %v2068
        %v2781 = vpack.c.b16 %v2073, %v2069
        %v2782 = vpack.c.b16 %v2078, %v2074
        %v2783 = vpack.c.b16 %v2079, %v2075
        %v2784 = vpack.c.b16 %v2080, %v2076
        %v2785 = vpack.c.b16 %v2081, %v2077
        %v2786 = vpack.c.b16 %v2086, %v2082
        %v2787 = vpack.c.b16 %v2087, %v2083
        %v2788 = vpack.c.b16 %v2088, %v2084
        %v2789 = vpack.c.b16 %v2089, %v2085
        %v2790 = vpack.c.b16 %v2094, %v2090
        %v2791 = vpack.c.b16 %v2095, %v2091
        %v2792 = vpack.c.b16 %v2096, %v2092
        %v2793 = vpack.c.b16 %v2097, %v2093
        %v2794 = vpack.c.b16 %v2102, %v2098
        %v2795 = vpack.c.b16 %v2103, %v2099
        %v2796 = vpack.c.b16 %v2104, %v2100
        %v2797 = vpack.c.b16 %v2105, %v2101
        %v2798 = vpack.c.b16 %v2110, %v2106
        %v2799 = vpack.c.b16 %v2111, %v2107
        %v2800 = vpack.c.b16 %v2112, %v2108
        %v2801 = vpack.c.b16 %v2113, %v2109
        %v2802 = vpack.c.b16 %v2118, %v2114
        %v2803 = vpack.c.b16 %v2119, %v2115
        %v2804 = vpack.c.b16 %v2120, %v2116
        %v2805 = vpack.c.b16 %v2121, %v2117
        %v2806 = vpack.c.b16 %v2126, %v2122
        %v2807 = vpack.c.b16 %v2127, %v2123
        %v2808 = vpack.c.b16 %v2128, %v2124
        %v2809 = vpack.c.b16 %v2129, %v2125
        %v2810 = vpack.c.b16 %v2134, %v2130
        %v2811 = vpack.c.b16 %v2135, %v2131
        %v2812 = vpack.c.b16 %v2136, %v2132
        %v2813 = vpack.c.b16 %v2137, %v2133
        %v2814 = vpack.c.b16 %v2142, %v2138
        %v2815 = vpack.c.b16 %v2143, %v2139
        %v2816 = vpack.c.b16 %v2144, %v2140
        %v2817 = vpack.c.b16 %v2145, %v2141
        %v2818 = vpack.c.b16 %v2150, %v2146
        %v2819 = vpack.c.b16 %v2151, %v2147
        %v2820 = vpack.c.b16 %v2152, %v2148
        %v2821 = vpack.c.b16 %v2153, %v2149
        %v2822 = vpack.c.b16 %v2158, %v2154
        %v2823 = vpack.c.b16 %v2159, %v2155
        %v2824 = vpack.c.b16 %v2160, %v2156
        %v2825 = vpack.c.b16 %v2161, %v2157
        %v2826 = vpack.c.b16 %v2166, %v2162
        %v2827 = vpack.c.b16 %v2167, %v2163
        %v2828 = vpack.c.b16 %v2168, %v2164
        %v2829 = vpack.c.b16 %v2169, %v2165
        %v2830 = vpack.c.b16 %v2174, %v2170
        %v2831 = vpack.c.b16 %v2175, %v2171
        %v2832 = vpack.c.b16 %v2176, %v2172
        %v2833 = vpack.c.b16 %v2177, %v2173
        %v2834 = vpack.c.b16 %v2182, %v2178
        %v2835 = vpack.c.b16 %v2183, %v2179
        %v2836 = vpack.c.b16 %v2184, %v2180
        %v2837 = vpack.c.b16 %v2185, %v2181
        %v2838 = vpack.c.b16 %v2190, %v2186
        %v2839 = vpack.c.b16 %v2191, %v2187
        %v2840 = vpack.c.b16 %v2192, %v2188
        %v2841 = vpack.c.b16 %v2193, %v2189
        %v2842 = vpack.c.b16 %v2198, %v2194
        %v2843 = vpack.c.b16 %v2199, %v2195
        %v2844 = vpack.c.b16 %v2200, %v2196
        %v2845 = vpack.c.b16 %v2201, %v2197
        %v2846 = vpack.c.b16 %v2206, %v2202
        %v2847 = vpack.c.b16 %v2207, %v2203
        %v2848 = vpack.c.b16 %v2208, %v2204
        %v2849 = vpack.c.b16 %v2209, %v2205
        %v2850 = vpack.c.b16 %v2214, %v2210
        %v2851 = vpack.c.b16 %v2215, %v2211
        %v2852 = vpack.c.b16 %v2216, %v2212
        %v2853 = vpack.c.b16 %v2217, %v2213
        %v2854 = vpack.c.b16 %v2222, %v2218
        %v2855 = vpack.c.b16 %v2223, %v2219
        %v2856 = vpack.c.b16 %v2224, %v2220
        %v2857 = vpack.c.b16 %v2225, %v2221
        %v2858 = vpack.c.b16 %v2230, %v2226
        %v2859 = vpack.c.b16 %v2231, %v2227
        %v2860 = vpack.c.b16 %v2232, %v2228
        %v2861 = vpack.c.b16 %v2233, %v2229
        %v2862 = vpack.c.b16 %v2238, %v2234
        %v2863 = vpack.c.b16 %v2239, %v2235
        %v2864 = vpack.c.b16 %v2240, %v2236
        %v2865 = vpack.c.b16 %v2241, %v2237
        %v2866 = vpack.c.b16 %v2246, %v2242
        %v2867 = vpack.c.b16 %v2247, %v2243
        %v2868 = vpack.c.b16 %v2248, %v2244
        %v2869 = vpack.c.b16 %v2249, %v2245
        %v2870 = vpack.c.b16 %v2254, %v2250
        %v2871 = vpack.c.b16 %v2255, %v2251
        %v2872 = vpack.c.b16 %v2256, %v2252
        %v2873 = vpack.c.b16 %v2257, %v2253
        %v2874 = vpack.c.b16 %v2262, %v2258
        %v2875 = vpack.c.b16 %v2263, %v2259
        %v2876 = vpack.c.b16 %v2264, %v2260
        %v2877 = vpack.c.b16 %v2265, %v2261
        %v2878 = vpack.c.b16 %v2270, %v2266
        %v2879 = vpack.c.b16 %v2271, %v2267
        %v2880 = vpack.c.b16 %v2272, %v2268
        %v2881 = vpack.c.b16 %v2273, %v2269
        %v2882 = vpack.c.b16 %v2278, %v2274
        %v2883 = vpack.c.b16 %v2279, %v2275
        %v2884 = vpack.c.b16 %v2280, %v2276
        %v2885 = vpack.c.b16 %v2281, %v2277
        %v2886 = vpack.c.b16 %v2286, %v2282
        %v2887 = vpack.c.b16 %v2287, %v2283
        %v2888 = vpack.c.b16 %v2288, %v2284
        %v2889 = vpack.c.b16 %v2289, %v2285
        %v2890 = vpack.c.b16 %v2294, %v2290
        %v2891 = vpack.c.b16 %v2295, %v2291
        %v2892 = vpack.c.b16 %v2296, %v2292
        %v2893 = vpack.c.b16 %v2297, %v2293
        %v2894 = vpack.c.b16 %v2302, %v2298
        %v2895 = vpack.c.b16 %v2303, %v2299
        %v2896 = vpack.c.b16 %v2304, %v2300
        %v2897 = vpack.c.b16 %v2305, %v2301
        %v2898 = vpack.c.b16 %v2310, %v2306
        %v2899 = vpack.c.b16 %v2311, %v2307
        %v2900 = vpack.c.b16 %v2312, %v2308
        %v2901 = vpack.c.b16 %v2313, %v2309
        %v2902 = vpack.c.b16 %v2318, %v2314
        %v2903 = vpack.c.b16 %v2319, %v2315
        %v2904 = vpack.c.b16 %v2320, %v2316
        %v2905 = vpack.c.b16 %v2321, %v2317
        %v2906 = vpack.c.b16 %v2326, %v2322
        %v2907 = vpack.c.b16 %v2327, %v2323
        %v2908 = vpack.c.b16 %v2328, %v2324
        %v2909 = vpack.c.b16 %v2329, %v2325
        %v2910 = vpack.c.b16 %v2334, %v2330
        %v2911 = vpack.c.b16 %v2335, %v2331
        %v2912 = vpack.c.b16 %v2336, %v2332
        %v2913 = vpack.c.b16 %v2337, %v2333
        %v2914 = vpack.c.b16 %v2342, %v2338
        %v2915 = vpack.c.b16 %v2343, %v2339
        %v2916 = vpack.c.b16 %v2344, %v2340
        %v2917 = vpack.c.b16 %v2345, %v2341
        %v2918 = vpack.c.b16 %v2350, %v2346
        %v2919 = vpack.c.b16 %v2351, %v2347
        %v2920 = vpack.c.b16 %v2352, %v2348
        %v2921 = vpack.c.b16 %v2353, %v2349
        %v2922 = vpack.c.b16 %v2358, %v2354
        %v2923 = vpack.c.b16 %v2359, %v2355
        %v2924 = vpack.c.b16 %v2360, %v2356
        %v2925 = vpack.c.b16 %v2361, %v2357
        %v2926 = vpack.c.b16 %v2366, %v2362
        %v2927 = vpack.c.b16 %v2367, %v2363
        %v2928 = vpack.c.b16 %v2368, %v2364
        %v2929 = vpack.c.b16 %v2369, %v2365
        %v2930 = vpack.c.b16 %v2374, %v2370
        %v2931 = vpack.c.b16 %v2375, %v2371
        %v2932 = vpack.c.b16 %v2376, %v2372
        %v2933 = vpack.c.b16 %v2377, %v2373
        %v2934 = vpack.c.b16 %v2382, %v2378
        %v2935 = vpack.c.b16 %v2383, %v2379
        %v2936 = vpack.c.b16 %v2384, %v2380
        %v2937 = vpack.c.b16 %v2385, %v2381
        %v2938 = vpack.c.b16 %v2390, %v2386
        %v2939 = vpack.c.b16 %v2391, %v2387
        %v2940 = vpack.c.b16 %v2392, %v2388
        %v2941 = vpack.c.b16 %v2393, %v2389
        %v2942 = vpack.c.b16 %v2398, %v2394
        %v2943 = vpack.c.b16 %v2399, %v2395
        %v2944 = vpack.c.b16 %v2400, %v2396
        %v2945 = vpack.c.b16 %v2401, %v2397
        %v2946 = vpack.c.b16 %v2406, %v2402
        %v2947 = vpack.c.b16 %v2407, %v2403
        %v2948 = vpack.c.b16 %v2408, %v2404
        %v2949 = vpack.c.b16 %v2409, %v2405
        %v2950 = vpack.c.b16 %v2414, %v2410
        %v2951 = vpack.c.b16 %v2415, %v2411
        %v2952 = vpack.c.b16 %v2416, %v2412
        %v2953 = vpack.c.b16 %v2417, %v2413
        %v2954 = vpack.c.b16 %v2422, %v2418
        %v2955 = vpack.c.b16 %v2423, %v2419
        %v2956 = vpack.c.b16 %v2424, %v2420
        %v2957 = vpack.c.b16 %v2425, %v2421
        %v2958 = vpack.c.b16 %v2430, %v2426
        %v2959 = vpack.c.b16 %v2431, %v2427
        %v2960 = vpack.c.b16 %v2432, %v2428
        %v2961 = vpack.c.b16 %v2433, %v2429
        %v2962 = vpack.c.b16 %v2438, %v2434
        %v2963 = vpack.c.b16 %v2439, %v2435
        %v2964 = vpack.c.b16 %v2440, %v2436
        %v2965 = vpack.c.b16 %v2441, %v2437
        %v2966 = vpack.c.b16 %v2446, %v2442
        %v2967 = vpack.c.b16 %v2447, %v2443
        %v2968 = vpack.c.b16 %v2448, %v2444
        %v2969 = vpack.c.b16 %v2449, %v2445
        %v2970 = vpack.c.b16 %v2454, %v2450
        %v2971 = vpack.c.b16 %v2455, %v2451
        %v2972 = vpack.c.b16 %v2456, %v2452
        %v2973 = vpack.c.b16 %v2457, %v2453
        %v2974 = vpack.c.b16 %v2462, %v2458
        %v2975 = vpack.c.b16 %v2463, %v2459
        %v2976 = vpack.c.b16 %v2464, %v2460
        %v2977 = vpack.c.b16 %v2465, %v2461
        %3490 = vmatprep.subr.bf16.mxu0 %v2467
        %3491 = vmatpush1.bf16.msra.mxu0 %v2466
        %3492 = vmatprep.subr.bf16.mxu0 %v2471
        %3493 = vmatpush1.bf16.msra.mxu0 %v2470
        %3494 = vmatprep.subr.bf16.mxu0 %v2475
        %3495 = vmatpush1.bf16.msra.mxu0 %v2474
        %3496 = vmatprep.subr.bf16.mxu0 %v2479
        %3497 = vmatpush1.bf16.msra.mxu0 %v2478
        %3498 = vmatprep.subr.bf16.mxu0 %v2483
        %3499 = vmatpush1.bf16.msra.mxu0 %v2482
        %3500 = vmatprep.subr.bf16.mxu0 %v2487
        %3501 = vmatpush1.bf16.msra.mxu0 %v2486
        %3502 = vmatprep.subr.bf16.mxu0 %v2491
        %3503 = vmatpush1.bf16.msra.mxu0 %v2490
        %3504 = vmatprep.subr.bf16.mxu0 %v2495
        %3505 = vmatpush1.bf16.msra.mxu0 %v2494
        %3506 = vmatprep.subr.bf16.mxu0 %v2499
        %3507 = vmatpush1.bf16.msra.mxu0 %v2498
        %3508 = vmatprep.subr.bf16.mxu0 %v2503
        %3509 = vmatpush1.bf16.msra.mxu0 %v2502
        %3510 = vmatprep.subr.bf16.mxu0 %v2507
        %3511 = vmatpush1.bf16.msra.mxu0 %v2506
        %3512 = vmatprep.subr.bf16.mxu0 %v2511
        %3513 = vmatpush1.bf16.msra.mxu0 %v2510
        %3514 = vmatprep.subr.bf16.mxu0 %v2515
        %3515 = vmatpush1.bf16.msra.mxu0 %v2514
        %3516 = vmatprep.subr.bf16.mxu0 %v2519
        %3517 = vmatpush1.bf16.msra.mxu0 %v2518
        %3518 = vmatprep.subr.bf16.mxu0 %v2523
        %3519 = vmatpush1.bf16.msra.mxu0 %v2522
        %3520 = vmatprep.subr.bf16.mxu0 %v2527
        %3521 = vmatpush1.bf16.msra.mxu0 %v2526
        %3522 = vmatprep.mubr.bf16.mxu0 %v381
        %3523 = vmatmul.mubr.bf16.gmra.mrb[0].mxu0 %v380
        %v3524 = vpop.f32.mrb[0].mxu0
        %v3525 = vadd.f32 %v913, %v3524
        %v3526 = vpop.f32.mrb[0].mxu0
        %v3527 = vadd.f32 %v917, %v3526
        %v3528 = vpop.f32.mrb[0].mxu0
        %v3529 = vpop.f32.mrb[0].mxu0
        %3530 = vdwg.mxu0
        %3531 = vmatprep.subr.bf16.mxu0 %v2531
        %3532 = vmatpush1.bf16.msra.mxu0 %v2530
        %3533 = vmatprep.subr.bf16.mxu0 %v2535
        %3534 = vmatpush1.bf16.msra.mxu0 %v2534
        %3535 = vmatprep.subr.bf16.mxu0 %v2539
        %3536 = vmatpush1.bf16.msra.mxu0 %v2538
        %3537 = vmatprep.subr.bf16.mxu0 %v2543
        %3538 = vmatpush1.bf16.msra.mxu0 %v2542
        %3539 = vmatprep.subr.bf16.mxu0 %v2547
        %3540 = vmatpush1.bf16.msra.mxu0 %v2546
        %3541 = vmatprep.subr.bf16.mxu0 %v2551
        %3542 = vmatpush1.bf16.msra.mxu0 %v2550
        %3543 = vmatprep.subr.bf16.mxu0 %v2555
        %3544 = vmatpush1.bf16.msra.mxu0 %v2554
        %3545 = vmatprep.subr.bf16.mxu0 %v2559
        %3546 = vmatpush1.bf16.msra.mxu0 %v2558
        %3547 = vmatprep.subr.bf16.mxu0 %v2563
        %3548 = vmatpush1.bf16.msra.mxu0 %v2562
        %3549 = vmatprep.subr.bf16.mxu0 %v2567
        %3550 = vmatpush1.bf16.msra.mxu0 %v2566
        %3551 = vmatprep.subr.bf16.mxu0 %v2571
        %3552 = vmatpush1.bf16.msra.mxu0 %v2570
        %3553 = vmatprep.subr.bf16.mxu0 %v2575
        %3554 = vmatpush1.bf16.msra.mxu0 %v2574
        %3555 = vmatprep.subr.bf16.mxu0 %v2579
        %3556 = vmatpush1.bf16.msra.mxu0 %v2578
        %3557 = vmatprep.subr.bf16.mxu0 %v2583
        %3558 = vmatpush1.bf16.msra.mxu0 %v2582
        %3559 = vmatprep.subr.bf16.mxu0 %v2587
        %3560 = vmatpush1.bf16.msra.mxu0 %v2586
        %3561 = vmatprep.subr.bf16.mxu0 %v2591
        %3562 = vmatpush1.bf16.msra.mxu0 %v2590
        %3563 = vmatprep.mubr.bf16.mxu0 %v383
        %3564 = vmatmul.mubr.bf16.gmra.mrb[0].mxu0 %v382
        %v3565 = vpop.f32.mrb[0].mxu0
        %v3566 = vadd.f32 %v3525, %v3565
        %v3567 = vpop.f32.mrb[0].mxu0
        %v3568 = vadd.f32 %v3527, %v3567
        %v3569 = vpop.f32.mrb[0].mxu0
        %v3570 = vpop.f32.mrb[0].mxu0
        %3571 = vdwg.mxu0
        %3572 = vmatprep.subr.bf16.mxu0 %v2595
        %3573 = vmatpush1.bf16.msra.mxu0 %v2594
        %3574 = vmatprep.subr.bf16.mxu0 %v2599
        %3575 = vmatpush1.bf16.msra.mxu0 %v2598
        %3576 = vmatprep.subr.bf16.mxu0 %v2603
        %3577 = vmatpush1.bf16.msra.mxu0 %v2602
        %3578 = vmatprep.subr.bf16.mxu0 %v2607
        %3579 = vmatpush1.bf16.msra.mxu0 %v2606
        %3580 = vmatprep.subr.bf16.mxu0 %v2611
        %3581 = vmatpush1.bf16.msra.mxu0 %v2610
        %3582 = vmatprep.subr.bf16.mxu0 %v2615
        %3583 = vmatpush1.bf16.msra.mxu0 %v2614
        %3584 = vmatprep.subr.bf16.mxu0 %v2619
        %3585 = vmatpush1.bf16.msra.mxu0 %v2618
        %3586 = vmatprep.subr.bf16.mxu0 %v2623
        %3587 = vmatpush1.bf16.msra.mxu0 %v2622
        %3588 = vmatprep.subr.bf16.mxu0 %v2627
        %3589 = vmatpush1.bf16.msra.mxu0 %v2626
        %3590 = vmatprep.subr.bf16.mxu0 %v2631
        %3591 = vmatpush1.bf16.msra.mxu0 %v2630
        %3592 = vmatprep.subr.bf16.mxu0 %v2635
        %3593 = vmatpush1.bf16.msra.mxu0 %v2634
        %3594 = vmatprep.subr.bf16.mxu0 %v2639
        %3595 = vmatpush1.bf16.msra.mxu0 %v2638
        %3596 = vmatprep.subr.bf16.mxu0 %v2643
        %3597 = vmatpush1.bf16.msra.mxu0 %v2642
        %3598 = vmatprep.subr.bf16.mxu0 %v2647
        %3599 = vmatpush1.bf16.msra.mxu0 %v2646
        %3600 = vmatprep.subr.bf16.mxu0 %v2651
        %3601 = vmatpush1.bf16.msra.mxu0 %v2650
        %3602 = vmatprep.subr.bf16.mxu0 %v2655
        %3603 = vmatpush1.bf16.msra.mxu0 %v2654
        %3604 = vmatprep.mubr.bf16.mxu0 %v385
        %3605 = vmatmul.mubr.bf16.gmra.mrb[0].mxu0 %v384
        %v3606 = vpop.f32.mrb[0].mxu0
        %v3607 = vadd.f32 %v3566, %v3606
        %v3608 = vpop.f32.mrb[0].mxu0
        %v3609 = vadd.f32 %v3568, %v3608
        %v3610 = vpop.f32.mrb[0].mxu0
        %v3611 = vpop.f32.mrb[0].mxu0
        %3612 = vdwg.mxu0
        %3613 = vmatprep.subr.bf16.mxu0 %v2659
        %3614 = vmatpush1.bf16.msra.mxu0 %v2658
        %3615 = vmatprep.subr.bf16.mxu0 %v2663
        %3616 = vmatpush1.bf16.msra.mxu0 %v2662
        %3617 = vmatprep.subr.bf16.mxu0 %v2667
        %3618 = vmatpush1.bf16.msra.mxu0 %v2666
        %3619 = vmatprep.subr.bf16.mxu0 %v2671
        %3620 = vmatpush1.bf16.msra.mxu0 %v2670
        %3621 = vmatprep.subr.bf16.mxu0 %v2675
        %3622 = vmatpush1.bf16.msra.mxu0 %v2674
        %3623 = vmatprep.subr.bf16.mxu0 %v2679
        %3624 = vmatpush1.bf16.msra.mxu0 %v2678
        %3625 = vmatprep.subr.bf16.mxu0 %v2683
        %3626 = vmatpush1.bf16.msra.mxu0 %v2682
        %3627 = vmatprep.subr.bf16.mxu0 %v2687
        %3628 = vmatpush1.bf16.msra.mxu0 %v2686
        %3629 = vmatprep.subr.bf16.mxu0 %v2691
        %3630 = vmatpush1.bf16.msra.mxu0 %v2690
        %3631 = vmatprep.subr.bf16.mxu0 %v2695
        %3632 = vmatpush1.bf16.msra.mxu0 %v2694
        %3633 = vmatprep.subr.bf16.mxu0 %v2699
        %3634 = vmatpush1.bf16.msra.mxu0 %v2698
        %3635 = vmatprep.subr.bf16.mxu0 %v2703
        %3636 = vmatpush1.bf16.msra.mxu0 %v2702
        %3637 = vmatprep.subr.bf16.mxu0 %v2707
        %3638 = vmatpush1.bf16.msra.mxu0 %v2706
        %3639 = vmatprep.subr.bf16.mxu0 %v2711
        %3640 = vmatpush1.bf16.msra.mxu0 %v2710
        %3641 = vmatprep.subr.bf16.mxu0 %v2715
        %3642 = vmatpush1.bf16.msra.mxu0 %v2714
        %3643 = vmatprep.subr.bf16.mxu0 %v2719
        %3644 = vmatpush1.bf16.msra.mxu0 %v2718
        %3645 = vmatprep.mubr.bf16.mxu0 %v387
        %3646 = vmatmul.mubr.bf16.gmra.mrb[0].mxu0 %v386
        %v3647 = vpop.f32.mrb[0].mxu0
        %v3648 = vadd.f32 %v3607, %v3647
        %v3649 = vpop.f32.mrb[0].mxu0
        %v3650 = vadd.f32 %v3609, %v3649
        %v3651 = vpop.f32.mrb[0].mxu0
        %v3652 = vpop.f32.mrb[0].mxu0
        %3653 = vdwg.mxu0
        %3654 = vmatprep.subr.bf16.mxu0 %v2723
        %3655 = vmatpush1.bf16.msra.mxu0 %v2722
        %3656 = vmatprep.subr.bf16.mxu0 %v2727
        %3657 = vmatpush1.bf16.msra.mxu0 %v2726
        %3658 = vmatprep.subr.bf16.mxu0 %v2731
        %3659 = vmatpush1.bf16.msra.mxu0 %v2730
        %3660 = vmatprep.subr.bf16.mxu0 %v2735
        %3661 = vmatpush1.bf16.msra.mxu0 %v2734
        %3662 = vmatprep.subr.bf16.mxu0 %v2739
        %3663 = vmatpush1.bf16.msra.mxu0 %v2738
        %3664 = vmatprep.subr.bf16.mxu0 %v2743
        %3665 = vmatpush1.bf16.msra.mxu0 %v2742
        %3666 = vmatprep.subr.bf16.mxu0 %v2747
        %3667 = vmatpush1.bf16.msra.mxu0 %v2746
        %3668 = vmatprep.subr.bf16.mxu0 %v2751
        %3669 = vmatpush1.bf16.msra.mxu0 %v2750
        %3670 = vmatprep.subr.bf16.mxu0 %v2755
        %3671 = vmatpush1.bf16.msra.mxu0 %v2754
        %3672 = vmatprep.subr.bf16.mxu0 %v2759
        %3673 = vmatpush1.bf16.msra.mxu0 %v2758
        %3674 = vmatprep.subr.bf16.mxu0 %v2763
        %3675 = vmatpush1.bf16.msra.mxu0 %v2762
        %3676 = vmatprep.subr.bf16.mxu0 %v2767
        %3677 = vmatpush1.bf16.msra.mxu0 %v2766
        %3678 = vmatprep.subr.bf16.mxu0 %v2771
        %3679 = vmatpush1.bf16.msra.mxu0 %v2770
        %3680 = vmatprep.subr.bf16.mxu0 %v2775
        %3681 = vmatpush1.bf16.msra.mxu0 %v2774
        %3682 = vmatprep.subr.bf16.mxu0 %v2779
        %3683 = vmatpush1.bf16.msra.mxu0 %v2778
        %3684 = vmatprep.subr.bf16.mxu0 %v2783
        %3685 = vmatpush1.bf16.msra.mxu0 %v2782
        %3686 = vmatprep.mubr.bf16.mxu0 %v389
        %3687 = vmatmul.mubr.bf16.gmra.mrb[0].mxu0 %v388
        %v3688 = vpop.f32.mrb[0].mxu0
        %v3689 = vadd.f32 %v3648, %v3688
        %v3690 = vpop.f32.mrb[0].mxu0
        %v3691 = vadd.f32 %v3650, %v3690
        %v3692 = vpop.f32.mrb[0].mxu0
        %v3693 = vpop.f32.mrb[0].mxu0
        %3694 = vdwg.mxu0
        %3695 = vmatprep.subr.bf16.mxu0 %v2787
        %3696 = vmatpush1.bf16.msra.mxu0 %v2786
        %3697 = vmatprep.subr.bf16.mxu0 %v2791
        %3698 = vmatpush1.bf16.msra.mxu0 %v2790
        %3699 = vmatprep.subr.bf16.mxu0 %v2795
        %3700 = vmatpush1.bf16.msra.mxu0 %v2794
        %3701 = vmatprep.subr.bf16.mxu0 %v2799
        %3702 = vmatpush1.bf16.msra.mxu0 %v2798
        %3703 = vmatprep.subr.bf16.mxu0 %v2803
        %3704 = vmatpush1.bf16.msra.mxu0 %v2802
        %3705 = vmatprep.subr.bf16.mxu0 %v2807
        %3706 = vmatpush1.bf16.msra.mxu0 %v2806
        %3707 = vmatprep.subr.bf16.mxu0 %v2811
        %3708 = vmatpush1.bf16.msra.mxu0 %v2810
        %3709 = vmatprep.subr.bf16.mxu0 %v2815
        %3710 = vmatpush1.bf16.msra.mxu0 %v2814
        %3711 = vmatprep.subr.bf16.mxu0 %v2819
        %3712 = vmatpush1.bf16.msra.mxu0 %v2818
        %3713 = vmatprep.subr.bf16.mxu0 %v2823
        %3714 = vmatpush1.bf16.msra.mxu0 %v2822
        %3715 = vmatprep.subr.bf16.mxu0 %v2827
        %3716 = vmatpush1.bf16.msra.mxu0 %v2826
        %3717 = vmatprep.subr.bf16.mxu0 %v2831
        %3718 = vmatpush1.bf16.msra.mxu0 %v2830
        %3719 = vmatprep.subr.bf16.mxu0 %v2835
        %3720 = vmatpush1.bf16.msra.mxu0 %v2834
        %3721 = vmatprep.subr.bf16.mxu0 %v2839
        %3722 = vmatpush1.bf16.msra.mxu0 %v2838
        %3723 = vmatprep.subr.bf16.mxu0 %v2843
        %3724 = vmatpush1.bf16.msra.mxu0 %v2842
        %3725 = vmatprep.subr.bf16.mxu0 %v2847
        %3726 = vmatpush1.bf16.msra.mxu0 %v2846
        %3727 = vmatprep.mubr.bf16.mxu0 %v391
        %3728 = vmatmul.mubr.bf16.gmra.mrb[0].mxu0 %v390
        %v3729 = vpop.f32.mrb[0].mxu0
        %v3730 = vadd.f32 %v3689, %v3729
        %v3731 = vpop.f32.mrb[0].mxu0
        %v3732 = vadd.f32 %v3691, %v3731
        %v3733 = vpop.f32.mrb[0].mxu0
        %v3734 = vpop.f32.mrb[0].mxu0
        %3735 = vdwg.mxu0
        %3736 = vmatprep.subr.bf16.mxu0 %v2851
        %3737 = vmatpush1.bf16.msra.mxu0 %v2850
        %3738 = vmatprep.subr.bf16.mxu0 %v2855
        %3739 = vmatpush1.bf16.msra.mxu0 %v2854
        %3740 = vmatprep.subr.bf16.mxu0 %v2859
        %3741 = vmatpush1.bf16.msra.mxu0 %v2858
        %3742 = vmatprep.subr.bf16.mxu0 %v2863
        %3743 = vmatpush1.bf16.msra.mxu0 %v2862
        %3744 = vmatprep.subr.bf16.mxu0 %v2867
        %3745 = vmatpush1.bf16.msra.mxu0 %v2866
        %3746 = vmatprep.subr.bf16.mxu0 %v2871
        %3747 = vmatpush1.bf16.msra.mxu0 %v2870
        %3748 = vmatprep.subr.bf16.mxu0 %v2875
        %3749 = vmatpush1.bf16.msra.mxu0 %v2874
        %3750 = vmatprep.subr.bf16.mxu0 %v2879
        %3751 = vmatpush1.bf16.msra.mxu0 %v2878
        %3752 = vmatprep.subr.bf16.mxu0 %v2883
        %3753 = vmatpush1.bf16.msra.mxu0 %v2882
        %3754 = vmatprep.subr.bf16.mxu0 %v2887
        %3755 = vmatpush1.bf16.msra.mxu0 %v2886
        %3756 = vmatprep.subr.bf16.mxu0 %v2891
        %3757 = vmatpush1.bf16.msra.mxu0 %v2890
        %3758 = vmatprep.subr.bf16.mxu0 %v2895
        %3759 = vmatpush1.bf16.msra.mxu0 %v2894
        %3760 = vmatprep.subr.bf16.mxu0 %v2899
        %3761 = vmatpush1.bf16.msra.mxu0 %v2898
        %3762 = vmatprep.subr.bf16.mxu0 %v2903
        %3763 = vmatpush1.bf16.msra.mxu0 %v2902
        %3764 = vmatprep.subr.bf16.mxu0 %v2907
        %3765 = vmatpush1.bf16.msra.mxu0 %v2906
        %3766 = vmatprep.subr.bf16.mxu0 %v2911
        %3767 = vmatpush1.bf16.msra.mxu0 %v2910
        %3768 = vmatprep.mubr.bf16.mxu0 %v393
        %3769 = vmatmul.mubr.bf16.gmra.mrb[0].mxu0 %v392
        %v3770 = vpop.f32.mrb[0].mxu0
        %v3771 = vadd.f32 %v3730, %v3770
        %v3772 = vpop.f32.mrb[0].mxu0
        %v3773 = vadd.f32 %v3732, %v3772
        %v3774 = vpop.f32.mrb[0].mxu0
        %v3775 = vpop.f32.mrb[0].mxu0
        %3776 = vdwg.mxu0
        %3777 = vmatprep.subr.bf16.mxu0 %v2915
        %3778 = vmatpush1.bf16.msra.mxu0 %v2914
        %3779 = vmatprep.subr.bf16.mxu0 %v2919
        %3780 = vmatpush1.bf16.msra.mxu0 %v2918
        %3781 = vmatprep.subr.bf16.mxu0 %v2923
        %3782 = vmatpush1.bf16.msra.mxu0 %v2922
        %3783 = vmatprep.subr.bf16.mxu0 %v2927
        %3784 = vmatpush1.bf16.msra.mxu0 %v2926
        %3785 = vmatprep.subr.bf16.mxu0 %v2931
        %3786 = vmatpush1.bf16.msra.mxu0 %v2930
        %3787 = vmatprep.subr.bf16.mxu0 %v2935
        %3788 = vmatpush1.bf16.msra.mxu0 %v2934
        %3789 = vmatprep.subr.bf16.mxu0 %v2939
        %3790 = vmatpush1.bf16.msra.mxu0 %v2938
        %3791 = vmatprep.subr.bf16.mxu0 %v2943
        %3792 = vmatpush1.bf16.msra.mxu0 %v2942
        %3793 = vmatprep.subr.bf16.mxu0 %v2947
        %3794 = vmatpush1.bf16.msra.mxu0 %v2946
        %3795 = vmatprep.subr.bf16.mxu0 %v2951
        %3796 = vmatpush1.bf16.msra.mxu0 %v2950
        %3797 = vmatprep.subr.bf16.mxu0 %v2955
        %3798 = vmatpush1.bf16.msra.mxu0 %v2954
        %3799 = vmatprep.subr.bf16.mxu0 %v2959
        %3800 = vmatpush1.bf16.msra.mxu0 %v2958
        %3801 = vmatprep.subr.bf16.mxu0 %v2963
        %3802 = vmatpush1.bf16.msra.mxu0 %v2962
        %3803 = vmatprep.subr.bf16.mxu0 %v2967
        %3804 = vmatpush1.bf16.msra.mxu0 %v2966
        %3805 = vmatprep.subr.bf16.mxu0 %v2971
        %3806 = vmatpush1.bf16.msra.mxu0 %v2970
        %3807 = vmatprep.subr.bf16.mxu0 %v2975
        %3808 = vmatpush1.bf16.msra.mxu0 %v2974
        %3809 = vmatprep.mubr.bf16.mxu0 %v395
        %3810 = vmatmul.mubr.bf16.gmra.mrb[0].mxu0 %v394
        %v3811 = vpop.f32.mrb[0].mxu0
        %v3812 = vadd.f32 %v3771, %v3811
        %v3813 = vpop.f32.mrb[0].mxu0
        %v3814 = vadd.f32 %v3773, %v3813
        %v3815 = vpop.f32.mrb[0].mxu0
        %v3816 = vpop.f32.mrb[0].mxu0
        %3817 = vdwg.mxu0
        %3818 = vmatprep.subr.bf16.mxu0 %v2469
        %3819 = vmatpush1.bf16.msra.mxu0 %v2468
        %3820 = vmatprep.subr.bf16.mxu0 %v2473
        %3821 = vmatpush1.bf16.msra.mxu0 %v2472
        %3822 = vmatprep.subr.bf16.mxu0 %v2477
        %3823 = vmatpush1.bf16.msra.mxu0 %v2476
        %3824 = vmatprep.subr.bf16.mxu0 %v2481
        %3825 = vmatpush1.bf16.msra.mxu0 %v2480
        %3826 = vmatprep.subr.bf16.mxu0 %v2485
        %3827 = vmatpush1.bf16.msra.mxu0 %v2484
        %3828 = vmatprep.subr.bf16.mxu0 %v2489
        %3829 = vmatpush1.bf16.msra.mxu0 %v2488
        %3830 = vmatprep.subr.bf16.mxu0 %v2493
        %3831 = vmatpush1.bf16.msra.mxu0 %v2492
        %3832 = vmatprep.subr.bf16.mxu0 %v2497
        %3833 = vmatpush1.bf16.msra.mxu0 %v2496
        %3834 = vmatprep.subr.bf16.mxu0 %v2501
        %3835 = vmatpush1.bf16.msra.mxu0 %v2500
        %3836 = vmatprep.subr.bf16.mxu0 %v2505
        %3837 = vmatpush1.bf16.msra.mxu0 %v2504
        %3838 = vmatprep.subr.bf16.mxu0 %v2509
        %3839 = vmatpush1.bf16.msra.mxu0 %v2508
        %3840 = vmatprep.subr.bf16.mxu0 %v2513
        %3841 = vmatpush1.bf16.msra.mxu0 %v2512
        %3842 = vmatprep.subr.bf16.mxu0 %v2517
        %3843 = vmatpush1.bf16.msra.mxu0 %v2516
        %3844 = vmatprep.subr.bf16.mxu0 %v2521
        %3845 = vmatpush1.bf16.msra.mxu0 %v2520
        %3846 = vmatprep.subr.bf16.mxu0 %v2525
        %3847 = vmatpush1.bf16.msra.mxu0 %v2524
        %3848 = vmatprep.subr.bf16.mxu0 %v2529
        %3849 = vmatpush1.bf16.msra.mxu0 %v2528
        %3850 = vmatprep.mubr.bf16.mxu0 %v381
        %3851 = vmatmul.mubr.bf16.gmra.mrb[0].mxu0 %v380
        %v3852 = vpop.f32.mrb[0].mxu0
        %v3853 = vadd.f32 %v921, %v3852
        %v3854 = vpop.f32.mrb[0].mxu0
        %v3855 = vadd.f32 %v925, %v3854
        %v3856 = vpop.f32.mrb[0].mxu0
        %v3857 = vpop.f32.mrb[0].mxu0
        %3858 = vdwg.mxu0
        %3859 = vmatprep.subr.bf16.mxu0 %v2533
        %3860 = vmatpush1.bf16.msra.mxu0 %v2532
        %3861 = vmatprep.subr.bf16.mxu0 %v2537
        %3862 = vmatpush1.bf16.msra.mxu0 %v2536
        %3863 = vmatprep.subr.bf16.mxu0 %v2541
        %3864 = vmatpush1.bf16.msra.mxu0 %v2540
        %3865 = vmatprep.subr.bf16.mxu0 %v2545
        %3866 = vmatpush1.bf16.msra.mxu0 %v2544
        %3867 = vmatprep.subr.bf16.mxu0 %v2549
        %3868 = vmatpush1.bf16.msra.mxu0 %v2548
        %3869 = vmatprep.subr.bf16.mxu0 %v2553
        %3870 = vmatpush1.bf16.msra.mxu0 %v2552
        %3871 = vmatprep.subr.bf16.mxu0 %v2557
        %3872 = vmatpush1.bf16.msra.mxu0 %v2556
        %3873 = vmatprep.subr.bf16.mxu0 %v2561
        %3874 = vmatpush1.bf16.msra.mxu0 %v2560
        %3875 = vmatprep.subr.bf16.mxu0 %v2565
        %3876 = vmatpush1.bf16.msra.mxu0 %v2564
        %3877 = vmatprep.subr.bf16.mxu0 %v2569
        %3878 = vmatpush1.bf16.msra.mxu0 %v2568
        %3879 = vmatprep.subr.bf16.mxu0 %v2573
        %3880 = vmatpush1.bf16.msra.mxu0 %v2572
        %3881 = vmatprep.subr.bf16.mxu0 %v2577
        %3882 = vmatpush1.bf16.msra.mxu0 %v2576
        %3883 = vmatprep.subr.bf16.mxu0 %v2581
        %3884 = vmatpush1.bf16.msra.mxu0 %v2580
        %3885 = vmatprep.subr.bf16.mxu0 %v2585
        %3886 = vmatpush1.bf16.msra.mxu0 %v2584
        %3887 = vmatprep.subr.bf16.mxu0 %v2589
        %3888 = vmatpush1.bf16.msra.mxu0 %v2588
        %3889 = vmatprep.subr.bf16.mxu0 %v2593
        %3890 = vmatpush1.bf16.msra.mxu0 %v2592
        %3891 = vmatprep.mubr.bf16.mxu0 %v383
        %3892 = vmatmul.mubr.bf16.gmra.mrb[0].mxu0 %v382
        %v3893 = vpop.f32.mrb[0].mxu0
        %v3894 = vadd.f32 %v3853, %v3893
        %v3895 = vpop.f32.mrb[0].mxu0
        %v3896 = vadd.f32 %v3855, %v3895
        %v3897 = vpop.f32.mrb[0].mxu0
        %v3898 = vpop.f32.mrb[0].mxu0
        %3899 = vdwg.mxu0
        %3900 = vmatprep.subr.bf16.mxu0 %v2597
        %3901 = vmatpush1.bf16.msra.mxu0 %v2596
        %3902 = vmatprep.subr.bf16.mxu0 %v2601
        %3903 = vmatpush1.bf16.msra.mxu0 %v2600
        %3904 = vmatprep.subr.bf16.mxu0 %v2605
        %3905 = vmatpush1.bf16.msra.mxu0 %v2604
        %3906 = vmatprep.subr.bf16.mxu0 %v2609
        %3907 = vmatpush1.bf16.msra.mxu0 %v2608
        %3908 = vmatprep.subr.bf16.mxu0 %v2613
        %3909 = vmatpush1.bf16.msra.mxu0 %v2612
        %3910 = vmatprep.subr.bf16.mxu0 %v2617
        %3911 = vmatpush1.bf16.msra.mxu0 %v2616
        %3912 = vmatprep.subr.bf16.mxu0 %v2621
        %3913 = vmatpush1.bf16.msra.mxu0 %v2620
        %3914 = vmatprep.subr.bf16.mxu0 %v2625
        %3915 = vmatpush1.bf16.msra.mxu0 %v2624
        %3916 = vmatprep.subr.bf16.mxu0 %v2629
        %3917 = vmatpush1.bf16.msra.mxu0 %v2628
        %3918 = vmatprep.subr.bf16.mxu0 %v2633
        %3919 = vmatpush1.bf16.msra.mxu0 %v2632
        %3920 = vmatprep.subr.bf16.mxu0 %v2637
        %3921 = vmatpush1.bf16.msra.mxu0 %v2636
        %3922 = vmatprep.subr.bf16.mxu0 %v2641
        %3923 = vmatpush1.bf16.msra.mxu0 %v2640
        %3924 = vmatprep.subr.bf16.mxu0 %v2645
        %3925 = vmatpush1.bf16.msra.mxu0 %v2644
        %3926 = vmatprep.subr.bf16.mxu0 %v2649
        %3927 = vmatpush1.bf16.msra.mxu0 %v2648
        %3928 = vmatprep.subr.bf16.mxu0 %v2653
        %3929 = vmatpush1.bf16.msra.mxu0 %v2652
        %3930 = vmatprep.subr.bf16.mxu0 %v2657
        %3931 = vmatpush1.bf16.msra.mxu0 %v2656
        %3932 = vmatprep.mubr.bf16.mxu0 %v385
        %3933 = vmatmul.mubr.bf16.gmra.mrb[0].mxu0 %v384
        %v3934 = vpop.f32.mrb[0].mxu0
        %v3935 = vadd.f32 %v3894, %v3934
        %v3936 = vpop.f32.mrb[0].mxu0
        %v3937 = vadd.f32 %v3896, %v3936
        %v3938 = vpop.f32.mrb[0].mxu0
        %v3939 = vpop.f32.mrb[0].mxu0
        %3940 = vdwg.mxu0
        %3941 = vmatprep.subr.bf16.mxu0 %v2661
        %3942 = vmatpush1.bf16.msra.mxu0 %v2660
        %3943 = vmatprep.subr.bf16.mxu0 %v2665
        %3944 = vmatpush1.bf16.msra.mxu0 %v2664
        %3945 = vmatprep.subr.bf16.mxu0 %v2669
        %3946 = vmatpush1.bf16.msra.mxu0 %v2668
        %3947 = vmatprep.subr.bf16.mxu0 %v2673
        %3948 = vmatpush1.bf16.msra.mxu0 %v2672
        %3949 = vmatprep.subr.bf16.mxu0 %v2677
        %3950 = vmatpush1.bf16.msra.mxu0 %v2676
        %3951 = vmatprep.subr.bf16.mxu0 %v2681
        %3952 = vmatpush1.bf16.msra.mxu0 %v2680
        %3953 = vmatprep.subr.bf16.mxu0 %v2685
        %3954 = vmatpush1.bf16.msra.mxu0 %v2684
        %3955 = vmatprep.subr.bf16.mxu0 %v2689
        %3956 = vmatpush1.bf16.msra.mxu0 %v2688
        %3957 = vmatprep.subr.bf16.mxu0 %v2693
        %3958 = vmatpush1.bf16.msra.mxu0 %v2692
        %3959 = vmatprep.subr.bf16.mxu0 %v2697
        %3960 = vmatpush1.bf16.msra.mxu0 %v2696
        %3961 = vmatprep.subr.bf16.mxu0 %v2701
        %3962 = vmatpush1.bf16.msra.mxu0 %v2700
        %3963 = vmatprep.subr.bf16.mxu0 %v2705
        %3964 = vmatpush1.bf16.msra.mxu0 %v2704
        %3965 = vmatprep.subr.bf16.mxu0 %v2709
        %3966 = vmatpush1.bf16.msra.mxu0 %v2708
        %3967 = vmatprep.subr.bf16.mxu0 %v2713
        %3968 = vmatpush1.bf16.msra.mxu0 %v2712
        %3969 = vmatprep.subr.bf16.mxu0 %v2717
        %3970 = vmatpush1.bf16.msra.mxu0 %v2716
        %3971 = vmatprep.subr.bf16.mxu0 %v2721
        %3972 = vmatpush1.bf16.msra.mxu0 %v2720
        %3973 = vmatprep.mubr.bf16.mxu0 %v387
        %3974 = vmatmul.mubr.bf16.gmra.mrb[0].mxu0 %v386
        %v3975 = vpop.f32.mrb[0].mxu0
        %v3976 = vadd.f32 %v3935, %v3975
        %v3977 = vpop.f32.mrb[0].mxu0
        %v3978 = vadd.f32 %v3937, %v3977
        %v3979 = vpop.f32.mrb[0].mxu0
        %v3980 = vpop.f32.mrb[0].mxu0
        %3981 = vdwg.mxu0
        %3982 = vmatprep.subr.bf16.mxu0 %v2725
        %3983 = vmatpush1.bf16.msra.mxu0 %v2724
        %3984 = vmatprep.subr.bf16.mxu0 %v2729
        %3985 = vmatpush1.bf16.msra.mxu0 %v2728
        %3986 = vmatprep.subr.bf16.mxu0 %v2733
        %3987 = vmatpush1.bf16.msra.mxu0 %v2732
        %3988 = vmatprep.subr.bf16.mxu0 %v2737
        %3989 = vmatpush1.bf16.msra.mxu0 %v2736
        %3990 = vmatprep.subr.bf16.mxu0 %v2741
        %3991 = vmatpush1.bf16.msra.mxu0 %v2740
        %3992 = vmatprep.subr.bf16.mxu0 %v2745
        %3993 = vmatpush1.bf16.msra.mxu0 %v2744
        %3994 = vmatprep.subr.bf16.mxu0 %v2749
        %3995 = vmatpush1.bf16.msra.mxu0 %v2748
        %3996 = vmatprep.subr.bf16.mxu0 %v2753
        %3997 = vmatpush1.bf16.msra.mxu0 %v2752
        %3998 = vmatprep.subr.bf16.mxu0 %v2757
        %3999 = vmatpush1.bf16.msra.mxu0 %v2756
        %4000 = vmatprep.subr.bf16.mxu0 %v2761
        %4001 = vmatpush1.bf16.msra.mxu0 %v2760
        %4002 = vmatprep.subr.bf16.mxu0 %v2765
        %4003 = vmatpush1.bf16.msra.mxu0 %v2764
        %4004 = vmatprep.subr.bf16.mxu0 %v2769
        %4005 = vmatpush1.bf16.msra.mxu0 %v2768
        %4006 = vmatprep.subr.bf16.mxu0 %v2773
        %4007 = vmatpush1.bf16.msra.mxu0 %v2772
        %4008 = vmatprep.subr.bf16.mxu0 %v2777
        %4009 = vmatpush1.bf16.msra.mxu0 %v2776
        %4010 = vmatprep.subr.bf16.mxu0 %v2781
        %4011 = vmatpush1.bf16.msra.mxu0 %v2780
        %4012 = vmatprep.subr.bf16.mxu0 %v2785
        %4013 = vmatpush1.bf16.msra.mxu0 %v2784
        %4014 = vmatprep.mubr.bf16.mxu0 %v389
        %4015 = vmatmul.mubr.bf16.gmra.mrb[0].mxu0 %v388
        %v4016 = vpop.f32.mrb[0].mxu0
        %v4017 = vadd.f32 %v3976, %v4016
        %v4018 = vpop.f32.mrb[0].mxu0
        %v4019 = vadd.f32 %v3978, %v4018
        %v4020 = vpop.f32.mrb[0].mxu0
        %v4021 = vpop.f32.mrb[0].mxu0
        %4022 = vdwg.mxu0
        %4023 = vmatprep.subr.bf16.mxu0 %v2789
        %4024 = vmatpush1.bf16.msra.mxu0 %v2788
        %4025 = vmatprep.subr.bf16.mxu0 %v2793
        %4026 = vmatpush1.bf16.msra.mxu0 %v2792
        %4027 = vmatprep.subr.bf16.mxu0 %v2797
        %4028 = vmatpush1.bf16.msra.mxu0 %v2796
        %4029 = vmatprep.subr.bf16.mxu0 %v2801
        %4030 = vmatpush1.bf16.msra.mxu0 %v2800
        %4031 = vmatprep.subr.bf16.mxu0 %v2805
        %4032 = vmatpush1.bf16.msra.mxu0 %v2804
        %4033 = vmatprep.subr.bf16.mxu0 %v2809
        %4034 = vmatpush1.bf16.msra.mxu0 %v2808
        %4035 = vmatprep.subr.bf16.mxu0 %v2813
        %4036 = vmatpush1.bf16.msra.mxu0 %v2812
        %4037 = vmatprep.subr.bf16.mxu0 %v2817
        %4038 = vmatpush1.bf16.msra.mxu0 %v2816
        %4039 = vmatprep.subr.bf16.mxu0 %v2821
        %4040 = vmatpush1.bf16.msra.mxu0 %v2820
        %4041 = vmatprep.subr.bf16.mxu0 %v2825
        %4042 = vmatpush1.bf16.msra.mxu0 %v2824
        %4043 = vmatprep.subr.bf16.mxu0 %v2829
        %4044 = vmatpush1.bf16.msra.mxu0 %v2828
        %4045 = vmatprep.subr.bf16.mxu0 %v2833
        %4046 = vmatpush1.bf16.msra.mxu0 %v2832
        %4047 = vmatprep.subr.bf16.mxu0 %v2837
        %4048 = vmatpush1.bf16.msra.mxu0 %v2836
        %4049 = vmatprep.subr.bf16.mxu0 %v2841
        %4050 = vmatpush1.bf16.msra.mxu0 %v2840
        %4051 = vmatprep.subr.bf16.mxu0 %v2845
        %4052 = vmatpush1.bf16.msra.mxu0 %v2844
        %4053 = vmatprep.subr.bf16.mxu0 %v2849
        %4054 = vmatpush1.bf16.msra.mxu0 %v2848
        %4055 = vmatprep.mubr.bf16.mxu0 %v391
        %4056 = vmatmul.mubr.bf16.gmra.mrb[0].mxu0 %v390
        %v4057 = vpop.f32.mrb[0].mxu0
        %v4058 = vadd.f32 %v4017, %v4057
        %v4059 = vpop.f32.mrb[0].mxu0
        %v4060 = vadd.f32 %v4019, %v4059
        %v4061 = vpop.f32.mrb[0].mxu0
        %v4062 = vpop.f32.mrb[0].mxu0
        %4063 = vdwg.mxu0
        %4064 = vmatprep.subr.bf16.mxu0 %v2853
        %4065 = vmatpush1.bf16.msra.mxu0 %v2852
        %4066 = vmatprep.subr.bf16.mxu0 %v2857
        %4067 = vmatpush1.bf16.msra.mxu0 %v2856
        %4068 = vmatprep.subr.bf16.mxu0 %v2861
        %4069 = vmatpush1.bf16.msra.mxu0 %v2860
        %4070 = vmatprep.subr.bf16.mxu0 %v2865
        %4071 = vmatpush1.bf16.msra.mxu0 %v2864
        %4072 = vmatprep.subr.bf16.mxu0 %v2869
        %4073 = vmatpush1.bf16.msra.mxu0 %v2868
        %4074 = vmatprep.subr.bf16.mxu0 %v2873
        %4075 = vmatpush1.bf16.msra.mxu0 %v2872
        %4076 = vmatprep.subr.bf16.mxu0 %v2877
        %4077 = vmatpush1.bf16.msra.mxu0 %v2876
        %4078 = vmatprep.subr.bf16.mxu0 %v2881
        %4079 = vmatpush1.bf16.msra.mxu0 %v2880
        %4080 = vmatprep.subr.bf16.mxu0 %v2885
        %4081 = vmatpush1.bf16.msra.mxu0 %v2884
        %4082 = vmatprep.subr.bf16.mxu0 %v2889
        %4083 = vmatpush1.bf16.msra.mxu0 %v2888
        %4084 = vmatprep.subr.bf16.mxu0 %v2893
        %4085 = vmatpush1.bf16.msra.mxu0 %v2892
        %4086 = vmatprep.subr.bf16.mxu0 %v2897
        %4087 = vmatpush1.bf16.msra.mxu0 %v2896
        %4088 = vmatprep.subr.bf16.mxu0 %v2901
        %4089 = vmatpush1.bf16.msra.mxu0 %v2900
        %4090 = vmatprep.subr.bf16.mxu0 %v2905
        %4091 = vmatpush1.bf16.msra.mxu0 %v2904
        %4092 = vmatprep.subr.bf16.mxu0 %v2909
        %4093 = vmatpush1.bf16.msra.mxu0 %v2908
        %4094 = vmatprep.subr.bf16.mxu0 %v2913
        %4095 = vmatpush1.bf16.msra.mxu0 %v2912
        %4096 = vmatprep.mubr.bf16.mxu0 %v393
        %4097 = vmatmul.mubr.bf16.gmra.mrb[0].mxu0 %v392
        %v4098 = vpop.f32.mrb[0].mxu0
        %v4099 = vadd.f32 %v4058, %v4098
        %v4100 = vpop.f32.mrb[0].mxu0
        %v4101 = vadd.f32 %v4060, %v4100
        %v4102 = vpop.f32.mrb[0].mxu0
        %v4103 = vpop.f32.mrb[0].mxu0
        %4104 = vdwg.mxu0
        %4105 = vmatprep.subr.bf16.mxu0 %v2917
        %4106 = vmatpush1.bf16.msra.mxu0 %v2916
        %4107 = vmatprep.subr.bf16.mxu0 %v2921
        %4108 = vmatpush1.bf16.msra.mxu0 %v2920
        %4109 = vmatprep.subr.bf16.mxu0 %v2925
        %4110 = vmatpush1.bf16.msra.mxu0 %v2924
        %4111 = vmatprep.subr.bf16.mxu0 %v2929
        %4112 = vmatpush1.bf16.msra.mxu0 %v2928
        %4113 = vmatprep.subr.bf16.mxu0 %v2933
        %4114 = vmatpush1.bf16.msra.mxu0 %v2932
        %4115 = vmatprep.subr.bf16.mxu0 %v2937
        %4116 = vmatpush1.bf16.msra.mxu0 %v2936
        %4117 = vmatprep.subr.bf16.mxu0 %v2941
        %4118 = vmatpush1.bf16.msra.mxu0 %v2940
        %4119 = vmatprep.subr.bf16.mxu0 %v2945
        %4120 = vmatpush1.bf16.msra.mxu0 %v2944
        %4121 = vmatprep.subr.bf16.mxu0 %v2949
        %4122 = vmatpush1.bf16.msra.mxu0 %v2948
        %4123 = vmatprep.subr.bf16.mxu0 %v2953
        %4124 = vmatpush1.bf16.msra.mxu0 %v2952
        %4125 = vmatprep.subr.bf16.mxu0 %v2957
        %4126 = vmatpush1.bf16.msra.mxu0 %v2956
        %4127 = vmatprep.subr.bf16.mxu0 %v2961
        %4128 = vmatpush1.bf16.msra.mxu0 %v2960
        %4129 = vmatprep.subr.bf16.mxu0 %v2965
        %4130 = vmatpush1.bf16.msra.mxu0 %v2964
        %4131 = vmatprep.subr.bf16.mxu0 %v2969
        %4132 = vmatpush1.bf16.msra.mxu0 %v2968
        %4133 = vmatprep.subr.bf16.mxu0 %v2973
        %4134 = vmatpush1.bf16.msra.mxu0 %v2972
        %4135 = vmatprep.subr.bf16.mxu0 %v2977
        %4136 = vmatpush1.bf16.msra.mxu0 %v2976
        %4137 = vmatprep.mubr.bf16.mxu0 %v395
        %4138 = vmatmul.mubr.bf16.gmra.mrb[0].mxu0 %v394
        %v4139 = vpop.f32.mrb[0].mxu0
        %v4140 = vadd.f32 %v4099, %v4139
        %v4141 = vpop.f32.mrb[0].mxu0
        %v4142 = vadd.f32 %v4101, %v4141
        %v4143 = vpop.f32.mrb[0].mxu0
        %v4144 = vpop.f32.mrb[0].mxu0
        %4145 = vdwg.mxu0
        %v4146 = vmax.f32 %v3812, 0.0
        %v4147 = vmax.f32 %v3814, 0.0
        %v4148 = vmax.f32 %v4140, 0.0
        %v4149 = vmax.f32 %v4142, 0.0
        %v4150 = vpack.c.bf16 %v4146, %v4146
        %v4151 = vpack.c.bf16 %v4147, %v4147
        %v4152 = vpack.c.bf16 %v4148, %v4148
        %v4153 = vpack.c.bf16 %v4149, %v4149
        %v4154 = vld [vmem:[#allocation9] sm:$0xf]
        %v4155 = vld [vmem:[#allocation9 + $0x4] sm:$0xf]
        %v4156 = vld [vmem:[#allocation9 + $0x8] sm:$0xf]
        %v4157 = vld [vmem:[#allocation9 + $0xc] sm:$0xf]
        %v4158 = vld [vmem:[#allocation9 + $0x10] sm:$0xf]
        %v4159 = vld [vmem:[#allocation9 + $0x14] sm:$0xf]
        %v4160 = vld [vmem:[#allocation9 + $0x18] sm:$0xf]
        %v4161 = vld [vmem:[#allocation9 + $0x1c] sm:$0xf]
        %v4162 = vld [vmem:[#allocation9 + $0x20] sm:$0xf]
        %v4163 = vld [vmem:[#allocation9 + $0x24] sm:$0xf]
        %v4164 = vld [vmem:[#allocation9 + $0x28] sm:$0xf]
        %v4165 = vld [vmem:[#allocation9 + $0x2c] sm:$0xf]
        %v4166 = vld [vmem:[#allocation9 + $0x30] sm:$0xf]
        %v4167 = vld [vmem:[#allocation9 + $0x34] sm:$0xf]
        %v4168 = vld [vmem:[#allocation9 + $0x38] sm:$0xf]
        %v4169 = vld [vmem:[#allocation9 + $0x3c] sm:$0xf]
        %v4170 = vld [vmem:[#allocation9 + $0x40] sm:$0xf]
        %v4171 = vld [vmem:[#allocation9 + $0x44] sm:$0xf]
        %v4172 = vld [vmem:[#allocation9 + $0x48] sm:$0xf]
        %v4173 = vld [vmem:[#allocation9 + $0x4c] sm:$0xf]
        %v4174 = vld [vmem:[#allocation9 + $0x50] sm:$0xf]
        %v4175 = vld [vmem:[#allocation9 + $0x54] sm:$0xf]
        %v4176 = vld [vmem:[#allocation9 + $0x58] sm:$0xf]
        %v4177 = vld [vmem:[#allocation9 + $0x5c] sm:$0xf]
        %v4178 = vld [vmem:[#allocation9 + $0x60] sm:$0xf]
        %v4179 = vld [vmem:[#allocation9 + $0x64] sm:$0xf]
        %v4180 = vld [vmem:[#allocation9 + $0x68] sm:$0xf]
        %v4181 = vld [vmem:[#allocation9 + $0x6c] sm:$0xf]
        %v4182 = vld [vmem:[#allocation9 + $0x70] sm:$0xf]
        %v4183 = vld [vmem:[#allocation9 + $0x74] sm:$0xf]
        %v4184 = vld [vmem:[#allocation9 + $0x78] sm:$0xf]
        %v4185 = vld [vmem:[#allocation9 + $0x7c] sm:$0xf]
        %v4186 = vld [vmem:[#allocation9 + $0x80] sm:$0xf]
        %v4187 = vld [vmem:[#allocation9 + $0x84] sm:$0xf]
        %v4188 = vld [vmem:[#allocation9 + $0x88] sm:$0xf]
        %v4189 = vld [vmem:[#allocation9 + $0x8c] sm:$0xf]
        %v4190 = vld [vmem:[#allocation9 + $0x90] sm:$0xf]
        %v4191 = vld [vmem:[#allocation9 + $0x94] sm:$0xf]
        %v4192 = vld [vmem:[#allocation9 + $0x98] sm:$0xf]
        %v4193 = vld [vmem:[#allocation9 + $0x9c] sm:$0xf]
        %v4194 = vld [vmem:[#allocation9 + $0xa0] sm:$0xf]
        %v4195 = vld [vmem:[#allocation9 + $0xa4] sm:$0xf]
        %v4196 = vld [vmem:[#allocation9 + $0xa8] sm:$0xf]
        %v4197 = vld [vmem:[#allocation9 + $0xac] sm:$0xf]
        %v4198 = vld [vmem:[#allocation9 + $0xb0] sm:$0xf]
        %v4199 = vld [vmem:[#allocation9 + $0xb4] sm:$0xf]
        %v4200 = vld [vmem:[#allocation9 + $0xb8] sm:$0xf]
        %v4201 = vld [vmem:[#allocation9 + $0xbc] sm:$0xf]
        %v4202 = vld [vmem:[#allocation9 + $0xc0] sm:$0xf]
        %v4203 = vld [vmem:[#allocation9 + $0xc4] sm:$0xf]
        %v4204 = vld [vmem:[#allocation9 + $0xc8] sm:$0xf]
        %v4205 = vld [vmem:[#allocation9 + $0xcc] sm:$0xf]
        %v4206 = vld [vmem:[#allocation9 + $0xd0] sm:$0xf]
        %v4207 = vld [vmem:[#allocation9 + $0xd4] sm:$0xf]
        %v4208 = vld [vmem:[#allocation9 + $0xd8] sm:$0xf]
        %v4209 = vld [vmem:[#allocation9 + $0xdc] sm:$0xf]
        %v4210 = vld [vmem:[#allocation9 + $0xe0] sm:$0xf]
        %v4211 = vld [vmem:[#allocation9 + $0xe4] sm:$0xf]
        %v4212 = vld [vmem:[#allocation9 + $0xe8] sm:$0xf]
        %v4213 = vld [vmem:[#allocation9 + $0xec] sm:$0xf]
        %v4214 = vld [vmem:[#allocation9 + $0xf0] sm:$0xf]
        %v4215 = vld [vmem:[#allocation9 + $0xf4] sm:$0xf]
        %v4216 = vld [vmem:[#allocation9 + $0xf8] sm:$0xf]
        %v4217 = vld [vmem:[#allocation9 + $0xfc] sm:$0xf]
        %v4218 = vld [vmem:[#allocation11] sm:$0x1]
        %v4220 = vlaneseq
        %v4221 = vshrl.u32 %v4220, 7
        %v4222 = vsub.s32 0, %v4221
        %v4223 = vrot.slane %v4218, %v4222
        %v4289 = vunpack.c.l.b16 %v4154
        %v4290 = vunpack.c.l.b16 %v4155
        %v4291 = vunpack.c.l.b16 %v4156
        %v4292 = vunpack.c.l.b16 %v4157
        %v4293 = vunpack.c.l.b16 %v4158
        %v4294 = vunpack.c.l.b16 %v4159
        %v4295 = vunpack.c.l.b16 %v4160
        %v4296 = vunpack.c.l.b16 %v4161
        %v4297 = vunpack.c.l.b16 %v4162
        %v4298 = vunpack.c.l.b16 %v4163
        %v4299 = vunpack.c.l.b16 %v4164
        %v4300 = vunpack.c.l.b16 %v4165
        %v4301 = vunpack.c.l.b16 %v4166
        %v4302 = vunpack.c.l.b16 %v4167
        %v4303 = vunpack.c.l.b16 %v4168
        %v4304 = vunpack.c.l.b16 %v4169
        %v4305 = vunpack.c.l.b16 %v4170
        %v4306 = vunpack.c.l.b16 %v4171
        %v4307 = vunpack.c.l.b16 %v4172
        %v4308 = vunpack.c.l.b16 %v4173
        %v4309 = vunpack.c.l.b16 %v4174
        %v4310 = vunpack.c.l.b16 %v4175
        %v4311 = vunpack.c.l.b16 %v4176
        %v4312 = vunpack.c.l.b16 %v4177
        %v4313 = vunpack.c.l.b16 %v4178
        %v4314 = vunpack.c.l.b16 %v4179
        %v4315 = vunpack.c.l.b16 %v4180
        %v4316 = vunpack.c.l.b16 %v4181
        %v4317 = vunpack.c.l.b16 %v4182
        %v4318 = vunpack.c.l.b16 %v4183
        %v4319 = vunpack.c.l.b16 %v4184
        %v4320 = vunpack.c.l.b16 %v4185
        %v4321 = vunpack.c.l.b16 %v4186
        %v4322 = vunpack.c.l.b16 %v4187
        %v4323 = vunpack.c.l.b16 %v4188
        %v4324 = vunpack.c.l.b16 %v4189
        %v4325 = vunpack.c.l.b16 %v4190
        %v4326 = vunpack.c.l.b16 %v4191
        %v4327 = vunpack.c.l.b16 %v4192
        %v4328 = vunpack.c.l.b16 %v4193
        %v4329 = vunpack.c.l.b16 %v4194
        %v4330 = vunpack.c.l.b16 %v4195
        %v4331 = vunpack.c.l.b16 %v4196
        %v4332 = vunpack.c.l.b16 %v4197
        %v4333 = vunpack.c.l.b16 %v4198
        %v4334 = vunpack.c.l.b16 %v4199
        %v4335 = vunpack.c.l.b16 %v4200
        %v4336 = vunpack.c.l.b16 %v4201
        %v4337 = vunpack.c.l.b16 %v4202
        %v4338 = vunpack.c.l.b16 %v4203
        %v4339 = vunpack.c.l.b16 %v4204
        %v4340 = vunpack.c.l.b16 %v4205
        %v4341 = vunpack.c.l.b16 %v4206
        %v4342 = vunpack.c.l.b16 %v4207
        %v4343 = vunpack.c.l.b16 %v4208
        %v4344 = vunpack.c.l.b16 %v4209
        %v4345 = vunpack.c.l.b16 %v4210
        %v4346 = vunpack.c.l.b16 %v4211
        %v4347 = vunpack.c.l.b16 %v4212
        %v4348 = vunpack.c.l.b16 %v4213
        %v4349 = vunpack.c.l.b16 %v4214
        %v4350 = vunpack.c.l.b16 %v4215
        %v4351 = vunpack.c.l.b16 %v4216
        %v4352 = vunpack.c.l.b16 %v4217
        %v4353 = vpack.c.b16 %v4290, %v4289
        %v4354 = vpack.c.b16 %v4292, %v4291
        %v4355 = vpack.c.b16 %v4294, %v4293
        %v4356 = vpack.c.b16 %v4296, %v4295
        %v4357 = vpack.c.b16 %v4298, %v4297
        %v4358 = vpack.c.b16 %v4300, %v4299
        %v4359 = vpack.c.b16 %v4302, %v4301
        %v4360 = vpack.c.b16 %v4304, %v4303
        %v4361 = vpack.c.b16 %v4306, %v4305
        %v4362 = vpack.c.b16 %v4308, %v4307
        %v4363 = vpack.c.b16 %v4310, %v4309
        %v4364 = vpack.c.b16 %v4312, %v4311
        %v4365 = vpack.c.b16 %v4314, %v4313
        %v4366 = vpack.c.b16 %v4316, %v4315
        %v4367 = vpack.c.b16 %v4318, %v4317
        %v4368 = vpack.c.b16 %v4320, %v4319
        %v4369 = vpack.c.b16 %v4322, %v4321
        %v4370 = vpack.c.b16 %v4324, %v4323
        %v4371 = vpack.c.b16 %v4326, %v4325
        %v4372 = vpack.c.b16 %v4328, %v4327
        %v4373 = vpack.c.b16 %v4330, %v4329
        %v4374 = vpack.c.b16 %v4332, %v4331
        %v4375 = vpack.c.b16 %v4334, %v4333
        %v4376 = vpack.c.b16 %v4336, %v4335
        %v4377 = vpack.c.b16 %v4338, %v4337
        %v4378 = vpack.c.b16 %v4340, %v4339
        %v4379 = vpack.c.b16 %v4342, %v4341
        %v4380 = vpack.c.b16 %v4344, %v4343
        %v4381 = vpack.c.b16 %v4346, %v4345
        %v4382 = vpack.c.b16 %v4348, %v4347
        %v4383 = vpack.c.b16 %v4350, %v4349
        %v4384 = vpack.c.b16 %v4352, %v4351
        %4417 = vmatprep.subr.bf16.mxu0 0
        %4418 = vmatpush1.bf16.msra.mxu0 %v4353
        %4419 = vmatprep.subr.bf16.mxu0 0
        %4420 = vmatpush1.bf16.msra.mxu0 %v4354
        %4421 = vmatprep.subr.bf16.mxu0 0
        %4422 = vmatpush1.bf16.msra.mxu0 %v4355
        %4423 = vmatprep.subr.bf16.mxu0 0
        %4424 = vmatpush1.bf16.msra.mxu0 %v4356
        %4425 = vmatprep.subr.bf16.mxu0 0
        %4426 = vmatpush1.bf16.msra.mxu0 %v4357
        %4427 = vmatprep.subr.bf16.mxu0 0
        %4428 = vmatpush1.bf16.msra.mxu0 %v4358
        %4429 = vmatprep.subr.bf16.mxu0 0
        %4430 = vmatpush1.bf16.msra.mxu0 %v4359
        %4431 = vmatprep.subr.bf16.mxu0 0
        %4432 = vmatpush1.bf16.msra.mxu0 %v4360
        %4433 = vmatprep.subr.bf16.mxu0 0
        %4434 = vmatpush1.bf16.msra.mxu0 %v4361
        %4435 = vmatprep.subr.bf16.mxu0 0
        %4436 = vmatpush1.bf16.msra.mxu0 %v4362
        %4437 = vmatprep.subr.bf16.mxu0 0
        %4438 = vmatpush1.bf16.msra.mxu0 %v4363
        %4439 = vmatprep.subr.bf16.mxu0 0
        %4440 = vmatpush1.bf16.msra.mxu0 %v4364
        %4441 = vmatprep.subr.bf16.mxu0 0
        %4442 = vmatpush1.bf16.msra.mxu0 %v4365
        %4443 = vmatprep.subr.bf16.mxu0 0
        %4444 = vmatpush1.bf16.msra.mxu0 %v4366
        %4445 = vmatprep.subr.bf16.mxu0 0
        %4446 = vmatpush1.bf16.msra.mxu0 %v4367
        %4447 = vmatprep.subr.bf16.mxu0 0
        %4448 = vmatpush1.bf16.msra.mxu0 %v4368
        %4449 = vmatprep.mubr.bf16.mxu0 %v4151
        %4450 = vmatmul.mubr.bf16.gmra.mrb[0].mxu0 %v4150
        %v4451 = vpop.f32.mrb[0].mxu0
        %v4452 = vadd.f32 %v4223, %v4451
        %v4453 = vpop.f32.mrb[0].mxu0
        %v4454 = vpop.f32.mrb[0].mxu0
        %v4455 = vpop.f32.mrb[0].mxu0
        %4456 = vdwg.mxu0
        %4457 = vmatprep.subr.bf16.mxu0 0
        %4458 = vmatpush1.bf16.msra.mxu0 %v4369
        %4459 = vmatprep.subr.bf16.mxu0 0
        %4460 = vmatpush1.bf16.msra.mxu0 %v4370
        %4461 = vmatprep.subr.bf16.mxu0 0
        %4462 = vmatpush1.bf16.msra.mxu0 %v4371
        %4463 = vmatprep.subr.bf16.mxu0 0
        %4464 = vmatpush1.bf16.msra.mxu0 %v4372
        %4465 = vmatprep.subr.bf16.mxu0 0
        %4466 = vmatpush1.bf16.msra.mxu0 %v4373
        %4467 = vmatprep.subr.bf16.mxu0 0
        %4468 = vmatpush1.bf16.msra.mxu0 %v4374
        %4469 = vmatprep.subr.bf16.mxu0 0
        %4470 = vmatpush1.bf16.msra.mxu0 %v4375
        %4471 = vmatprep.subr.bf16.mxu0 0
        %4472 = vmatpush1.bf16.msra.mxu0 %v4376
        %4473 = vmatprep.subr.bf16.mxu0 0
        %4474 = vmatpush1.bf16.msra.mxu0 %v4377
        %4475 = vmatprep.subr.bf16.mxu0 0
        %4476 = vmatpush1.bf16.msra.mxu0 %v4378
        %4477 = vmatprep.subr.bf16.mxu0 0
        %4478 = vmatpush1.bf16.msra.mxu0 %v4379
        %4479 = vmatprep.subr.bf16.mxu0 0
        %4480 = vmatpush1.bf16.msra.mxu0 %v4380
        %4481 = vmatprep.subr.bf16.mxu0 0
        %4482 = vmatpush1.bf16.msra.mxu0 %v4381
        %4483 = vmatprep.subr.bf16.mxu0 0
        %4484 = vmatpush1.bf16.msra.mxu0 %v4382
        %4485 = vmatprep.subr.bf16.mxu0 0
        %4486 = vmatpush1.bf16.msra.mxu0 %v4383
        %4487 = vmatprep.subr.bf16.mxu0 0
        %4488 = vmatpush1.bf16.msra.mxu0 %v4384
        %4489 = vmatprep.mubr.bf16.mxu0 %v4153
        %4490 = vmatmul.mubr.bf16.gmra.mrb[0].mxu0 %v4152
        %v4491 = vpop.f32.mrb[0].mxu0
        %v4492 = vadd.f32 %v4452, %v4491
        %v4493 = vpop.f32.mrb[0].mxu0
        %v4494 = vpop.f32.mrb[0].mxu0
        %v4495 = vpop.f32.mrb[0].mxu0
        %4496 = vdwg.mxu0
        %v4497 = vmax.f32 %v4492, 0.0
        %v4498 = vld [vmem:[#allocation12] sm:$0xff]
        %4499 = vmatprep.subr.mxu0 0.0
        %4500 = vmatpush1.xpose.msra.mxu0 %v4497
        %4501 = vmatprep.subr.mxu0 0.0
        %4502 = vmatpush1.xpose.msra.mxu0 0.0
        %4503 = vmatprep.subr.mxu0 0.0
        %4504 = vmatpush1.xpose.msra.mxu0 0.0
        %4505 = vmatprep.subr.mxu0 0.0
        %4506 = vmatpush1.xpose.msra.mxu0 0.0
        %4507 = vmatprep.subr.mxu0 0.0
        %4508 = vmatpush1.xpose.msra.mxu0 0.0
        %4509 = vmatprep.subr.mxu0 0.0
        %4510 = vmatpush1.xpose.msra.mxu0 0.0
        %4511 = vmatprep.subr.mxu0 0.0
        %4512 = vmatpush1.xpose.msra.mxu0 0.0
        %4513 = vmatprep.subr.mxu0 0.0
        %4514 = vmatpush1.xpose.msra.mxu0 0.0
        %4515 = vmatprep.subr.mxu0 0.0
        %4516 = vmatpush1.xpose.msra.mxu0 0.0
        %4517 = vmatprep.subr.mxu0 0.0
        %4518 = vmatpush1.xpose.msra.mxu0 0.0
        %4519 = vmatprep.subr.mxu0 0.0
        %4520 = vmatpush1.xpose.msra.mxu0 0.0
        %4521 = vmatprep.subr.mxu0 0.0
        %4522 = vmatpush1.xpose.msra.mxu0 0.0
        %4523 = vmatprep.subr.mxu0 0.0
        %4524 = vmatpush1.xpose.msra.mxu0 0.0
        %4525 = vmatprep.subr.mxu0 0.0
        %4526 = vmatpush1.xpose.msra.mxu0 0.0
        %4527 = vmatprep.subr.mxu0 0.0
        %4528 = vmatpush1.xpose.msra.mxu0 0.0
        %4529 = vmatprep.subr.mxu0 0.0
        %4530 = vmatpush1.xpose.msra.mxu0 0.0
        %4531 = vmatprep.subr.mxu0 0.0
        %4532 = vmatpush1.xpose.msra.mxu0 0.0
        %4533 = vmatprep.subr.mxu0 0.0
        %4534 = vmatpush1.xpose.msra.mxu0 0.0
        %4535 = vmatprep.subr.mxu0 0.0
        %4536 = vmatpush1.xpose.msra.mxu0 0.0
        %4537 = vmatprep.subr.mxu0 0.0
        %4538 = vmatpush1.xpose.msra.mxu0 0.0
        %4539 = vmatprep.subr.mxu0 0.0
        %4540 = vmatpush1.xpose.msra.mxu0 0.0
        %4541 = vmatprep.subr.mxu0 0.0
        %4542 = vmatpush1.xpose.msra.mxu0 0.0
        %4543 = vmatprep.subr.mxu0 0.0
        %4544 = vmatpush1.xpose.msra.mxu0 0.0
        %4545 = vmatprep.subr.mxu0 0.0
        %4546 = vmatpush1.xpose.msra.mxu0 0.0
        %4547 = vmatprep.subr.mxu0 0.0
        %4548 = vmatpush1.xpose.msra.mxu0 0.0
        %4549 = vmatprep.subr.mxu0 0.0
        %4550 = vmatpush1.xpose.msra.mxu0 0.0
        %4551 = vmatprep.subr.mxu0 0.0
        %4552 = vmatpush1.xpose.msra.mxu0 0.0
        %4553 = vmatprep.subr.mxu0 0.0
        %4554 = vmatpush1.xpose.msra.mxu0 0.0
        %4555 = vmatprep.subr.mxu0 0.0
        %4556 = vmatpush1.xpose.msra.mxu0 0.0
        %4557 = vmatprep.subr.mxu0 0.0
        %4558 = vmatpush1.xpose.msra.mxu0 0.0
        %4559 = vmatprep.subr.mxu0 0.0
        %4560 = vmatpush1.xpose.msra.mxu0 0.0
        %4561 = vmatprep.subr.mxu0 0.0
        %4562 = vmatpush1.xpose.msra.mxu0 0.0
        %4563 = vmatprep.mubr.f32.mxu0 0.0
        %4564 = vmatmul.mubr.f32.gmra.mrb[0].mxu0 %v4498
        %v4565 = vpop.f32.mrb[0].mxu0
        %v4566 = vadd.f32 0.0, %v4565
        %v4567 = vpop.f32.mrb[0].mxu0
        %4568 = vdwg.mxu0
        %v4569 = vld [vmem:[#allocation2] sm:$0x1]
        %4571 = vset.pattern.permute.xlu0 0
        %4572 = vperm.xlu0 %4571, %v4569
        %v4573 = vpop.permute.xlu0 %4572
        %v4575 = vlaneseq
        %v4576 = vshrl.u32 %v4575, 7
        %v4577 = vsub.s32 0, %v4576
        %v4578 = vrot.slane %v4573, %v4577
        %v4579 = vadd.f32 %v4566, %v4578
        %v4580 = vxor.u32 %v4579, 2147483648
        %v4581 = vmul.f32 %v4580, 1.442695
        %v4582 = vpow.pop %v4581
        %v4583 = vadd.f32 %v4582, 1.0
        %v4584 = vrcp.pop %v4583
        %v4585 = vmul.f32 1.0, %v4584
        %vm4586 = vcmask 57344
        %4587 = vst.msk [vmem:[%s362] sm:$0x1] %vm4586, %v4585
        %s4588 = sand.u32 %s189, 1
        %s4589 = scalar_lea.sflag [#allocation5], %s4588
        %s4590 = sand.u32 %s189, 1
        %s4591 = scalar_lea.vmem [#allocation14], %s4590
        // Predicated region
        $region73: #{tpu_custom_call.1} parent=47 // pred_check
          %p4592 = pneg %p199
        $region74: #{tpu_custom_call.1} parent=47 // pred_check_branch
          %4594 = sbr.rel (%p4592) target = $region76
        $region75: #{tpu_custom_call.1} parent=47 // pred_region
          %s4596 = ssub.s32 16, 16
          %4597 = vsyncadd %s4589, %s4596
          %s4598 = smul.addr %s29, 16
          %s4599 = scalar_lea.hbm %s7, %s4598
          %s4601 = sshll.u32 %s4591, 4
          %s4602 = int_to_ptr.vmem [resolvable:$true] %s4601
          %4604 = dma.vmem_to_hbm [thread:$0]  %s4602, 16, %s4599, %s4589
        $region76: #{tpu_custom_call.1} parent=47 // pred_fallthru
          _
      $region48: #{tpu_custom_call.1} parent=5 // pred_fallthru
        _
      %p4605 = scmp.le.s32.totalorder 2, %s24
      // Predicated region
      $region77: #{tpu_custom_call.1} parent=5 // pred_check
        %p4606 = pneg %p4605
      $region78: #{tpu_custom_call.1} parent=5 // pred_check_branch
        %4608 = sbr.rel (%p4606) target = $region80
      $region79: #{tpu_custom_call.1} parent=5 // pred_region
        %s4609 = ssub.s32 %s24, 2
        // Predicated region
        $region81: #{tpu_custom_call.1} parent=79 // pred_check
          %p4610 = pneg %p205
        $region82: #{tpu_custom_call.1} parent=79 // pred_check_branch
          %4612 = sbr.rel (%p4610) target = $region84
        $region83: #{tpu_custom_call.1} parent=79 // pred_region
          %s4613 = sand.u32 %s190, 1
          %s4614 = scalar_lea.sflag [#allocation5], %s4613
          %s4615 = sand.u32 %s190, 1
          %s4616 = scalar_lea.vmem [#allocation14], %s4615
          %4617 = dma.done %s4614, 16
        $region84: #{tpu_custom_call.1} parent=79 // pred_fallthru
          _
      $region80: #{tpu_custom_call.1} parent=5 // pred_fallthru
        _
    $region6: #{tpu_custom_call.1} parent=1 // loop_footer
      %s28 = sadd.s32 1, %s24
    $region7: #{tpu_custom_call.1} parent=1 // loop_footer_branch
      %23 = sbr.rel target = $region3
    $region8: #{tpu_custom_call.1} parent=1 // loop_exit
      _
    %4618 = vsyncpa [#allocation4], 1
    %s4619 = scalar_lea.sflag [#allocation4], 1
    %4620 = vsyncpa %s4619, 1
    %4621 = vsyncpa [#allocation7], 1
    %4622 = vsyncpa [#allocation10], 1
    %4623 = vsyncpa [#allocation13], 1
    %4624 = vsyncpa [#allocation5], 1
    %s4625 = scalar_lea.sflag [#allocation5], 1
    %4626 = vsyncpa %s4625, 1

</llo_original>
